<compile_context>
chip_gen: v5e
topology: v5e:2x2
jax: 0.10.0
libtpu: 0.0.40
codegen_flags: <defaults>
</compile_context>

<pallas_src>
import functools

import jax
import jax.numpy as jnp
from jax import lax
from jax.experimental import pallas as pl
from jax.experimental.pallas import tpu as pltpu


# ----------------------------- Pallas kernel -------------------------------

def _fused_three_scale_kernel(xl_ref, xm_ref, xs_ref,
                              ds_w_ref, ds_b_ref,
                              cpl_ref, cpm_ref, cps_ref, cp_b_ref,
                              ip_w_ref, ip_b_ref,
                              o_ref, *, hid, chunk):
    """relu(l4@ds_w+b) -> relu([l,m,s_up]@cp_w+b) -> @ip_w+b, all in VMEM."""
    cdt = xl_ref.dtype                        # bf16 compute dtype for the MXU

    # down_sample: 1x1 conv (+folded BN) + ReLU on the space-to-depth l stream
    l = jnp.dot(xl_ref[...], ds_w_ref[...], preferred_element_type=jnp.float32)
    l = jnp.maximum(l + ds_b_ref[...], 0.0).astype(cdt)

    xm = xm_ref[...]
    xs = xs_ref[...]

    # channel_proj (+ReLU) fused with input_proj.  The hidden dim is processed
    # in `chunk`-wide slices (256 on the real 1024-wide module); weight/bias
    # slices are loaded per chunk directly from the VMEM refs so the live
    # (tile, hid) f32 intermediate is never materialised in full.
    acc = jnp.zeros(o_ref.shape, jnp.float32)
    for c0 in range(0, hid, chunk):
        c1 = c0 + chunk
        h = jnp.dot(l, cpl_ref[:, c0:c1], preferred_element_type=jnp.float32)
        h = h + jnp.dot(xm, cpm_ref[:, c0:c1], preferred_element_type=jnp.float32)
        h = h + jnp.dot(xs, cps_ref[:, c0:c1], preferred_element_type=jnp.float32)
        h = jnp.maximum(h + cp_b_ref[:, c0:c1], 0.0).astype(cdt)
        acc = acc + jnp.dot(h, ip_w_ref[c0:c1, :],
                            preferred_element_type=jnp.float32)

    o_ref[...] = (acc + ip_b_ref[...]).astype(o_ref.dtype)


# ----------------------------- pallas_call wrapper --------------------------

def _choose_tile(n_pix, max_tile=512):
    # Prefer a tile that divides the pixel count exactly (no row padding, no
    # output slice) and gives >= 2 grid steps (v7x has two TensorCores).
    for t in (max_tile, 256, 128):
        if n_pix % t == 0 and n_pix // t >= 2:
            return t, 0
    if n_pix % 8 == 0 and n_pix <= max_tile:
        return n_pix, 0                       # single full-size tile
    t = min(max_tile, 256)                    # fallback: pad rows
    return t, (-n_pix) % t


def fused_three_scale_pix(xl, xm, xs, params, *, max_tile=512):
    """xl=(P,4Cl) xm=(P,Cm) xs=(P,Cs) pixel matrices -> (P, out_dim)."""
    compute_dt = jnp.bfloat16
    n_pix = xl.shape[0]
    tile, pad = _choose_tile(n_pix, max_tile)

    xl = xl.astype(compute_dt)
    xm = xm.astype(compute_dt)
    xs = xs.astype(compute_dt)
    if pad:
        xl = jnp.pad(xl, ((0, pad), (0, 0)))
        xm = jnp.pad(xm, ((0, pad), (0, 0)))
        xs = jnp.pad(xs, ((0, pad), (0, 0)))
    n_rows = n_pix + pad

    cin_l, cin_m, cin_s = xl.shape[1], xm.shape[1], xs.shape[1]
    c_l = params["ds_w"].shape[1]
    hid = params["cp_w"].shape[1]
    c_out = params["ip_w"].shape[1]
    c_out_pad = ((c_out + 127) // 128) * 128            # lane-dense output

    ds_w = params["ds_w"].astype(compute_dt)
    ds_b = params["ds_b"].astype(jnp.float32).reshape(1, c_l)
    cp_w = params["cp_w"].astype(compute_dt)
    cpl = cp_w[:c_l]                                    # concat order [l, m, s]
    cpm = cp_w[c_l:c_l + cin_m]
    cps = cp_w[c_l + cin_m:]
    cp_b = params["cp_b"].astype(jnp.float32).reshape(1, hid)
    ip_w = jnp.pad(params["ip_w"].astype(compute_dt),
                   ((0, 0), (0, c_out_pad - c_out)))
    ip_b = jnp.pad(params["ip_b"].astype(jnp.float32),
                   (0, c_out_pad - c_out)).reshape(1, c_out_pad)

    chunk = 256 if hid % 256 == 0 else hid
    kernel = functools.partial(_fused_three_scale_kernel, hid=hid, chunk=chunk)

    flops = 2 * n_rows * (cin_l * c_l + (c_l + cin_m + cin_s) * hid
                          + hid * c_out_pad)
    bytes_accessed = (2 * n_rows * (cin_l + cin_m + cin_s)        # bf16 inputs
                      + 2 * (cin_l * c_l + (c_l + cin_m + cin_s) * hid
                             + hid * c_out_pad)                   # bf16 weights
                      + 4 * n_rows * c_out_pad)                   # f32 output

    out = pl.pallas_call(
        kernel,
        out_shape=jax.ShapeDtypeStruct((n_rows, c_out_pad), jnp.float32),
        grid_spec=pltpu.PrefetchScalarGridSpec(
            num_scalar_prefetch=0,
            grid=(n_rows // tile,),
            in_specs=[
                pl.BlockSpec((tile, cin_l), lambda i: (i, 0)),
                pl.BlockSpec((tile, cin_m), lambda i: (i, 0)),
                pl.BlockSpec((tile, cin_s), lambda i: (i, 0)),
                pl.BlockSpec((cin_l, c_l), lambda i: (0, 0)),
                pl.BlockSpec((1, c_l), lambda i: (0, 0)),
                pl.BlockSpec((c_l, hid), lambda i: (0, 0)),
                pl.BlockSpec((cin_m, hid), lambda i: (0, 0)),
                pl.BlockSpec((cin_s, hid), lambda i: (0, 0)),
                pl.BlockSpec((1, hid), lambda i: (0, 0)),
                pl.BlockSpec((hid, c_out_pad), lambda i: (0, 0)),
                pl.BlockSpec((1, c_out_pad), lambda i: (0, 0)),
            ],
            out_specs=pl.BlockSpec((tile, c_out_pad), lambda i: (i, 0)),
        ),
        compiler_params=pltpu.CompilerParams(
            dimension_semantics=("parallel",),
            vmem_limit_bytes=48 * 1024 * 1024,   # headroom for v7x's 64 MiB VMEM
        ),
        cost_estimate=pl.CostEstimate(flops=int(flops), transcendentals=0,
                                      bytes_accessed=int(bytes_accessed)),
    )(xl, xm, xs, ds_w, ds_b, cpl, cpm, cps, cp_b, ip_w, ip_b)

    return out[:n_pix, :c_out]


# ----------------------------- plain-JAX glue --------------------------------
# TODO(synk): layout transposes / space-to-depth / x2 upsample are pure data
# movement; kept in plain JAX (XLA) rather than faked as compute kernels.

def nchw_to_pix(x):
    b, c, h, w = x.shape
    return x.transpose(0, 2, 3, 1).reshape(b * h * w, c)


def pix_to_nchw(x, b, h, w):
    c = x.shape[-1]
    return x.reshape(b, h, w, c).transpose(0, 3, 1, 2)


def space_to_depth(l):
    # Rearrange('b c (h neih) (w neiw) -> b (neiw neih c) h w', neih=2, neiw=2)
    b, c, h2, w2 = l.shape
    h, w = h2 // 2, w2 // 2
    x = l.reshape(b, c, h, 2, w, 2)          # b c h neih w neiw
    x = x.transpose(0, 5, 3, 1, 2, 4)         # b neiw neih c h w
    return x.reshape(b, 4 * c, h, w)


def _upsample2x_axis(x, axis):
    # PyTorch bilinear, align_corners=False, scale=2: src = dst/2 - 0.25
    # (clamped at 0) => even outputs = 0.25*x[k-1] + 0.75*x[k] (edge clamp),
    # odd outputs = 0.75*x[k] + 0.25*x[k+1] (edge clamp).  Static stencil,
    # no gathers.
    n = x.shape[axis]
    first = lax.slice_in_dim(x, 0, 1, axis=axis)
    last = lax.slice_in_dim(x, n - 1, n, axis=axis)
    prev = jnp.concatenate([first, lax.slice_in_dim(x, 0, n - 1, axis=axis)],
                           axis=axis)
    nxt = jnp.concatenate([lax.slice_in_dim(x, 1, n, axis=axis), last],
                          axis=axis)
    even = 0.25 * prev + 0.75 * x
    odd = 0.75 * x + 0.25 * nxt
    y = jnp.stack([even, odd], axis=axis + 1)
    shape = list(x.shape)
    shape[axis] = 2 * n
    return y.reshape(shape)


def upsample_bilinear_x2(x):
    # F.interpolate(scale_factor=2, mode='bilinear', align_corners=False), NCHW
    return _upsample2x_axis(_upsample2x_axis(x, 2), 3)


def fold_bn(w, b, gamma, beta, mean, var, eps=1e-5):
    # w: (Cin, Cout) matmul form; eval-mode BN folded into conv.
    s = gamma / jnp.sqrt(var + eps)
    return w * s[None, :], (b - mean) * s + beta


# ----------------------------- model ----------------------------------------

def init_params(key, in_dim_l, in_dim_m, in_dim_s, out_dim):
    c_total = in_dim_l + in_dim_m + in_dim_s
    ks = jax.random.split(key, 14)
    p = {}
    # down_sample: Conv2d(4*Cl, Cl, 1) + BN(Cl)
    w_ds = 0.05 * jax.random.normal(ks[0], (4 * in_dim_l, in_dim_l), jnp.float32)
    b_ds = 0.01 * jax.random.normal(ks[1], (in_dim_l,), jnp.float32)
    g = 0.8 + 0.4 * jax.random.uniform(ks[2], (in_dim_l,), jnp.float32)
    be = 0.01 * jax.random.normal(ks[3], (in_dim_l,), jnp.float32)
    mu = 0.01 * jax.random.normal(ks[4], (in_dim_l,), jnp.float32)
    var = 0.5 + jax.random.uniform(ks[5], (in_dim_l,), jnp.float32)
    p["ds_w"], p["ds_b"] = fold_bn(w_ds, b_ds, g, be, mu, var)
    # channel_proj: Conv2d(C_total, 1024, 1) + BN(1024)
    w_cp = 0.05 * jax.random.normal(ks[6], (c_total, 1024), jnp.float32)
    b_cp = 0.01 * jax.random.normal(ks[7], (1024,), jnp.float32)
    g = 0.8 + 0.4 * jax.random.uniform(ks[8], (1024,), jnp.float32)
    be = 0.01 * jax.random.normal(ks[9], (1024,), jnp.float32)
    mu = 0.01 * jax.random.normal(ks[10], (1024,), jnp.float32)
    var = 0.5 + jax.random.uniform(ks[11], (1024,), jnp.float32)
    p["cp_w"], p["cp_b"] = fold_bn(w_cp, b_cp, g, be, mu, var)
    # input_proj: Conv2d(1024, out_dim, 1)
    p["ip_w"] = 0.05 * jax.random.normal(ks[12], (1024, out_dim), jnp.float32)
    p["ip_b"] = 0.01 * jax.random.normal(ks[13], (out_dim,), jnp.float32)
    return p


@jax.jit
def three_scale_mix(l, m, s, params):
    # l: (B, Cl, 2H, 2W)  m: (B, Cm, H, W)  s: (B, Cs, H/2, W/2)   -- NCHW
    l4 = space_to_depth(l)                                  # (B, 4Cl, H, W)
    b, _, h, w = l4.shape
    s_up = upsample_bilinear_x2(s)                          # (B, Cs, H, W)
    out_pix = fused_three_scale_pix(
        nchw_to_pix(l4), nchw_to_pix(m), nchw_to_pix(s_up), params)
    return pix_to_nchw(out_pix, b, h, w)                    # (B, out_dim, H, W)


def three_scale_mix_ref(l, m, s, params):
    # pure-jnp f32 reference (same folded weights) for correctness check
    l4 = space_to_depth(l)
    b, _, h, w = l4.shape
    l_pix = jnp.maximum(nchw_to_pix(l4) @ params["ds_w"] + params["ds_b"], 0.0)
    s_up = upsample_bilinear_x2(s)
    cat = jnp.concatenate([l_pix, nchw_to_pix(m), nchw_to_pix(s_up)], axis=-1)
    hdn = jnp.maximum(cat @ params["cp_w"] + params["cp_b"], 0.0)
    out = hdn @ params["ip_w"] + params["ip_b"]
    return pix_to_nchw(out, b, h, w)


if __name__ == "__main__":
    # small shapes consistent with the module's forward
    B, Cl, Cm, Cs, OUT = 2, 4, 8, 4, 32
    H = W = 16                                   # resolution of the middle scale
    key = jax.random.PRNGKey(0)
    k_l, k_m, k_s, k_p = jax.random.split(key, 4)
    l = jax.random.normal(k_l, (B, Cl, 2 * H, 2 * W), jnp.float32)
    m = jax.random.normal(k_m, (B, Cm, H, W), jnp.float32)
    s = jax.random.normal(k_s, (B, Cs, H // 2, W // 2), jnp.float32)
    params = init_params(k_p, Cl, Cm, Cs, OUT)

    out = jax.block_until_ready(three_scale_mix(l, m, s, params))
    ref = jax.block_until_ready(three_scale_mix_ref(l, m, s, params))
    assert out.shape == (B, OUT, H, W), out.shape
    # bf16 matmul operands (f32 accumulation) => loosened tolerance vs f32 ref
    assert jnp.allclose(out, ref, atol=3e-2, rtol=3e-2), float(
        jnp.max(jnp.abs(out - ref)))
    print("KERNEL_OK")
</pallas_src>

<mosaic_0001>
module attributes {stable_mosaic.version = 11 : i64} {
  func.func @_fused_three_scale_kernel(%arg0: i32, %arg1: memref<256x16xbf16, #tpu.memory_space<vmem>>, %arg2: memref<256x8xbf16, #tpu.memory_space<vmem>>, %arg3: memref<256x4xbf16, #tpu.memory_space<vmem>>, %arg4: memref<16x4xbf16, #tpu.memory_space<vmem>>, %arg5: memref<1x4xf32, #tpu.memory_space<vmem>>, %arg6: memref<4x1024xbf16, #tpu.memory_space<vmem>>, %arg7: memref<8x1024xbf16, #tpu.memory_space<vmem>>, %arg8: memref<4x1024xbf16, #tpu.memory_space<vmem>>, %arg9: memref<1x1024xf32, #tpu.memory_space<vmem>>, %arg10: memref<1024x128xbf16, #tpu.memory_space<vmem>>, %arg11: memref<1x128xf32, #tpu.memory_space<vmem>>, %arg12: memref<256x128xf32, #tpu.memory_space<vmem>>) attributes {dimension_semantics = [#tpu.dimension_semantics<parallel>], iteration_bounds = array<i64: 2>, scalar_prefetch = 0 : i64, scratch_operands = 0 : i64, tpu.core_type = #tpu.core_type<tc>, window_params = [{transform_indices = @transform_0, window_bounds = array<i64: 256, 16>}, {transform_indices = @transform_1, window_bounds = array<i64: 256, 8>}, {transform_indices = @transform_2, window_bounds = array<i64: 256, 4>}, {pipeline_mode = #tpu.pipeline_mode<synchronous>, transform_indices = @transform_3, window_bounds = array<i64: 16, 4>}, {pipeline_mode = #tpu.pipeline_mode<synchronous>, transform_indices = @transform_4, window_bounds = array<i64: 1, 4>}, {pipeline_mode = #tpu.pipeline_mode<synchronous>, transform_indices = @transform_5, window_bounds = array<i64: 4, 1024>}, {pipeline_mode = #tpu.pipeline_mode<synchronous>, transform_indices = @transform_6, window_bounds = array<i64: 8, 1024>}, {pipeline_mode = #tpu.pipeline_mode<synchronous>, transform_indices = @transform_7, window_bounds = array<i64: 4, 1024>}, {pipeline_mode = #tpu.pipeline_mode<synchronous>, transform_indices = @transform_8, window_bounds = array<i64: 1, 1024>}, {pipeline_mode = #tpu.pipeline_mode<synchronous>, transform_indices = @transform_9, window_bounds = array<i64: 1024, 128>}, {pipeline_mode = #tpu.pipeline_mode<synchronous>, transform_indices = @transform_10, window_bounds = array<i64: 1, 128>}, {transform_indices = @transform_11, window_bounds = array<i64: 256, 128>}]} {
    %c0 = arith.constant 0 : index
    %c0_0 = arith.constant 0 : index
    %0 = vector.load %arg1[%c0, %c0_0] : memref<256x16xbf16, #tpu.memory_space<vmem>>, vector<256x16xbf16>
    %c0_1 = arith.constant 0 : index
    %c0_2 = arith.constant 0 : index
    %1 = vector.load %arg4[%c0_1, %c0_2] : memref<16x4xbf16, #tpu.memory_space<vmem>>, vector<16x4xbf16>
    %cst = arith.constant dense<0.000000e+00> : vector<256x4xf32>
    %2 = tpu.matmul %0, %1, %cst {dimension_numbers = #tpu.dot_dimension_numbers<[1], [0], [0], [1], [0, 0, 1, 1], [], []>} : vector<256x16xbf16>, vector<16x4xbf16>, vector<256x4xf32> -> vector<256x4xf32>
    %c0_3 = arith.constant 0 : index
    %c0_4 = arith.constant 0 : index
    %3 = vector.load %arg5[%c0_3, %c0_4] : memref<1x4xf32, #tpu.memory_space<vmem>>, vector<1x4xf32>
    %4 = vector.broadcast %3 : vector<1x4xf32> to vector<256x4xf32>
    %5 = arith.addf %2, %4 : vector<256x4xf32>
    %cst_5 = arith.constant 0.000000e+00 : f32
    %6 = vector.broadcast %cst_5 : f32 to vector<256x4xf32>
    %7 = arith.maximumf %5, %6 : vector<256x4xf32>
    %8 = arith.truncf %7 : vector<256x4xf32> to vector<256x4xbf16>
    %c0_6 = arith.constant 0 : index
    %c0_7 = arith.constant 0 : index
    %9 = vector.load %arg2[%c0_6, %c0_7] : memref<256x8xbf16, #tpu.memory_space<vmem>>, vector<256x8xbf16>
    %c0_8 = arith.constant 0 : index
    %c0_9 = arith.constant 0 : index
    %10 = vector.load %arg3[%c0_8, %c0_9] : memref<256x4xbf16, #tpu.memory_space<vmem>>, vector<256x4xbf16>
    %cst_10 = arith.constant 0.000000e+00 : f32
    %11 = vector.broadcast %cst_10 : f32 to vector<256x128xf32>
    %c0_11 = arith.constant 0 : index
    %c0_12 = arith.constant 0 : index
    %12 = vector.load %arg6[%c0_11, %c0_12] : memref<4x1024xbf16, #tpu.memory_space<vmem>>, vector<4x256xbf16>
    %cst_13 = arith.constant dense<0.000000e+00> : vector<256x256xf32>
    %13 = tpu.matmul %8, %12, %cst_13 {dimension_numbers = #tpu.dot_dimension_numbers<[1], [0], [0], [1], [0, 0, 1, 1], [], []>} : vector<256x4xbf16>, vector<4x256xbf16>, vector<256x256xf32> -> vector<256x256xf32>
    %c0_14 = arith.constant 0 : index
    %c0_15 = arith.constant 0 : index
    %14 = vector.load %arg7[%c0_14, %c0_15] : memref<8x1024xbf16, #tpu.memory_space<vmem>>, vector<8x256xbf16>
    %cst_16 = arith.constant dense<0.000000e+00> : vector<256x256xf32>
    %15 = tpu.matmul %9, %14, %cst_16 {dimension_numbers = #tpu.dot_dimension_numbers<[1], [0], [0], [1], [0, 0, 1, 1], [], []>} : vector<256x8xbf16>, vector<8x256xbf16>, vector<256x256xf32> -> vector<256x256xf32>
    %16 = arith.addf %13, %15 : vector<256x256xf32>
    %c0_17 = arith.constant 0 : index
    %c0_18 = arith.constant 0 : index
    %17 = vector.load %arg8[%c0_17, %c0_18] : memref<4x1024xbf16, #tpu.memory_space<vmem>>, vector<4x256xbf16>
    %cst_19 = arith.constant dense<0.000000e+00> : vector<256x256xf32>
    %18 = tpu.matmul %10, %17, %cst_19 {dimension_numbers = #tpu.dot_dimension_numbers<[1], [0], [0], [1], [0, 0, 1, 1], [], []>} : vector<256x4xbf16>, vector<4x256xbf16>, vector<256x256xf32> -> vector<256x256xf32>
    %19 = arith.addf %16, %18 : vector<256x256xf32>
    %c0_20 = arith.constant 0 : index
    %c0_21 = arith.constant 0 : index
    %20 = vector.load %arg9[%c0_20, %c0_21] : memref<1x1024xf32, #tpu.memory_space<vmem>>, vector<1x256xf32>
    %21 = vector.broadcast %20 : vector<1x256xf32> to vector<256x256xf32>
    %22 = arith.addf %19, %21 : vector<256x256xf32>
    %cst_22 = arith.constant 0.000000e+00 : f32
    %23 = vector.broadcast %cst_22 : f32 to vector<256x256xf32>
    %24 = arith.maximumf %22, %23 : vector<256x256xf32>
    %25 = arith.truncf %24 : vector<256x256xf32> to vector<256x256xbf16>
    %c0_23 = arith.constant 0 : index
    %c0_24 = arith.constant 0 : index
    %26 = vector.load %arg10[%c0_23, %c0_24] : memref<1024x128xbf16, #tpu.memory_space<vmem>>, vector<256x128xbf16>
    %cst_25 = arith.constant dense<0.000000e+00> : vector<256x128xf32>
    %27 = tpu.matmul %25, %26, %cst_25 {dimension_numbers = #tpu.dot_dimension_numbers<[1], [0], [0], [1], [0, 0, 1, 1], [], []>} : vector<256x256xbf16>, vector<256x128xbf16>, vector<256x128xf32> -> vector<256x128xf32>
    %28 = arith.addf %11, %27 : vector<256x128xf32>
    %c0_26 = arith.constant 0 : index
    %c256 = arith.constant 256 : index
    %29 = vector.load %arg6[%c0_26, %c256] : memref<4x1024xbf16, #tpu.memory_space<vmem>>, vector<4x256xbf16>
    %cst_27 = arith.constant dense<0.000000e+00> : vector<256x256xf32>
    %30 = tpu.matmul %8, %29, %cst_27 {dimension_numbers = #tpu.dot_dimension_numbers<[1], [0], [0], [1], [0, 0, 1, 1], [], []>} : vector<256x4xbf16>, vector<4x256xbf16>, vector<256x256xf32> -> vector<256x256xf32>
    %c0_28 = arith.constant 0 : index
    %c256_29 = arith.constant 256 : index
    %31 = vector.load %arg7[%c0_28, %c256_29] : memref<8x1024xbf16, #tpu.memory_space<vmem>>, vector<8x256xbf16>
    %cst_30 = arith.constant dense<0.000000e+00> : vector<256x256xf32>
    %32 = tpu.matmul %9, %31, %cst_30 {dimension_numbers = #tpu.dot_dimension_numbers<[1], [0], [0], [1], [0, 0, 1, 1], [], []>} : vector<256x8xbf16>, vector<8x256xbf16>, vector<256x256xf32> -> vector<256x256xf32>
    %33 = arith.addf %30, %32 : vector<256x256xf32>
    %c0_31 = arith.constant 0 : index
    %c256_32 = arith.constant 256 : index
    %34 = vector.load %arg8[%c0_31, %c256_32] : memref<4x1024xbf16, #tpu.memory_space<vmem>>, vector<4x256xbf16>
    %cst_33 = arith.constant dense<0.000000e+00> : vector<256x256xf32>
    %35 = tpu.matmul %10, %34, %cst_33 {dimension_numbers = #tpu.dot_dimension_numbers<[1], [0], [0], [1], [0, 0, 1, 1], [], []>} : vector<256x4xbf16>, vector<4x256xbf16>, vector<256x256xf32> -> vector<256x256xf32>
    %36 = arith.addf %33, %35 : vector<256x256xf32>
    %c0_34 = arith.constant 0 : index
    %c256_35 = arith.constant 256 : index
    %37 = vector.load %arg9[%c0_34, %c256_35] : memref<1x1024xf32, #tpu.memory_space<vmem>>, vector<1x256xf32>
    %38 = vector.broadcast %37 : vector<1x256xf32> to vector<256x256xf32>
    %39 = arith.addf %36, %38 : vector<256x256xf32>
    %cst_36 = arith.constant 0.000000e+00 : f32
    %40 = vector.broadcast %cst_36 : f32 to vector<256x256xf32>
    %41 = arith.maximumf %39, %40 : vector<256x256xf32>
    %42 = arith.truncf %41 : vector<256x256xf32> to vector<256x256xbf16>
    %c256_37 = arith.constant 256 : index
    %c0_38 = arith.constant 0 : index
    %43 = vector.load %arg10[%c256_37, %c0_38] : memref<1024x128xbf16, #tpu.memory_space<vmem>>, vector<256x128xbf16>
    %cst_39 = arith.constant dense<0.000000e+00> : vector<256x128xf32>
    %44 = tpu.matmul %42, %43, %cst_39 {dimension_numbers = #tpu.dot_dimension_numbers<[1], [0], [0], [1], [0, 0, 1, 1], [], []>} : vector<256x256xbf16>, vector<256x128xbf16>, vector<256x128xf32> -> vector<256x128xf32>
    %45 = arith.addf %28, %44 : vector<256x128xf32>
    %c0_40 = arith.constant 0 : index
    %c512 = arith.constant 512 : index
    %46 = vector.load %arg6[%c0_40, %c512] : memref<4x1024xbf16, #tpu.memory_space<vmem>>, vector<4x256xbf16>
    %cst_41 = arith.constant dense<0.000000e+00> : vector<256x256xf32>
    %47 = tpu.matmul %8, %46, %cst_41 {dimension_numbers = #tpu.dot_dimension_numbers<[1], [0], [0], [1], [0, 0, 1, 1], [], []>} : vector<256x4xbf16>, vector<4x256xbf16>, vector<256x256xf32> -> vector<256x256xf32>
    %c0_42 = arith.constant 0 : index
    %c512_43 = arith.constant 512 : index
    %48 = vector.load %arg7[%c0_42, %c512_43] : memref<8x1024xbf16, #tpu.memory_space<vmem>>, vector<8x256xbf16>
    %cst_44 = arith.constant dense<0.000000e+00> : vector<256x256xf32>
    %49 = tpu.matmul %9, %48, %cst_44 {dimension_numbers = #tpu.dot_dimension_numbers<[1], [0], [0], [1], [0, 0, 1, 1], [], []>} : vector<256x8xbf16>, vector<8x256xbf16>, vector<256x256xf32> -> vector<256x256xf32>
    %50 = arith.addf %47, %49 : vector<256x256xf32>
    %c0_45 = arith.constant 0 : index
    %c512_46 = arith.constant 512 : index
    %51 = vector.load %arg8[%c0_45, %c512_46] : memref<4x1024xbf16, #tpu.memory_space<vmem>>, vector<4x256xbf16>
    %cst_47 = arith.constant dense<0.000000e+00> : vector<256x256xf32>
    %52 = tpu.matmul %10, %51, %cst_47 {dimension_numbers = #tpu.dot_dimension_numbers<[1], [0], [0], [1], [0, 0, 1, 1], [], []>} : vector<256x4xbf16>, vector<4x256xbf16>, vector<256x256xf32> -> vector<256x256xf32>
    %53 = arith.addf %50, %52 : vector<256x256xf32>
    %c0_48 = arith.constant 0 : index
    %c512_49 = arith.constant 512 : index
    %54 = vector.load %arg9[%c0_48, %c512_49] : memref<1x1024xf32, #tpu.memory_space<vmem>>, vector<1x256xf32>
    %55 = vector.broadcast %54 : vector<1x256xf32> to vector<256x256xf32>
    %56 = arith.addf %53, %55 : vector<256x256xf32>
    %cst_50 = arith.constant 0.000000e+00 : f32
    %57 = vector.broadcast %cst_50 : f32 to vector<256x256xf32>
    %58 = arith.maximumf %56, %57 : vector<256x256xf32>
    %59 = arith.truncf %58 : vector<256x256xf32> to vector<256x256xbf16>
    %c512_51 = arith.constant 512 : index
    %c0_52 = arith.constant 0 : index
    %60 = vector.load %arg10[%c512_51, %c0_52] : memref<1024x128xbf16, #tpu.memory_space<vmem>>, vector<256x128xbf16>
    %cst_53 = arith.constant dense<0.000000e+00> : vector<256x128xf32>
    %61 = tpu.matmul %59, %60, %cst_53 {dimension_numbers = #tpu.dot_dimension_numbers<[1], [0], [0], [1], [0, 0, 1, 1], [], []>} : vector<256x256xbf16>, vector<256x128xbf16>, vector<256x128xf32> -> vector<256x128xf32>
    %62 = arith.addf %45, %61 : vector<256x128xf32>
    %c0_54 = arith.constant 0 : index
    %c768 = arith.constant 768 : index
    %63 = vector.load %arg6[%c0_54, %c768] : memref<4x1024xbf16, #tpu.memory_space<vmem>>, vector<4x256xbf16>
    %cst_55 = arith.constant dense<0.000000e+00> : vector<256x256xf32>
    %64 = tpu.matmul %8, %63, %cst_55 {dimension_numbers = #tpu.dot_dimension_numbers<[1], [0], [0], [1], [0, 0, 1, 1], [], []>} : vector<256x4xbf16>, vector<4x256xbf16>, vector<256x256xf32> -> vector<256x256xf32>
    %c0_56 = arith.constant 0 : index
    %c768_57 = arith.constant 768 : index
    %65 = vector.load %arg7[%c0_56, %c768_57] : memref<8x1024xbf16, #tpu.memory_space<vmem>>, vector<8x256xbf16>
    %cst_58 = arith.constant dense<0.000000e+00> : vector<256x256xf32>
    %66 = tpu.matmul %9, %65, %cst_58 {dimension_numbers = #tpu.dot_dimension_numbers<[1], [0], [0], [1], [0, 0, 1, 1], [], []>} : vector<256x8xbf16>, vector<8x256xbf16>, vector<256x256xf32> -> vector<256x256xf32>
    %67 = arith.addf %64, %66 : vector<256x256xf32>
    %c0_59 = arith.constant 0 : index
    %c768_60 = arith.constant 768 : index
    %68 = vector.load %arg8[%c0_59, %c768_60] : memref<4x1024xbf16, #tpu.memory_space<vmem>>, vector<4x256xbf16>
    %cst_61 = arith.constant dense<0.000000e+00> : vector<256x256xf32>
    %69 = tpu.matmul %10, %68, %cst_61 {dimension_numbers = #tpu.dot_dimension_numbers<[1], [0], [0], [1], [0, 0, 1, 1], [], []>} : vector<256x4xbf16>, vector<4x256xbf16>, vector<256x256xf32> -> vector<256x256xf32>
    %70 = arith.addf %67, %69 : vector<256x256xf32>
    %c0_62 = arith.constant 0 : index
    %c768_63 = arith.constant 768 : index
    %71 = vector.load %arg9[%c0_62, %c768_63] : memref<1x1024xf32, #tpu.memory_space<vmem>>, vector<1x256xf32>
    %72 = vector.broadcast %71 : vector<1x256xf32> to vector<256x256xf32>
    %73 = arith.addf %70, %72 : vector<256x256xf32>
    %cst_64 = arith.constant 0.000000e+00 : f32
    %74 = vector.broadcast %cst_64 : f32 to vector<256x256xf32>
    %75 = arith.maximumf %73, %74 : vector<256x256xf32>
    %76 = arith.truncf %75 : vector<256x256xf32> to vector<256x256xbf16>
    %c768_65 = arith.constant 768 : index
    %c0_66 = arith.constant 0 : index
    %77 = vector.load %arg10[%c768_65, %c0_66] : memref<1024x128xbf16, #tpu.memory_space<vmem>>, vector<256x128xbf16>
    %cst_67 = arith.constant dense<0.000000e+00> : vector<256x128xf32>
    %78 = tpu.matmul %76, %77, %cst_67 {dimension_numbers = #tpu.dot_dimension_numbers<[1], [0], [0], [1], [0, 0, 1, 1], [], []>} : vector<256x256xbf16>, vector<256x128xbf16>, vector<256x128xf32> -> vector<256x128xf32>
    %79 = arith.addf %62, %78 : vector<256x128xf32>
    %c0_68 = arith.constant 0 : index
    %c0_69 = arith.constant 0 : index
    %80 = vector.load %arg11[%c0_68, %c0_69] : memref<1x128xf32, #tpu.memory_space<vmem>>, vector<1x128xf32>
    %81 = vector.broadcast %80 : vector<1x128xf32> to vector<256x128xf32>
    %82 = arith.addf %79, %81 : vector<256x128xf32>
    %c0_70 = arith.constant 0 : index
    %c0_71 = arith.constant 0 : index
    %83 = vector.load %arg12[%c0_70, %c0_71] : memref<256x128xf32, #tpu.memory_space<vmem>>, vector<256x128xf32>
    tpu.vector_store %arg12[%c0_70, %c0_71], %82 {strides = array<i32>} : memref<256x128xf32, #tpu.memory_space<vmem>>, vector<256x128xf32>,
    return
  }
  func.func @transform_0(%arg0: i32) -> (i32, i32) {
    %c0_i32 = arith.constant 0 : i32
    %c0_i32_0 = arith.constant 0 : i32
    return %arg0, %c0_i32 : i32, i32
  }
  func.func @transform_1(%arg0: i32) -> (i32, i32) {
    %c0_i32 = arith.constant 0 : i32
    %c0_i32_0 = arith.constant 0 : i32
    return %arg0, %c0_i32 : i32, i32
  }
  func.func @transform_2(%arg0: i32) -> (i32, i32) {
    %c0_i32 = arith.constant 0 : i32
    %c0_i32_0 = arith.constant 0 : i32
    return %arg0, %c0_i32 : i32, i32
  }
  func.func @transform_3(%arg0: i32) -> (i32, i32) {
    %c0_i32 = arith.constant 0 : i32
    %c0_i32_0 = arith.constant 0 : i32
    %c0_i32_1 = arith.constant 0 : i32
    return %c0_i32, %c0_i32_0 : i32, i32
  }
  func.func @transform_4(%arg0: i32) -> (i32, i32) {
    %c0_i32 = arith.constant 0 : i32
    %c0_i32_0 = arith.constant 0 : i32
    %c0_i32_1 = arith.constant 0 : i32
    return %c0_i32, %c0_i32_0 : i32, i32
  }
  func.func @transform_5(%arg0: i32) -> (i32, i32) {
    %c0_i32 = arith.constant 0 : i32
    %c0_i32_0 = arith.constant 0 : i32
    %c0_i32_1 = arith.constant 0 : i32
    return %c0_i32, %c0_i32_0 : i32, i32
  }
  func.func @transform_6(%arg0: i32) -> (i32, i32) {
    %c0_i32 = arith.constant 0 : i32
    %c0_i32_0 = arith.constant 0 : i32
    %c0_i32_1 = arith.constant 0 : i32
    return %c0_i32, %c0_i32_0 : i32, i32
  }
  func.func @transform_7(%arg0: i32) -> (i32, i32) {
    %c0_i32 = arith.constant 0 : i32
    %c0_i32_0 = arith.constant 0 : i32
    %c0_i32_1 = arith.constant 0 : i32
    return %c0_i32, %c0_i32_0 : i32, i32
  }
  func.func @transform_8(%arg0: i32) -> (i32, i32) {
    %c0_i32 = arith.constant 0 : i32
    %c0_i32_0 = arith.constant 0 : i32
    %c0_i32_1 = arith.constant 0 : i32
    return %c0_i32, %c0_i32_0 : i32, i32
  }
  func.func @transform_9(%arg0: i32) -> (i32, i32) {
    %c0_i32 = arith.constant 0 : i32
    %c0_i32_0 = arith.constant 0 : i32
    %c0_i32_1 = arith.constant 0 : i32
    return %c0_i32, %c0_i32_0 : i32, i32
  }
  func.func @transform_10(%arg0: i32) -> (i32, i32) {
    %c0_i32 = arith.constant 0 : i32
    %c0_i32_0 = arith.constant 0 : i32
    %c0_i32_1 = arith.constant 0 : i32
    return %c0_i32, %c0_i32_0 : i32, i32
  }
  func.func @transform_11(%arg0: i32) -> (i32, i32) {
    %c0_i32 = arith.constant 0 : i32
    %c0_i32_0 = arith.constant 0 : i32
    return %arg0, %c0_i32 : i32, i32
  }
}

</mosaic_0001>

<llo_original>
// kernel: three_scale_mix.1
$region0: #{three_scale_mix.1}
  #allocation0 [shape = 'u32[]', space=smem, size = 0x4, offset = 0x4, fixed_abs, tag = 'smem constant byte address 0x4 - core index']
  #allocation1 [shape = 'u32[72,128]{1,0:T(1,128)}', space=vmem, size = 0x9000, scoped, tag = 'internal scratch']
  %s0 = inlined_call_operand.vmem [shape: bf16[512,16], index: 0, kind: input, shape index: {}]
  %s1 = inlined_call_operand.vmem [shape: bf16[512,8], index: 1, kind: input, shape index: {}]
  %s2 = inlined_call_operand.vmem [shape: bf16[512,4], index: 2, kind: input, shape index: {}]
  %s3 = inlined_call_operand.vmem [shape: bf16[16,4], index: 3, kind: input, shape index: {}]
  %s4 = inlined_call_operand.vmem [shape: f32[1,4], index: 4, kind: input, shape index: {}]
  %s5 = inlined_call_operand.vmem [shape: bf16[4,1024], index: 5, kind: input, shape index: {}]
  %s6 = inlined_call_operand.vmem [shape: bf16[8,1024], index: 6, kind: input, shape index: {}]
  %s7 = inlined_call_operand.vmem [shape: bf16[4,1024], index: 7, kind: input, shape index: {}]
  %s8 = inlined_call_operand.vmem [shape: f32[1,1024], index: 8, kind: input, shape index: {}]
  %s9 = inlined_call_operand.vmem [shape: bf16[1024,128], index: 9, kind: input, shape index: {}]
  %s10 = inlined_call_operand.vmem [shape: f32[1,128], index: 10, kind: input, shape index: {}]
  %s11 = inlined_call_operand.hbm [shape: f32[512,128], index: 11, kind: output, shape index: {}]
  %s12 = sld [smem:[#allocation0]]
  $region77: #{three_scale_mix.1} parent=0
    _
  %s14 = ssub.s32 1, %s12
  %s15 = scalar_select 0, %s14, %s12
  $region1: #{three_scale_mix.1} parent=0
    #allocation2 [shape = 'u8[262144]{0}', space=vmem, size = 0x40000, scoped, tag = 'output window, operand 0']
    #allocation3 [shape = 's32[2]{0}', space=sflag, size = 0x8, scoped, tag = 'scoped memory for three_scale_mix.1']
    %16 = vsyncpa [#allocation3], 0
    %s17 = scalar_lea.sflag [#allocation3], 1
    %18 = vsyncpa %s17, 0
    loop: start=0, step=1, limit=4
    $region2: #{three_scale_mix.1} parent=1 // loop_pre_header
      _
    $region3: #{three_scale_mix.1} parent=1 // loop_header
      %s20 = sphi 0, %s24
      %p21 = scmp.ge.s32.totalorder %s20, 4
      %s30 = sphi 0, %s32
      %s33 = sphi 0, %s30
      %s34 = sphi 0, %s33
      %s50 = sphi 0, %s34
      %s56 = sphi 0, %s58
      %s59 = sphi 0, %s56
      %s60 = sphi 0, %s59
      %s76 = sphi 0, %s60
      %s82 = sphi 0, %s84
      %s85 = sphi 0, %s82
      %s86 = sphi 0, %s85
      %s102 = sphi 0, %s86
      %s106 = sphi 0, %s106
      %s108 = sphi 0, %s106
      %s109 = sphi 0, %s108
      %s123 = sphi 0, %s109
      %s127 = sphi 0, %s127
      %s129 = sphi 0, %s127
      %s130 = sphi 0, %s129
      %s144 = sphi 0, %s130
      %s148 = sphi 0, %s148
      %s150 = sphi 0, %s148
      %s151 = sphi 0, %s150
      %s165 = sphi 0, %s151
      %s169 = sphi 0, %s169
      %s171 = sphi 0, %s169
      %s172 = sphi 0, %s171
      %s186 = sphi 0, %s172
      %s190 = sphi 0, %s190
      %s192 = sphi 0, %s190
      %s193 = sphi 0, %s192
      %s207 = sphi 0, %s193
      %s211 = sphi 0, %s211
      %s213 = sphi 0, %s211
      %s214 = sphi 0, %s213
      %s228 = sphi 0, %s214
      %s232 = sphi 0, %s232
      %s234 = sphi 0, %s232
      %s235 = sphi 0, %s234
      %s249 = sphi 0, %s235
      %s253 = sphi 0, %s253
      %s255 = sphi 0, %s253
      %s256 = sphi 0, %s255
      %s270 = sphi 0, %s256
      %s276 = sphi 0, %s278
      %s279 = sphi 0, %s276
      %s280 = sphi 0, %s279
      %s296 = sphi 0, %s280
    $region4: #{three_scale_mix.1} parent=1 // loop_header_branch
      %23 = sbr.rel (%p21) target = $region8
    $region5: #{three_scale_mix.1} parent=1 // loop_body
      %s25 = ssub.s32 %s20, 1
      %s26 = ssub.s32 %s20, 2
      %s27 = sadd.s32 %s20, 1
      %s28 = ssub.s32 %s20, %s27
      %p29 = scmp.eq.s32.totalorder %s28, 0
      %s31 = sadd.s32 %s30, 1
      %s32 = scalar_select %p29, %s30, %s31
      %p35 = pneg %p29
      %p36 = scmp.eq.s32.totalorder %s20, 1
      %p37 = por %p35, %p36
      %p38 = scmp.ne.s32.totalorder %s30, %s33
      %p39 = scmp.eq.s32.totalorder %s20, 0
      %p40 = por %p38, %p39
      %p41 = scmp.ne.s32.totalorder %s30, %s33
      %p42 = scmp.eq.s32.totalorder %s25, 1
      %p43 = por %p41, %p42
      %p44 = scmp.ne.s32.totalorder %s33, %s34
      %p45 = scmp.eq.s32.totalorder %s25, 0
      %p46 = por %p44, %p45
      %p47 = scmp.ne.s32.totalorder %s33, %s34
      %p48 = scmp.eq.s32.totalorder %s26, 1
      %p49 = por %p47, %p48
      %p51 = scmp.ne.s32.totalorder %s34, %s50
      %p52 = scmp.eq.s32.totalorder %s26, 0
      %p53 = por %p51, %p52
      %s54 = ssub.s32 %s20, %s27
      %p55 = scmp.eq.s32.totalorder %s54, 0
      %s57 = sadd.s32 %s56, 1
      %s58 = scalar_select %p55, %s56, %s57
      %p61 = pneg %p55
      %p62 = scmp.eq.s32.totalorder %s20, 1
      %p63 = por %p61, %p62
      %p64 = scmp.ne.s32.totalorder %s56, %s59
      %p65 = scmp.eq.s32.totalorder %s20, 0
      %p66 = por %p64, %p65
      %p67 = scmp.ne.s32.totalorder %s56, %s59
      %p68 = scmp.eq.s32.totalorder %s25, 1
      %p69 = por %p67, %p68
      %p70 = scmp.ne.s32.totalorder %s59, %s60
      %p71 = scmp.eq.s32.totalorder %s25, 0
      %p72 = por %p70, %p71
      %p73 = scmp.ne.s32.totalorder %s59, %s60
      %p74 = scmp.eq.s32.totalorder %s26, 1
      %p75 = por %p73, %p74
      %p77 = scmp.ne.s32.totalorder %s60, %s76
      %p78 = scmp.eq.s32.totalorder %s26, 0
      %p79 = por %p77, %p78
      %s80 = ssub.s32 %s20, %s27
      %p81 = scmp.eq.s32.totalorder %s80, 0
      %s83 = sadd.s32 %s82, 1
      %s84 = scalar_select %p81, %s82, %s83
      %p87 = pneg %p81
      %p88 = scmp.eq.s32.totalorder %s20, 1
      %p89 = por %p87, %p88
      %p90 = scmp.ne.s32.totalorder %s82, %s85
      %p91 = scmp.eq.s32.totalorder %s20, 0
      %p92 = por %p90, %p91
      %p93 = scmp.ne.s32.totalorder %s82, %s85
      %p94 = scmp.eq.s32.totalorder %s25, 1
      %p95 = por %p93, %p94
      %p96 = scmp.ne.s32.totalorder %s85, %s86
      %p97 = scmp.eq.s32.totalorder %s25, 0
      %p98 = por %p96, %p97
      %p99 = scmp.ne.s32.totalorder %s85, %s86
      %p100 = scmp.eq.s32.totalorder %s26, 1
      %p101 = por %p99, %p100
      %p103 = scmp.ne.s32.totalorder %s86, %s102
      %p104 = scmp.eq.s32.totalorder %s26, 0
      %p105 = por %p103, %p104
      %s107 = sadd.s32 %s106, 1
      %p110 = scmp.eq.s32.totalorder %s20, 1
      %p111 = scmp.ne.s32.totalorder %s106, %s108
      %p112 = scmp.eq.s32.totalorder %s20, 0
      %p113 = por %p111, %p112
      %p114 = scmp.ne.s32.totalorder %s106, %s108
      %p115 = scmp.eq.s32.totalorder %s25, 1
      %p116 = por %p114, %p115
      %p117 = scmp.ne.s32.totalorder %s108, %s109
      %p118 = scmp.eq.s32.totalorder %s25, 0
      %p119 = por %p117, %p118
      %p120 = scmp.ne.s32.totalorder %s108, %s109
      %p121 = scmp.eq.s32.totalorder %s26, 1
      %p122 = por %p120, %p121
      %p124 = scmp.ne.s32.totalorder %s109, %s123
      %p125 = scmp.eq.s32.totalorder %s26, 0
      %p126 = por %p124, %p125
      %s128 = sadd.s32 %s127, 1
      %p131 = scmp.eq.s32.totalorder %s20, 1
      %p132 = scmp.ne.s32.totalorder %s127, %s129
      %p133 = scmp.eq.s32.totalorder %s20, 0
      %p134 = por %p132, %p133
      %p135 = scmp.ne.s32.totalorder %s127, %s129
      %p136 = scmp.eq.s32.totalorder %s25, 1
      %p137 = por %p135, %p136
      %p138 = scmp.ne.s32.totalorder %s129, %s130
      %p139 = scmp.eq.s32.totalorder %s25, 0
      %p140 = por %p138, %p139
      %p141 = scmp.ne.s32.totalorder %s129, %s130
      %p142 = scmp.eq.s32.totalorder %s26, 1
      %p143 = por %p141, %p142
      %p145 = scmp.ne.s32.totalorder %s130, %s144
      %p146 = scmp.eq.s32.totalorder %s26, 0
      %p147 = por %p145, %p146
      %s149 = sadd.s32 %s148, 1
      %p152 = scmp.eq.s32.totalorder %s20, 1
      %p153 = scmp.ne.s32.totalorder %s148, %s150
      %p154 = scmp.eq.s32.totalorder %s20, 0
      %p155 = por %p153, %p154
      %p156 = scmp.ne.s32.totalorder %s148, %s150
      %p157 = scmp.eq.s32.totalorder %s25, 1
      %p158 = por %p156, %p157
      %p159 = scmp.ne.s32.totalorder %s150, %s151
      %p160 = scmp.eq.s32.totalorder %s25, 0
      %p161 = por %p159, %p160
      %p162 = scmp.ne.s32.totalorder %s150, %s151
      %p163 = scmp.eq.s32.totalorder %s26, 1
      %p164 = por %p162, %p163
      %p166 = scmp.ne.s32.totalorder %s151, %s165
      %p167 = scmp.eq.s32.totalorder %s26, 0
      %p168 = por %p166, %p167
      %s170 = sadd.s32 %s169, 1
      %p173 = scmp.eq.s32.totalorder %s20, 1
      %p174 = scmp.ne.s32.totalorder %s169, %s171
      %p175 = scmp.eq.s32.totalorder %s20, 0
      %p176 = por %p174, %p175
      %p177 = scmp.ne.s32.totalorder %s169, %s171
      %p178 = scmp.eq.s32.totalorder %s25, 1
      %p179 = por %p177, %p178
      %p180 = scmp.ne.s32.totalorder %s171, %s172
      %p181 = scmp.eq.s32.totalorder %s25, 0
      %p182 = por %p180, %p181
      %p183 = scmp.ne.s32.totalorder %s171, %s172
      %p184 = scmp.eq.s32.totalorder %s26, 1
      %p185 = por %p183, %p184
      %p187 = scmp.ne.s32.totalorder %s172, %s186
      %p188 = scmp.eq.s32.totalorder %s26, 0
      %p189 = por %p187, %p188
      %s191 = sadd.s32 %s190, 1
      %p194 = scmp.eq.s32.totalorder %s20, 1
      %p195 = scmp.ne.s32.totalorder %s190, %s192
      %p196 = scmp.eq.s32.totalorder %s20, 0
      %p197 = por %p195, %p196
      %p198 = scmp.ne.s32.totalorder %s190, %s192
      %p199 = scmp.eq.s32.totalorder %s25, 1
      %p200 = por %p198, %p199
      %p201 = scmp.ne.s32.totalorder %s192, %s193
      %p202 = scmp.eq.s32.totalorder %s25, 0
      %p203 = por %p201, %p202
      %p204 = scmp.ne.s32.totalorder %s192, %s193
      %p205 = scmp.eq.s32.totalorder %s26, 1
      %p206 = por %p204, %p205
      %p208 = scmp.ne.s32.totalorder %s193, %s207
      %p209 = scmp.eq.s32.totalorder %s26, 0
      %p210 = por %p208, %p209
      %s212 = sadd.s32 %s211, 1
      %p215 = scmp.eq.s32.totalorder %s20, 1
      %p216 = scmp.ne.s32.totalorder %s211, %s213
      %p217 = scmp.eq.s32.totalorder %s20, 0
      %p218 = por %p216, %p217
      %p219 = scmp.ne.s32.totalorder %s211, %s213
      %p220 = scmp.eq.s32.totalorder %s25, 1
      %p221 = por %p219, %p220
      %p222 = scmp.ne.s32.totalorder %s213, %s214
      %p223 = scmp.eq.s32.totalorder %s25, 0
      %p224 = por %p222, %p223
      %p225 = scmp.ne.s32.totalorder %s213, %s214
      %p226 = scmp.eq.s32.totalorder %s26, 1
      %p227 = por %p225, %p226
      %p229 = scmp.ne.s32.totalorder %s214, %s228
      %p230 = scmp.eq.s32.totalorder %s26, 0
      %p231 = por %p229, %p230
      %s233 = sadd.s32 %s232, 1
      %p236 = scmp.eq.s32.totalorder %s20, 1
      %p237 = scmp.ne.s32.totalorder %s232, %s234
      %p238 = scmp.eq.s32.totalorder %s20, 0
      %p239 = por %p237, %p238
      %p240 = scmp.ne.s32.totalorder %s232, %s234
      %p241 = scmp.eq.s32.totalorder %s25, 1
      %p242 = por %p240, %p241
      %p243 = scmp.ne.s32.totalorder %s234, %s235
      %p244 = scmp.eq.s32.totalorder %s25, 0
      %p245 = por %p243, %p244
      %p246 = scmp.ne.s32.totalorder %s234, %s235
      %p247 = scmp.eq.s32.totalorder %s26, 1
      %p248 = por %p246, %p247
      %p250 = scmp.ne.s32.totalorder %s235, %s249
      %p251 = scmp.eq.s32.totalorder %s26, 0
      %p252 = por %p250, %p251
      %s254 = sadd.s32 %s253, 1
      %p257 = scmp.eq.s32.totalorder %s20, 1
      %p258 = scmp.ne.s32.totalorder %s253, %s255
      %p259 = scmp.eq.s32.totalorder %s20, 0
      %p260 = por %p258, %p259
      %p261 = scmp.ne.s32.totalorder %s253, %s255
      %p262 = scmp.eq.s32.totalorder %s25, 1
      %p263 = por %p261, %p262
      %p264 = scmp.ne.s32.totalorder %s255, %s256
      %p265 = scmp.eq.s32.totalorder %s25, 0
      %p266 = por %p264, %p265
      %p267 = scmp.ne.s32.totalorder %s255, %s256
      %p268 = scmp.eq.s32.totalorder %s26, 1
      %p269 = por %p267, %p268
      %p271 = scmp.ne.s32.totalorder %s256, %s270
      %p272 = scmp.eq.s32.totalorder %s26, 0
      %p273 = por %p271, %p272
      %s274 = ssub.s32 %s20, %s27
      %p275 = scmp.eq.s32.totalorder %s274, 0
      %s277 = sadd.s32 %s276, 1
      %s278 = scalar_select %p275, %s276, %s277
      %p281 = pneg %p275
      %p282 = scmp.eq.s32.totalorder %s20, 1
      %p283 = por %p281, %p282
      %p284 = scmp.ne.s32.totalorder %s276, %s279
      %p285 = scmp.eq.s32.totalorder %s20, 0
      %p286 = por %p284, %p285
      %p287 = scmp.ne.s32.totalorder %s276, %s279
      %p288 = scmp.eq.s32.totalorder %s25, 1
      %p289 = por %p287, %p288
      %p290 = scmp.ne.s32.totalorder %s279, %s280
      %p291 = scmp.eq.s32.totalorder %s25, 0
      %p292 = por %p290, %p291
      %p293 = scmp.ne.s32.totalorder %s279, %s280
      %p294 = scmp.eq.s32.totalorder %s26, 1
      %p295 = por %p293, %p294
      %p297 = scmp.ne.s32.totalorder %s280, %s296
      %p298 = scmp.eq.s32.totalorder %s26, 0
      %p299 = por %p297, %p298
      %p300 = scmp.le.s32.totalorder 1, %s20
      %p301 = scmp.lt.s32.totalorder %s20, 3
      %p302 = pnand %p300, %p301
      %p303 = pneg %p302
      // Predicated region
      $region9: #{three_scale_mix.1} parent=5 // pred_check
        _
      $region10: #{three_scale_mix.1} parent=5 // pred_check_branch
        %305 = sbr.rel (%p302) target = $region12
      $region11: #{three_scale_mix.1} parent=5 // pred_region
        %s306 = ssub.s32 %s20, 1
        // Predicated region
        $region13: #{three_scale_mix.1} parent=11 // pred_check
          %p307 = pneg %p119
        $region14: #{three_scale_mix.1} parent=11 // pred_check_branch
          %309 = sbr.rel (%p307) target = $region16
        $region15: #{three_scale_mix.1} parent=11 // pred_region
          _
        $region16: #{three_scale_mix.1} parent=11 // pred_fallthru
          _
        // Predicated region
        $region17: #{three_scale_mix.1} parent=11 // pred_check
          %p310 = pneg %p140
        $region18: #{three_scale_mix.1} parent=11 // pred_check_branch
          %312 = sbr.rel (%p310) target = $region20
        $region19: #{three_scale_mix.1} parent=11 // pred_region
          _
        $region20: #{three_scale_mix.1} parent=11 // pred_fallthru
          _
        // Predicated region
        $region21: #{three_scale_mix.1} parent=11 // pred_check
          %p313 = pneg %p161
        $region22: #{three_scale_mix.1} parent=11 // pred_check_branch
          %315 = sbr.rel (%p313) target = $region24
        $region23: #{three_scale_mix.1} parent=11 // pred_region
          _
        $region24: #{three_scale_mix.1} parent=11 // pred_fallthru
          _
        // Predicated region
        $region25: #{three_scale_mix.1} parent=11 // pred_check
          %p316 = pneg %p182
        $region26: #{three_scale_mix.1} parent=11 // pred_check_branch
          %318 = sbr.rel (%p316) target = $region28
        $region27: #{three_scale_mix.1} parent=11 // pred_region
          _
        $region28: #{three_scale_mix.1} parent=11 // pred_fallthru
          _
        // Predicated region
        $region29: #{three_scale_mix.1} parent=11 // pred_check
          %p319 = pneg %p203
        $region30: #{three_scale_mix.1} parent=11 // pred_check_branch
          %321 = sbr.rel (%p319) target = $region32
        $region31: #{three_scale_mix.1} parent=11 // pred_region
          _
        $region32: #{three_scale_mix.1} parent=11 // pred_fallthru
          _
        // Predicated region
        $region33: #{three_scale_mix.1} parent=11 // pred_check
          %p322 = pneg %p224
        $region34: #{three_scale_mix.1} parent=11 // pred_check_branch
          %324 = sbr.rel (%p322) target = $region36
        $region35: #{three_scale_mix.1} parent=11 // pred_region
          _
        $region36: #{three_scale_mix.1} parent=11 // pred_fallthru
          _
        // Predicated region
        $region37: #{three_scale_mix.1} parent=11 // pred_check
          %p325 = pneg %p245
        $region38: #{three_scale_mix.1} parent=11 // pred_check_branch
          %327 = sbr.rel (%p325) target = $region40
        $region39: #{three_scale_mix.1} parent=11 // pred_region
          _
        $region40: #{three_scale_mix.1} parent=11 // pred_fallthru
          _
        // Predicated region
        $region41: #{three_scale_mix.1} parent=11 // pred_check
          %p328 = pneg %p266
        $region42: #{three_scale_mix.1} parent=11 // pred_check_branch
          %330 = sbr.rel (%p328) target = $region44
        $region43: #{three_scale_mix.1} parent=11 // pred_region
          _
        $region44: #{three_scale_mix.1} parent=11 // pred_fallthru
          _
      $region12: #{three_scale_mix.1} parent=5 // pred_fallthru
        _
      %p331 = scmp.lt.s32.totalorder %s20, 2
      // Predicated region
      $region45: #{three_scale_mix.1} parent=5 // pred_check
        %p332 = pneg %p331
      $region46: #{three_scale_mix.1} parent=5 // pred_check_branch
        %334 = sbr.rel (%p332) target = $region48
      $region47: #{three_scale_mix.1} parent=5 // pred_region
        // Predicated region
        $region49: #{three_scale_mix.1} parent=47 // pred_check
          %p335 = pneg %p40
        $region50: #{three_scale_mix.1} parent=47 // pred_check_branch
          %337 = sbr.rel (%p335) target = $region52
        $region51: #{three_scale_mix.1} parent=47 // pred_region
          %s338 = smul.u32 32, %s20
          %p339 = scmp.lt.s32.totalorder %s338, 63
          %s340 = scalar_select %p339, %s338, 63
          %s341 = smul.addr %s340, 4
          %s342 = scalar_lea.vmem %s0, %s341
          %s343 = smul.u32 32, %s20
        $region52: #{three_scale_mix.1} parent=47 // pred_fallthru
          _
        // Predicated region
        $region53: #{three_scale_mix.1} parent=47 // pred_check
          %p344 = pneg %p66
        $region54: #{three_scale_mix.1} parent=47 // pred_check_branch
          %346 = sbr.rel (%p344) target = $region56
        $region55: #{three_scale_mix.1} parent=47 // pred_region
          %s347 = smul.u32 32, %s20
          %p348 = scmp.lt.s32.totalorder %s347, 63
          %s349 = scalar_select %p348, %s347, 63
          %s350 = smul.addr %s349, 4
          %s351 = scalar_lea.vmem %s1, %s350
          %s352 = smul.u32 32, %s20
        $region56: #{three_scale_mix.1} parent=47 // pred_fallthru
          _
        // Predicated region
        $region57: #{three_scale_mix.1} parent=47 // pred_check
          %p353 = pneg %p92
        $region58: #{three_scale_mix.1} parent=47 // pred_check_branch
          %355 = sbr.rel (%p353) target = $region60
        $region59: #{three_scale_mix.1} parent=47 // pred_region
          %s356 = smul.u32 32, %s20
          %p357 = scmp.lt.s32.totalorder %s356, 63
          %s358 = scalar_select %p357, %s356, 63
          %s359 = smul.addr %s358, 4
          %s360 = scalar_lea.vmem %s2, %s359
          %s361 = smul.u32 32, %s20
        $region60: #{three_scale_mix.1} parent=47 // pred_fallthru
          _
      $region48: #{three_scale_mix.1} parent=5 // pred_fallthru
        _
      %p362 = scmp.le.s32.totalorder 1, %s20
      %p363 = scmp.lt.s32.totalorder %s20, 3
      %p364 = pnand %p362, %p363
      %p365 = pneg %p364
      // Predicated region
      $region61: #{three_scale_mix.1} parent=5 // pred_check
        _
      $region62: #{three_scale_mix.1} parent=5 // pred_check_branch
        %367 = sbr.rel (%p364) target = $region64
      $region63: #{three_scale_mix.1} parent=5 // pred_region
        %s368 = ssub.s32 %s20, 1
        %s369 = smul.u32 32, %s25
        %p370 = scmp.lt.s32.totalorder %s369, 63
        %s371 = scalar_select %p370, %s369, 63
        %s372 = smul.addr %s371, 4
        %s373 = scalar_lea.vmem %s0, %s372
        %p374 = pneg %p46
        %p375 = pneg %p43
        %s376 = smul.u32 32, %s25
        %p377 = scmp.lt.s32.totalorder %s376, 63
        %s378 = scalar_select %p377, %s376, 63
        %s379 = smul.addr %s378, 4
        %s380 = scalar_lea.vmem %s1, %s379
        %p381 = pneg %p72
        %p382 = pneg %p69
        %s383 = smul.u32 32, %s25
        %p384 = scmp.lt.s32.totalorder %s383, 63
        %s385 = scalar_select %p384, %s383, 63
        %s386 = smul.addr %s385, 4
        %s387 = scalar_lea.vmem %s2, %s386
        %p388 = pneg %p98
        %p389 = pneg %p95
        %p390 = pneg %p119
        %p391 = pneg %p116
        %p392 = pneg %p140
        %p393 = pneg %p137
        %p394 = pneg %p161
        %p395 = pneg %p158
        %p396 = pneg %p182
        %p397 = pneg %p179
        %p398 = pneg %p203
        %p399 = pneg %p200
        %p400 = pneg %p224
        %p401 = pneg %p221
        %p402 = pneg %p245
        %p403 = pneg %p242
        %p404 = pneg %p266
        %p405 = pneg %p263
        %p406 = pneg %p292
        %p407 = pneg %p289
        %s408 = sand.u32 %s279, 1
        %s409 = scalar_lea.sflag [#allocation3], %s408
        %s410 = sand.u32 %s279, 1
        %s411 = smul.addr %s410, 256
        %s412 = scalar_lea.vmem [#allocation2], %s411
        %s413 = smul.u32 32, %s25
        %p414 = scmp.lt.s32.totalorder %s413, 63
        %s415 = scalar_select %p414, %s413, 63
        %s416 = smul.addr %s415, 4
        %s417 = scalar_lea.vmem %s0, %s416
        %s418 = smul.u32 32, %s25
        %s419 = smul.u32 32, %s25
        %p420 = scmp.lt.s32.totalorder %s419, 63
        %s421 = scalar_select %p420, %s419, 63
        %s422 = smul.addr %s421, 4
        %s423 = scalar_lea.vmem %s1, %s422
        %s424 = smul.u32 32, %s25
        %s425 = smul.u32 32, %s25
        %p426 = scmp.lt.s32.totalorder %s425, 63
        %s427 = scalar_select %p426, %s425, 63
        %s428 = smul.addr %s427, 4
        %s429 = scalar_lea.vmem %s2, %s428
        %s430 = smul.u32 32, %s25
        %s431 = smul.u32 32, %s25
        %v433 = vld [vmem:[%s417] sm:$0xf]
        %v434 = vld [vmem:[%s417 + $0x4] sm:$0xf]
        %v435 = vld [vmem:[%s417 + $0x8] sm:$0xf]
        %v436 = vld [vmem:[%s417 + $0xc] sm:$0xf]
        %v437 = vld [vmem:[%s417 + $0x10] sm:$0xf]
        %v438 = vld [vmem:[%s417 + $0x14] sm:$0xf]
        %v439 = vld [vmem:[%s417 + $0x18] sm:$0xf]
        %v440 = vld [vmem:[%s417 + $0x1c] sm:$0xf]
        %v441 = vld [vmem:[%s417 + $0x20] sm:$0xf]
        %v442 = vld [vmem:[%s417 + $0x24] sm:$0xf]
        %v443 = vld [vmem:[%s417 + $0x28] sm:$0xf]
        %v444 = vld [vmem:[%s417 + $0x2c] sm:$0xf]
        %v445 = vld [vmem:[%s417 + $0x30] sm:$0xf]
        %v446 = vld [vmem:[%s417 + $0x34] sm:$0xf]
        %v447 = vld [vmem:[%s417 + $0x38] sm:$0xf]
        %v448 = vld [vmem:[%s417 + $0x3c] sm:$0xf]
        %v449 = vld [vmem:[%s417 + $0x40] sm:$0xf]
        %v450 = vld [vmem:[%s417 + $0x44] sm:$0xf]
        %v451 = vld [vmem:[%s417 + $0x48] sm:$0xf]
        %v452 = vld [vmem:[%s417 + $0x4c] sm:$0xf]
        %v453 = vld [vmem:[%s417 + $0x50] sm:$0xf]
        %v454 = vld [vmem:[%s417 + $0x54] sm:$0xf]
        %v455 = vld [vmem:[%s417 + $0x58] sm:$0xf]
        %v456 = vld [vmem:[%s417 + $0x5c] sm:$0xf]
        %v457 = vld [vmem:[%s417 + $0x60] sm:$0xf]
        %v458 = vld [vmem:[%s417 + $0x64] sm:$0xf]
        %v459 = vld [vmem:[%s417 + $0x68] sm:$0xf]
        %v460 = vld [vmem:[%s417 + $0x6c] sm:$0xf]
        %v461 = vld [vmem:[%s417 + $0x70] sm:$0xf]
        %v462 = vld [vmem:[%s417 + $0x74] sm:$0xf]
        %v463 = vld [vmem:[%s417 + $0x78] sm:$0xf]
        %v464 = vld [vmem:[%s417 + $0x7c] sm:$0xf]
        %v465 = vld [vmem:[%s3] sm:$0xf]
        %v466 = vld [vmem:[%s3 + $0x4] sm:$0xf]
        %v467 = vld [vmem:[%s4] sm:$0x1]
        %v469 = vperm.slane %v467, 0
        %v503 = vunpack.c.l.b16 %v433
        %v504 = vunpack.c.l.b16 %v434
        %v505 = vunpack.c.l.b16 %v435
        %v506 = vunpack.c.l.b16 %v436
        %v507 = vunpack.c.l.b16 %v437
        %v508 = vunpack.c.l.b16 %v438
        %v509 = vunpack.c.l.b16 %v439
        %v510 = vunpack.c.l.b16 %v440
        %v511 = vunpack.c.l.b16 %v441
        %v512 = vunpack.c.l.b16 %v442
        %v513 = vunpack.c.l.b16 %v443
        %v514 = vunpack.c.l.b16 %v444
        %v515 = vunpack.c.l.b16 %v445
        %v516 = vunpack.c.l.b16 %v446
        %v517 = vunpack.c.l.b16 %v447
        %v518 = vunpack.c.l.b16 %v448
        %v519 = vunpack.c.l.b16 %v449
        %v520 = vunpack.c.l.b16 %v450
        %v521 = vunpack.c.l.b16 %v451
        %v522 = vunpack.c.l.b16 %v452
        %v523 = vunpack.c.l.b16 %v453
        %v524 = vunpack.c.l.b16 %v454
        %v525 = vunpack.c.l.b16 %v455
        %v526 = vunpack.c.l.b16 %v456
        %v527 = vunpack.c.l.b16 %v457
        %v528 = vunpack.c.l.b16 %v458
        %v529 = vunpack.c.l.b16 %v459
        %v530 = vunpack.c.l.b16 %v460
        %v531 = vunpack.c.l.b16 %v461
        %v532 = vunpack.c.l.b16 %v462
        %v533 = vunpack.c.l.b16 %v463
        %v534 = vunpack.c.l.b16 %v464
        %v535 = vpack.c.b16 %v504, %v503
        %v536 = vpack.c.b16 %v506, %v505
        %v537 = vpack.c.b16 %v508, %v507
        %v538 = vpack.c.b16 %v510, %v509
        %v539 = vpack.c.b16 %v512, %v511
        %v540 = vpack.c.b16 %v514, %v513
        %v541 = vpack.c.b16 %v516, %v515
        %v542 = vpack.c.b16 %v518, %v517
        %v543 = vpack.c.b16 %v520, %v519
        %v544 = vpack.c.b16 %v522, %v521
        %v545 = vpack.c.b16 %v524, %v523
        %v546 = vpack.c.b16 %v526, %v525
        %v547 = vpack.c.b16 %v528, %v527
        %v548 = vpack.c.b16 %v530, %v529
        %v549 = vpack.c.b16 %v532, %v531
        %v550 = vpack.c.b16 %v534, %v533
        %v553 = vunpack.c.l.b16 %v465
        %v554 = vunpack.c.l.b16 %v466
        %v555 = vpack.c.b16 %v554, %v553
        %vm557 = vcmask 130048
        %v559 = vsel %vm557, %v535, 0
        %v562 = vsel %vm557, %v536, 0
        %v565 = vsel %vm557, %v537, 0
        %v568 = vsel %vm557, %v538, 0
        %v571 = vsel %vm557, %v539, 0
        %v574 = vsel %vm557, %v540, 0
        %v577 = vsel %vm557, %v541, 0
        %v580 = vsel %vm557, %v542, 0
        %v583 = vsel %vm557, %v543, 0
        %v586 = vsel %vm557, %v544, 0
        %v589 = vsel %vm557, %v545, 0
        %v592 = vsel %vm557, %v546, 0
        %v595 = vsel %vm557, %v547, 0
        %v598 = vsel %vm557, %v548, 0
        %v601 = vsel %vm557, %v549, 0
        %v604 = vsel %vm557, %v550, 0
        %606 = vmatpush.bf16.msra.mxu0 0
        %607 = vmatpush.bf16.msra.mxu0 0
        %608 = vmatpush.bf16.msra.mxu0 0
        %609 = vmatpush.bf16.msra.mxu0 0
        %610 = vmatpush.bf16.msra.mxu0 0
        %611 = vmatpush.bf16.msra.mxu0 0
        %612 = vmatpush.bf16.msra.mxu0 0
        %613 = vmatpush.bf16.msra.mxu0 %v555
        %614 = vmatmul.bf16.gmra.mxu0 %v559
        %v615 = vpop.f32.mrf.mxu0
        %v616 = vadd.f32 %v469, %v615
        %v617 = vpop.f32.mrf.mxu0
        %v618 = vadd.f32 %v469, %v617
        %619 = vmatmul.bf16.gmra.mxu0 %v562
        %v620 = vpop.f32.mrf.mxu0
        %v621 = vadd.f32 %v469, %v620
        %v622 = vpop.f32.mrf.mxu0
        %v623 = vadd.f32 %v469, %v622
        %624 = vmatmul.bf16.gmra.mxu0 %v565
        %v625 = vpop.f32.mrf.mxu0
        %v626 = vadd.f32 %v469, %v625
        %v627 = vpop.f32.mrf.mxu0
        %v628 = vadd.f32 %v469, %v627
        %629 = vmatmul.bf16.gmra.mxu0 %v568
        %v630 = vpop.f32.mrf.mxu0
        %v631 = vadd.f32 %v469, %v630
        %v632 = vpop.f32.mrf.mxu0
        %v633 = vadd.f32 %v469, %v632
        %634 = vmatmul.bf16.gmra.mxu0 %v571
        %v635 = vpop.f32.mrf.mxu0
        %v636 = vadd.f32 %v469, %v635
        %v637 = vpop.f32.mrf.mxu0
        %v638 = vadd.f32 %v469, %v637
        %639 = vmatmul.bf16.gmra.mxu0 %v574
        %v640 = vpop.f32.mrf.mxu0
        %v641 = vadd.f32 %v469, %v640
        %v642 = vpop.f32.mrf.mxu0
        %v643 = vadd.f32 %v469, %v642
        %644 = vmatmul.bf16.gmra.mxu0 %v577
        %v645 = vpop.f32.mrf.mxu0
        %v646 = vadd.f32 %v469, %v645
        %v647 = vpop.f32.mrf.mxu0
        %v648 = vadd.f32 %v469, %v647
        %649 = vmatmul.bf16.gmra.mxu0 %v580
        %v650 = vpop.f32.mrf.mxu0
        %v651 = vadd.f32 %v469, %v650
        %v652 = vpop.f32.mrf.mxu0
        %v653 = vadd.f32 %v469, %v652
        %654 = vmatmul.bf16.gmra.mxu0 %v583
        %v655 = vpop.f32.mrf.mxu0
        %v656 = vadd.f32 %v469, %v655
        %v657 = vpop.f32.mrf.mxu0
        %v658 = vadd.f32 %v469, %v657
        %659 = vmatmul.bf16.gmra.mxu0 %v586
        %v660 = vpop.f32.mrf.mxu0
        %v661 = vadd.f32 %v469, %v660
        %v662 = vpop.f32.mrf.mxu0
        %v663 = vadd.f32 %v469, %v662
        %664 = vmatmul.bf16.gmra.mxu0 %v589
        %v665 = vpop.f32.mrf.mxu0
        %v666 = vadd.f32 %v469, %v665
        %v667 = vpop.f32.mrf.mxu0
        %v668 = vadd.f32 %v469, %v667
        %669 = vmatmul.bf16.gmra.mxu0 %v592
        %v670 = vpop.f32.mrf.mxu0
        %v671 = vadd.f32 %v469, %v670
        %v672 = vpop.f32.mrf.mxu0
        %v673 = vadd.f32 %v469, %v672
        %674 = vmatmul.bf16.gmra.mxu0 %v595
        %v675 = vpop.f32.mrf.mxu0
        %v676 = vadd.f32 %v469, %v675
        %v677 = vpop.f32.mrf.mxu0
        %v678 = vadd.f32 %v469, %v677
        %679 = vmatmul.bf16.gmra.mxu0 %v598
        %v680 = vpop.f32.mrf.mxu0
        %v681 = vadd.f32 %v469, %v680
        %v682 = vpop.f32.mrf.mxu0
        %v683 = vadd.f32 %v469, %v682
        %684 = vmatmul.bf16.gmra.mxu0 %v601
        %v685 = vpop.f32.mrf.mxu0
        %v686 = vadd.f32 %v469, %v685
        %v687 = vpop.f32.mrf.mxu0
        %v688 = vadd.f32 %v469, %v687
        %689 = vmatmul.bf16.gmra.mxu0 %v604
        %v690 = vpop.f32.mrf.mxu0
        %v691 = vadd.f32 %v469, %v690
        %v692 = vpop.f32.mrf.mxu0
        %v693 = vadd.f32 %v469, %v692
        %694 = vdwg.mxu0
        %v695 = vmax.f32 %v616, 0.0
        %v696 = vmax.f32 %v618, 0.0
        %v697 = vmax.f32 %v621, 0.0
        %v698 = vmax.f32 %v623, 0.0
        %v699 = vmax.f32 %v626, 0.0
        %v700 = vmax.f32 %v628, 0.0
        %v701 = vmax.f32 %v631, 0.0
        %v702 = vmax.f32 %v633, 0.0
        %v703 = vmax.f32 %v636, 0.0
        %v704 = vmax.f32 %v638, 0.0
        %v705 = vmax.f32 %v641, 0.0
        %v706 = vmax.f32 %v643, 0.0
        %v707 = vmax.f32 %v646, 0.0
        %v708 = vmax.f32 %v648, 0.0
        %v709 = vmax.f32 %v651, 0.0
        %v710 = vmax.f32 %v653, 0.0
        %v711 = vmax.f32 %v656, 0.0
        %v712 = vmax.f32 %v658, 0.0
        %v713 = vmax.f32 %v661, 0.0
        %v714 = vmax.f32 %v663, 0.0
        %v715 = vmax.f32 %v666, 0.0
        %v716 = vmax.f32 %v668, 0.0
        %v717 = vmax.f32 %v671, 0.0
        %v718 = vmax.f32 %v673, 0.0
        %v719 = vmax.f32 %v676, 0.0
        %v720 = vmax.f32 %v678, 0.0
        %v721 = vmax.f32 %v681, 0.0
        %v722 = vmax.f32 %v683, 0.0
        %v723 = vmax.f32 %v686, 0.0
        %v724 = vmax.f32 %v688, 0.0
        %v725 = vmax.f32 %v691, 0.0
        %v726 = vmax.f32 %v693, 0.0
        %v727 = vpack.c.bf16 %v696, %v695
        %v728 = vpack.c.bf16 %v698, %v697
        %v729 = vpack.c.bf16 %v700, %v699
        %v730 = vpack.c.bf16 %v702, %v701
        %v731 = vpack.c.bf16 %v704, %v703
        %v732 = vpack.c.bf16 %v706, %v705
        %v733 = vpack.c.bf16 %v708, %v707
        %v734 = vpack.c.bf16 %v710, %v709
        %v735 = vpack.c.bf16 %v712, %v711
        %v736 = vpack.c.bf16 %v714, %v713
        %v737 = vpack.c.bf16 %v716, %v715
        %v738 = vpack.c.bf16 %v718, %v717
        %v739 = vpack.c.bf16 %v720, %v719
        %v740 = vpack.c.bf16 %v722, %v721
        %v741 = vpack.c.bf16 %v724, %v723
        %v742 = vpack.c.bf16 %v726, %v725
        %v743 = vld [vmem:[%s423] sm:$0xf]
        %v744 = vld [vmem:[%s423 + $0x4] sm:$0xf]
        %v745 = vld [vmem:[%s423 + $0x8] sm:$0xf]
        %v746 = vld [vmem:[%s423 + $0xc] sm:$0xf]
        %v747 = vld [vmem:[%s423 + $0x10] sm:$0xf]
        %v748 = vld [vmem:[%s423 + $0x14] sm:$0xf]
        %v749 = vld [vmem:[%s423 + $0x18] sm:$0xf]
        %v750 = vld [vmem:[%s423 + $0x1c] sm:$0xf]
        %v751 = vld [vmem:[%s423 + $0x20] sm:$0xf]
        %v752 = vld [vmem:[%s423 + $0x24] sm:$0xf]
        %v753 = vld [vmem:[%s423 + $0x28] sm:$0xf]
        %v754 = vld [vmem:[%s423 + $0x2c] sm:$0xf]
        %v755 = vld [vmem:[%s423 + $0x30] sm:$0xf]
        %v756 = vld [vmem:[%s423 + $0x34] sm:$0xf]
        %v757 = vld [vmem:[%s423 + $0x38] sm:$0xf]
        %v758 = vld [vmem:[%s423 + $0x3c] sm:$0xf]
        %v759 = vld [vmem:[%s423 + $0x40] sm:$0xf]
        %v760 = vld [vmem:[%s423 + $0x44] sm:$0xf]
        %v761 = vld [vmem:[%s423 + $0x48] sm:$0xf]
        %v762 = vld [vmem:[%s423 + $0x4c] sm:$0xf]
        %v763 = vld [vmem:[%s423 + $0x50] sm:$0xf]
        %v764 = vld [vmem:[%s423 + $0x54] sm:$0xf]
        %v765 = vld [vmem:[%s423 + $0x58] sm:$0xf]
        %v766 = vld [vmem:[%s423 + $0x5c] sm:$0xf]
        %v767 = vld [vmem:[%s423 + $0x60] sm:$0xf]
        %v768 = vld [vmem:[%s423 + $0x64] sm:$0xf]
        %v769 = vld [vmem:[%s423 + $0x68] sm:$0xf]
        %v770 = vld [vmem:[%s423 + $0x6c] sm:$0xf]
        %v771 = vld [vmem:[%s423 + $0x70] sm:$0xf]
        %v772 = vld [vmem:[%s423 + $0x74] sm:$0xf]
        %v773 = vld [vmem:[%s423 + $0x78] sm:$0xf]
        %v774 = vld [vmem:[%s423 + $0x7c] sm:$0xf]
        %v775 = vld [vmem:[%s429] sm:$0xf]
        %v776 = vld [vmem:[%s429 + $0x4] sm:$0xf]
        %v777 = vld [vmem:[%s429 + $0x8] sm:$0xf]
        %v778 = vld [vmem:[%s429 + $0xc] sm:$0xf]
        %v779 = vld [vmem:[%s429 + $0x10] sm:$0xf]
        %v780 = vld [vmem:[%s429 + $0x14] sm:$0xf]
        %v781 = vld [vmem:[%s429 + $0x18] sm:$0xf]
        %v782 = vld [vmem:[%s429 + $0x1c] sm:$0xf]
        %v783 = vld [vmem:[%s429 + $0x20] sm:$0xf]
        %v784 = vld [vmem:[%s429 + $0x24] sm:$0xf]
        %v785 = vld [vmem:[%s429 + $0x28] sm:$0xf]
        %v786 = vld [vmem:[%s429 + $0x2c] sm:$0xf]
        %v787 = vld [vmem:[%s429 + $0x30] sm:$0xf]
        %v788 = vld [vmem:[%s429 + $0x34] sm:$0xf]
        %v789 = vld [vmem:[%s429 + $0x38] sm:$0xf]
        %v790 = vld [vmem:[%s429 + $0x3c] sm:$0xf]
        %v791 = vld [vmem:[%s429 + $0x40] sm:$0xf]
        %v792 = vld [vmem:[%s429 + $0x44] sm:$0xf]
        %v793 = vld [vmem:[%s429 + $0x48] sm:$0xf]
        %v794 = vld [vmem:[%s429 + $0x4c] sm:$0xf]
        %v795 = vld [vmem:[%s429 + $0x50] sm:$0xf]
        %v796 = vld [vmem:[%s429 + $0x54] sm:$0xf]
        %v797 = vld [vmem:[%s429 + $0x58] sm:$0xf]
        %v798 = vld [vmem:[%s429 + $0x5c] sm:$0xf]
        %v799 = vld [vmem:[%s429 + $0x60] sm:$0xf]
        %v800 = vld [vmem:[%s429 + $0x64] sm:$0xf]
        %v801 = vld [vmem:[%s429 + $0x68] sm:$0xf]
        %v802 = vld [vmem:[%s429 + $0x6c] sm:$0xf]
        %v803 = vld [vmem:[%s429 + $0x70] sm:$0xf]
        %v804 = vld [vmem:[%s429 + $0x74] sm:$0xf]
        %v805 = vld [vmem:[%s429 + $0x78] sm:$0xf]
        %v806 = vld [vmem:[%s429 + $0x7c] sm:$0xf]
        %v807 = vld [vmem:[%s5] sm:$0xf]
        %v808 = vld [vmem:[%s6] sm:$0xff]
        %v841 = vunpack.c.l.b16 %v743
        %v842 = vunpack.c.l.b16 %v744
        %v843 = vunpack.c.l.b16 %v745
        %v844 = vunpack.c.l.b16 %v746
        %v845 = vunpack.c.l.b16 %v747
        %v846 = vunpack.c.l.b16 %v748
        %v847 = vunpack.c.l.b16 %v749
        %v848 = vunpack.c.l.b16 %v750
        %v849 = vunpack.c.l.b16 %v751
        %v850 = vunpack.c.l.b16 %v752
        %v851 = vunpack.c.l.b16 %v753
        %v852 = vunpack.c.l.b16 %v754
        %v853 = vunpack.c.l.b16 %v755
        %v854 = vunpack.c.l.b16 %v756
        %v855 = vunpack.c.l.b16 %v757
        %v856 = vunpack.c.l.b16 %v758
        %v857 = vunpack.c.l.b16 %v759
        %v858 = vunpack.c.l.b16 %v760
        %v859 = vunpack.c.l.b16 %v761
        %v860 = vunpack.c.l.b16 %v762
        %v861 = vunpack.c.l.b16 %v763
        %v862 = vunpack.c.l.b16 %v764
        %v863 = vunpack.c.l.b16 %v765
        %v864 = vunpack.c.l.b16 %v766
        %v865 = vunpack.c.l.b16 %v767
        %v866 = vunpack.c.l.b16 %v768
        %v867 = vunpack.c.l.b16 %v769
        %v868 = vunpack.c.l.b16 %v770
        %v869 = vunpack.c.l.b16 %v771
        %v870 = vunpack.c.l.b16 %v772
        %v871 = vunpack.c.l.b16 %v773
        %v872 = vunpack.c.l.b16 %v774
        %v873 = vpack.c.b16 %v842, %v841
        %v874 = vpack.c.b16 %v844, %v843
        %v875 = vpack.c.b16 %v846, %v845
        %v876 = vpack.c.b16 %v848, %v847
        %v877 = vpack.c.b16 %v850, %v849
        %v878 = vpack.c.b16 %v852, %v851
        %v879 = vpack.c.b16 %v854, %v853
        %v880 = vpack.c.b16 %v856, %v855
        %v881 = vpack.c.b16 %v858, %v857
        %v882 = vpack.c.b16 %v860, %v859
        %v883 = vpack.c.b16 %v862, %v861
        %v884 = vpack.c.b16 %v864, %v863
        %v885 = vpack.c.b16 %v866, %v865
        %v886 = vpack.c.b16 %v868, %v867
        %v887 = vpack.c.b16 %v870, %v869
        %v888 = vpack.c.b16 %v872, %v871
        %v890 = vunpack.c.l.b16 %v808
        %v891 = vunpack.c.h.b16 %v808
        %v892 = vpack.c.b16 %v890, %v890
        %v893 = vpack.c.b16 %v891, %v891
        %vm894 = vcmask 64512
        %v896 = vsel %vm894, %v873, 0
        %v899 = vsel %vm894, %v874, 0
        %v902 = vsel %vm894, %v875, 0
        %v905 = vsel %vm894, %v876, 0
        %v908 = vsel %vm894, %v877, 0
        %v911 = vsel %vm894, %v878, 0
        %v914 = vsel %vm894, %v879, 0
        %v917 = vsel %vm894, %v880, 0
        %v920 = vsel %vm894, %v881, 0
        %v923 = vsel %vm894, %v882, 0
        %v926 = vsel %vm894, %v883, 0
        %v929 = vsel %vm894, %v884, 0
        %v932 = vsel %vm894, %v885, 0
        %v935 = vsel %vm894, %v886, 0
        %v938 = vsel %vm894, %v887, 0
        %v941 = vsel %vm894, %v888, 0
        %vm943 = vcmask 1043456
        %v945 = vsel %vm943, %v892, 0
        %v948 = vsel %vm943, %v893, 0
        %950 = vmatpush.bf16.msra.mxu0 0
        %951 = vmatpush.bf16.msra.mxu0 0
        %952 = vmatpush.bf16.msra.mxu0 0
        %953 = vmatpush.bf16.msra.mxu0 0
        %954 = vmatpush.bf16.msra.mxu0 0
        %955 = vmatpush.bf16.msra.mxu0 0
        %956 = vmatpush.bf16.msra.mxu0 0
        %957 = vmatpush.bf16.msra.mxu0 %v945
        %958 = vmatmul.bf16.gmra.mxu0 %v896
        %v959 = vpop.f32.mrf.mxu0
        %v960 = vadd.f32 0.0, %v959
        %v961 = vpop.f32.mrf.mxu0
        %v962 = vadd.f32 0.0, %v961
        %963 = vmatmul.bf16.gmra.mxu0 %v899
        %v964 = vpop.f32.mrf.mxu0
        %v965 = vadd.f32 0.0, %v964
        %v966 = vpop.f32.mrf.mxu0
        %v967 = vadd.f32 0.0, %v966
        %968 = vmatmul.bf16.gmra.mxu0 %v902
        %v969 = vpop.f32.mrf.mxu0
        %v970 = vadd.f32 0.0, %v969
        %v971 = vpop.f32.mrf.mxu0
        %v972 = vadd.f32 0.0, %v971
        %973 = vmatmul.bf16.gmra.mxu0 %v905
        %v974 = vpop.f32.mrf.mxu0
        %v975 = vadd.f32 0.0, %v974
        %v976 = vpop.f32.mrf.mxu0
        %v977 = vadd.f32 0.0, %v976
        %978 = vmatmul.bf16.gmra.mxu0 %v908
        %v979 = vpop.f32.mrf.mxu0
        %v980 = vadd.f32 0.0, %v979
        %v981 = vpop.f32.mrf.mxu0
        %v982 = vadd.f32 0.0, %v981
        %983 = vmatmul.bf16.gmra.mxu0 %v911
        %v984 = vpop.f32.mrf.mxu0
        %v985 = vadd.f32 0.0, %v984
        %v986 = vpop.f32.mrf.mxu0
        %v987 = vadd.f32 0.0, %v986
        %988 = vmatmul.bf16.gmra.mxu0 %v914
        %v989 = vpop.f32.mrf.mxu0
        %v990 = vadd.f32 0.0, %v989
        %v991 = vpop.f32.mrf.mxu0
        %v992 = vadd.f32 0.0, %v991
        %993 = vmatmul.bf16.gmra.mxu0 %v917
        %v994 = vpop.f32.mrf.mxu0
        %v995 = vadd.f32 0.0, %v994
        %v996 = vpop.f32.mrf.mxu0
        %v997 = vadd.f32 0.0, %v996
        %998 = vmatmul.bf16.gmra.mxu0 %v920
        %v999 = vpop.f32.mrf.mxu0
        %v1000 = vadd.f32 0.0, %v999
        %v1001 = vpop.f32.mrf.mxu0
        %v1002 = vadd.f32 0.0, %v1001
        %1003 = vmatmul.bf16.gmra.mxu0 %v923
        %v1004 = vpop.f32.mrf.mxu0
        %v1005 = vadd.f32 0.0, %v1004
        %v1006 = vpop.f32.mrf.mxu0
        %v1007 = vadd.f32 0.0, %v1006
        %1008 = vmatmul.bf16.gmra.mxu0 %v926
        %v1009 = vpop.f32.mrf.mxu0
        %v1010 = vadd.f32 0.0, %v1009
        %v1011 = vpop.f32.mrf.mxu0
        %v1012 = vadd.f32 0.0, %v1011
        %1013 = vmatmul.bf16.gmra.mxu0 %v929
        %v1014 = vpop.f32.mrf.mxu0
        %v1015 = vadd.f32 0.0, %v1014
        %v1016 = vpop.f32.mrf.mxu0
        %v1017 = vadd.f32 0.0, %v1016
        %1018 = vmatmul.bf16.gmra.mxu0 %v932
        %v1019 = vpop.f32.mrf.mxu0
        %v1020 = vadd.f32 0.0, %v1019
        %v1021 = vpop.f32.mrf.mxu0
        %v1022 = vadd.f32 0.0, %v1021
        %1023 = vmatmul.bf16.gmra.mxu0 %v935
        %v1024 = vpop.f32.mrf.mxu0
        %v1025 = vadd.f32 0.0, %v1024
        %v1026 = vpop.f32.mrf.mxu0
        %v1027 = vadd.f32 0.0, %v1026
        %1028 = vmatmul.bf16.gmra.mxu0 %v938
        %v1029 = vpop.f32.mrf.mxu0
        %v1030 = vadd.f32 0.0, %v1029
        %v1031 = vpop.f32.mrf.mxu0
        %v1032 = vadd.f32 0.0, %v1031
        %1033 = vmatmul.bf16.gmra.mxu0 %v941
        %v1034 = vpop.f32.mrf.mxu0
        %v1035 = vadd.f32 0.0, %v1034
        %v1036 = vpop.f32.mrf.mxu0
        %v1037 = vadd.f32 0.0, %v1036
        %1038 = vdwg.mxu0
        %1039 = vmatpush.bf16.msra.mxu0 0
        %1040 = vmatpush.bf16.msra.mxu0 0
        %1041 = vmatpush.bf16.msra.mxu0 0
        %1042 = vmatpush.bf16.msra.mxu0 0
        %1043 = vmatpush.bf16.msra.mxu0 0
        %1044 = vmatpush.bf16.msra.mxu0 0
        %1045 = vmatpush.bf16.msra.mxu0 0
        %1046 = vmatpush.bf16.msra.mxu0 %v948
        %1047 = vmatmul.bf16.gmra.mxu0 %v896
        %v1048 = vpop.f32.mrf.mxu0
        %v1049 = vadd.f32 0.0, %v1048
        %v1050 = vpop.f32.mrf.mxu0
        %v1051 = vadd.f32 0.0, %v1050
        %1052 = vmatmul.bf16.gmra.mxu0 %v899
        %v1053 = vpop.f32.mrf.mxu0
        %v1054 = vadd.f32 0.0, %v1053
        %v1055 = vpop.f32.mrf.mxu0
        %v1056 = vadd.f32 0.0, %v1055
        %1057 = vmatmul.bf16.gmra.mxu0 %v902
        %v1058 = vpop.f32.mrf.mxu0
        %v1059 = vadd.f32 0.0, %v1058
        %v1060 = vpop.f32.mrf.mxu0
        %v1061 = vadd.f32 0.0, %v1060
        %1062 = vmatmul.bf16.gmra.mxu0 %v905
        %v1063 = vpop.f32.mrf.mxu0
        %v1064 = vadd.f32 0.0, %v1063
        %v1065 = vpop.f32.mrf.mxu0
        %v1066 = vadd.f32 0.0, %v1065
        %1067 = vmatmul.bf16.gmra.mxu0 %v908
        %v1068 = vpop.f32.mrf.mxu0
        %v1069 = vadd.f32 0.0, %v1068
        %v1070 = vpop.f32.mrf.mxu0
        %v1071 = vadd.f32 0.0, %v1070
        %1072 = vmatmul.bf16.gmra.mxu0 %v911
        %v1073 = vpop.f32.mrf.mxu0
        %v1074 = vadd.f32 0.0, %v1073
        %v1075 = vpop.f32.mrf.mxu0
        %v1076 = vadd.f32 0.0, %v1075
        %1077 = vmatmul.bf16.gmra.mxu0 %v914
        %v1078 = vpop.f32.mrf.mxu0
        %v1079 = vadd.f32 0.0, %v1078
        %v1080 = vpop.f32.mrf.mxu0
        %v1081 = vadd.f32 0.0, %v1080
        %1082 = vmatmul.bf16.gmra.mxu0 %v917
        %v1083 = vpop.f32.mrf.mxu0
        %v1084 = vadd.f32 0.0, %v1083
        %v1085 = vpop.f32.mrf.mxu0
        %v1086 = vadd.f32 0.0, %v1085
        %1087 = vmatmul.bf16.gmra.mxu0 %v920
        %v1088 = vpop.f32.mrf.mxu0
        %v1089 = vadd.f32 0.0, %v1088
        %v1090 = vpop.f32.mrf.mxu0
        %v1091 = vadd.f32 0.0, %v1090
        %1092 = vmatmul.bf16.gmra.mxu0 %v923
        %v1093 = vpop.f32.mrf.mxu0
        %v1094 = vadd.f32 0.0, %v1093
        %v1095 = vpop.f32.mrf.mxu0
        %v1096 = vadd.f32 0.0, %v1095
        %1097 = vmatmul.bf16.gmra.mxu0 %v926
        %v1098 = vpop.f32.mrf.mxu0
        %v1099 = vadd.f32 0.0, %v1098
        %v1100 = vpop.f32.mrf.mxu0
        %v1101 = vadd.f32 0.0, %v1100
        %1102 = vmatmul.bf16.gmra.mxu0 %v929
        %v1103 = vpop.f32.mrf.mxu0
        %v1104 = vadd.f32 0.0, %v1103
        %v1105 = vpop.f32.mrf.mxu0
        %v1106 = vadd.f32 0.0, %v1105
        %1107 = vmatmul.bf16.gmra.mxu0 %v932
        %v1108 = vpop.f32.mrf.mxu0
        %v1109 = vadd.f32 0.0, %v1108
        %v1110 = vpop.f32.mrf.mxu0
        %v1111 = vadd.f32 0.0, %v1110
        %1112 = vmatmul.bf16.gmra.mxu0 %v935
        %v1113 = vpop.f32.mrf.mxu0
        %v1114 = vadd.f32 0.0, %v1113
        %v1115 = vpop.f32.mrf.mxu0
        %v1116 = vadd.f32 0.0, %v1115
        %1117 = vmatmul.bf16.gmra.mxu0 %v938
        %v1118 = vpop.f32.mrf.mxu0
        %v1119 = vadd.f32 0.0, %v1118
        %v1120 = vpop.f32.mrf.mxu0
        %v1121 = vadd.f32 0.0, %v1120
        %1122 = vmatmul.bf16.gmra.mxu0 %v941
        %v1123 = vpop.f32.mrf.mxu0
        %v1124 = vadd.f32 0.0, %v1123
        %v1125 = vpop.f32.mrf.mxu0
        %v1126 = vadd.f32 0.0, %v1125
        %1127 = vdwg.mxu0
        %1129 = vst [vmem:[#allocation1] ss:$4 sm:$0xff] %v807
        %v1130 = vld.sshfl [vmem:[#allocation1] sm:$0xff pattern:$0x73625140]
        %v1131 = vld.sshfl [vmem:[#allocation1 + $0x8] sm:$0xff pattern:$0x73625140]
        %vm1132 = vcmask 31744
        %v1134 = vsel %vm1132, %v727, 0
        %v1137 = vsel %vm1132, %v728, 0
        %v1140 = vsel %vm1132, %v729, 0
        %v1143 = vsel %vm1132, %v730, 0
        %v1146 = vsel %vm1132, %v731, 0
        %v1149 = vsel %vm1132, %v732, 0
        %v1152 = vsel %vm1132, %v733, 0
        %v1155 = vsel %vm1132, %v734, 0
        %v1158 = vsel %vm1132, %v735, 0
        %v1161 = vsel %vm1132, %v736, 0
        %v1164 = vsel %vm1132, %v737, 0
        %v1167 = vsel %vm1132, %v738, 0
        %v1170 = vsel %vm1132, %v739, 0
        %v1173 = vsel %vm1132, %v740, 0
        %v1176 = vsel %vm1132, %v741, 0
        %v1179 = vsel %vm1132, %v742, 0
        %vm1181 = vcmask 1041408
        %v1182 = vsel %vm1181, %v1130, 0
        %v1184 = vsel %vm1181, %v1131, 0
        %1186 = vmatpush.bf16.msra.mxu0 0
        %1187 = vmatpush.bf16.msra.mxu0 0
        %1188 = vmatpush.bf16.msra.mxu0 0
        %1189 = vmatpush.bf16.msra.mxu0 0
        %1190 = vmatpush.bf16.msra.mxu0 0
        %1191 = vmatpush.bf16.msra.mxu0 0
        %1192 = vmatpush.bf16.msra.mxu0 0
        %1193 = vmatpush.bf16.msra.mxu0 %v1182
        %1194 = vmatmul.bf16.gmra.mxu0 %v1134
        %v1195 = vpop.f32.mrf.mxu0
        %v1196 = vadd.f32 %v960, %v1195
        %v1197 = vpop.f32.mrf.mxu0
        %v1198 = vadd.f32 %v962, %v1197
        %1199 = vmatmul.bf16.gmra.mxu0 %v1137
        %v1200 = vpop.f32.mrf.mxu0
        %v1201 = vadd.f32 %v965, %v1200
        %v1202 = vpop.f32.mrf.mxu0
        %v1203 = vadd.f32 %v967, %v1202
        %1204 = vmatmul.bf16.gmra.mxu0 %v1140
        %v1205 = vpop.f32.mrf.mxu0
        %v1206 = vadd.f32 %v970, %v1205
        %v1207 = vpop.f32.mrf.mxu0
        %v1208 = vadd.f32 %v972, %v1207
        %1209 = vmatmul.bf16.gmra.mxu0 %v1143
        %v1210 = vpop.f32.mrf.mxu0
        %v1211 = vadd.f32 %v975, %v1210
        %v1212 = vpop.f32.mrf.mxu0
        %v1213 = vadd.f32 %v977, %v1212
        %1214 = vmatmul.bf16.gmra.mxu0 %v1146
        %v1215 = vpop.f32.mrf.mxu0
        %v1216 = vadd.f32 %v980, %v1215
        %v1217 = vpop.f32.mrf.mxu0
        %v1218 = vadd.f32 %v982, %v1217
        %1219 = vmatmul.bf16.gmra.mxu0 %v1149
        %v1220 = vpop.f32.mrf.mxu0
        %v1221 = vadd.f32 %v985, %v1220
        %v1222 = vpop.f32.mrf.mxu0
        %v1223 = vadd.f32 %v987, %v1222
        %1224 = vmatmul.bf16.gmra.mxu0 %v1152
        %v1225 = vpop.f32.mrf.mxu0
        %v1226 = vadd.f32 %v990, %v1225
        %v1227 = vpop.f32.mrf.mxu0
        %v1228 = vadd.f32 %v992, %v1227
        %1229 = vmatmul.bf16.gmra.mxu0 %v1155
        %v1230 = vpop.f32.mrf.mxu0
        %v1231 = vadd.f32 %v995, %v1230
        %v1232 = vpop.f32.mrf.mxu0
        %v1233 = vadd.f32 %v997, %v1232
        %1234 = vmatmul.bf16.gmra.mxu0 %v1158
        %v1235 = vpop.f32.mrf.mxu0
        %v1236 = vadd.f32 %v1000, %v1235
        %v1237 = vpop.f32.mrf.mxu0
        %v1238 = vadd.f32 %v1002, %v1237
        %1239 = vmatmul.bf16.gmra.mxu0 %v1161
        %v1240 = vpop.f32.mrf.mxu0
        %v1241 = vadd.f32 %v1005, %v1240
        %v1242 = vpop.f32.mrf.mxu0
        %v1243 = vadd.f32 %v1007, %v1242
        %1244 = vmatmul.bf16.gmra.mxu0 %v1164
        %v1245 = vpop.f32.mrf.mxu0
        %v1246 = vadd.f32 %v1010, %v1245
        %v1247 = vpop.f32.mrf.mxu0
        %v1248 = vadd.f32 %v1012, %v1247
        %1249 = vmatmul.bf16.gmra.mxu0 %v1167
        %v1250 = vpop.f32.mrf.mxu0
        %v1251 = vadd.f32 %v1015, %v1250
        %v1252 = vpop.f32.mrf.mxu0
        %v1253 = vadd.f32 %v1017, %v1252
        %1254 = vmatmul.bf16.gmra.mxu0 %v1170
        %v1255 = vpop.f32.mrf.mxu0
        %v1256 = vadd.f32 %v1020, %v1255
        %v1257 = vpop.f32.mrf.mxu0
        %v1258 = vadd.f32 %v1022, %v1257
        %1259 = vmatmul.bf16.gmra.mxu0 %v1173
        %v1260 = vpop.f32.mrf.mxu0
        %v1261 = vadd.f32 %v1025, %v1260
        %v1262 = vpop.f32.mrf.mxu0
        %v1263 = vadd.f32 %v1027, %v1262
        %1264 = vmatmul.bf16.gmra.mxu0 %v1176
        %v1265 = vpop.f32.mrf.mxu0
        %v1266 = vadd.f32 %v1030, %v1265
        %v1267 = vpop.f32.mrf.mxu0
        %v1268 = vadd.f32 %v1032, %v1267
        %1269 = vmatmul.bf16.gmra.mxu0 %v1179
        %v1270 = vpop.f32.mrf.mxu0
        %v1271 = vadd.f32 %v1035, %v1270
        %v1272 = vpop.f32.mrf.mxu0
        %v1273 = vadd.f32 %v1037, %v1272
        %1274 = vdwg.mxu0
        %1275 = vmatpush.bf16.msra.mxu0 0
        %1276 = vmatpush.bf16.msra.mxu0 0
        %1277 = vmatpush.bf16.msra.mxu0 0
        %1278 = vmatpush.bf16.msra.mxu0 0
        %1279 = vmatpush.bf16.msra.mxu0 0
        %1280 = vmatpush.bf16.msra.mxu0 0
        %1281 = vmatpush.bf16.msra.mxu0 0
        %1282 = vmatpush.bf16.msra.mxu0 %v1184
        %1283 = vmatmul.bf16.gmra.mxu0 %v1134
        %v1284 = vpop.f32.mrf.mxu0
        %v1285 = vadd.f32 %v1049, %v1284
        %v1286 = vpop.f32.mrf.mxu0
        %v1287 = vadd.f32 %v1051, %v1286
        %1288 = vmatmul.bf16.gmra.mxu0 %v1137
        %v1289 = vpop.f32.mrf.mxu0
        %v1290 = vadd.f32 %v1054, %v1289
        %v1291 = vpop.f32.mrf.mxu0
        %v1292 = vadd.f32 %v1056, %v1291
        %1293 = vmatmul.bf16.gmra.mxu0 %v1140
        %v1294 = vpop.f32.mrf.mxu0
        %v1295 = vadd.f32 %v1059, %v1294
        %v1296 = vpop.f32.mrf.mxu0
        %v1297 = vadd.f32 %v1061, %v1296
        %1298 = vmatmul.bf16.gmra.mxu0 %v1143
        %v1299 = vpop.f32.mrf.mxu0
        %v1300 = vadd.f32 %v1064, %v1299
        %v1301 = vpop.f32.mrf.mxu0
        %v1302 = vadd.f32 %v1066, %v1301
        %1303 = vmatmul.bf16.gmra.mxu0 %v1146
        %v1304 = vpop.f32.mrf.mxu0
        %v1305 = vadd.f32 %v1069, %v1304
        %v1306 = vpop.f32.mrf.mxu0
        %v1307 = vadd.f32 %v1071, %v1306
        %1308 = vmatmul.bf16.gmra.mxu0 %v1149
        %v1309 = vpop.f32.mrf.mxu0
        %v1310 = vadd.f32 %v1074, %v1309
        %v1311 = vpop.f32.mrf.mxu0
        %v1312 = vadd.f32 %v1076, %v1311
        %1313 = vmatmul.bf16.gmra.mxu0 %v1152
        %v1314 = vpop.f32.mrf.mxu0
        %v1315 = vadd.f32 %v1079, %v1314
        %v1316 = vpop.f32.mrf.mxu0
        %v1317 = vadd.f32 %v1081, %v1316
        %1318 = vmatmul.bf16.gmra.mxu0 %v1155
        %v1319 = vpop.f32.mrf.mxu0
        %v1320 = vadd.f32 %v1084, %v1319
        %v1321 = vpop.f32.mrf.mxu0
        %v1322 = vadd.f32 %v1086, %v1321
        %1323 = vmatmul.bf16.gmra.mxu0 %v1158
        %v1324 = vpop.f32.mrf.mxu0
        %v1325 = vadd.f32 %v1089, %v1324
        %v1326 = vpop.f32.mrf.mxu0
        %v1327 = vadd.f32 %v1091, %v1326
        %1328 = vmatmul.bf16.gmra.mxu0 %v1161
        %v1329 = vpop.f32.mrf.mxu0
        %v1330 = vadd.f32 %v1094, %v1329
        %v1331 = vpop.f32.mrf.mxu0
        %v1332 = vadd.f32 %v1096, %v1331
        %1333 = vmatmul.bf16.gmra.mxu0 %v1164
        %v1334 = vpop.f32.mrf.mxu0
        %v1335 = vadd.f32 %v1099, %v1334
        %v1336 = vpop.f32.mrf.mxu0
        %v1337 = vadd.f32 %v1101, %v1336
        %1338 = vmatmul.bf16.gmra.mxu0 %v1167
        %v1339 = vpop.f32.mrf.mxu0
        %v1340 = vadd.f32 %v1104, %v1339
        %v1341 = vpop.f32.mrf.mxu0
        %v1342 = vadd.f32 %v1106, %v1341
        %1343 = vmatmul.bf16.gmra.mxu0 %v1170
        %v1344 = vpop.f32.mrf.mxu0
        %v1345 = vadd.f32 %v1109, %v1344
        %v1346 = vpop.f32.mrf.mxu0
        %v1347 = vadd.f32 %v1111, %v1346
        %1348 = vmatmul.bf16.gmra.mxu0 %v1173
        %v1349 = vpop.f32.mrf.mxu0
        %v1350 = vadd.f32 %v1114, %v1349
        %v1351 = vpop.f32.mrf.mxu0
        %v1352 = vadd.f32 %v1116, %v1351
        %1353 = vmatmul.bf16.gmra.mxu0 %v1176
        %v1354 = vpop.f32.mrf.mxu0
        %v1355 = vadd.f32 %v1119, %v1354
        %v1356 = vpop.f32.mrf.mxu0
        %v1357 = vadd.f32 %v1121, %v1356
        %1358 = vmatmul.bf16.gmra.mxu0 %v1179
        %v1359 = vpop.f32.mrf.mxu0
        %v1360 = vadd.f32 %v1124, %v1359
        %v1361 = vpop.f32.mrf.mxu0
        %v1362 = vadd.f32 %v1126, %v1361
        %1363 = vdwg.mxu0
        %v1364 = vld [vmem:[%s7] sm:$0xf]
        %v1397 = vunpack.c.l.b16 %v775
        %v1398 = vunpack.c.l.b16 %v776
        %v1399 = vunpack.c.l.b16 %v777
        %v1400 = vunpack.c.l.b16 %v778
        %v1401 = vunpack.c.l.b16 %v779
        %v1402 = vunpack.c.l.b16 %v780
        %v1403 = vunpack.c.l.b16 %v781
        %v1404 = vunpack.c.l.b16 %v782
        %v1405 = vunpack.c.l.b16 %v783
        %v1406 = vunpack.c.l.b16 %v784
        %v1407 = vunpack.c.l.b16 %v785
        %v1408 = vunpack.c.l.b16 %v786
        %v1409 = vunpack.c.l.b16 %v787
        %v1410 = vunpack.c.l.b16 %v788
        %v1411 = vunpack.c.l.b16 %v789
        %v1412 = vunpack.c.l.b16 %v790
        %v1413 = vunpack.c.l.b16 %v791
        %v1414 = vunpack.c.l.b16 %v792
        %v1415 = vunpack.c.l.b16 %v793
        %v1416 = vunpack.c.l.b16 %v794
        %v1417 = vunpack.c.l.b16 %v795
        %v1418 = vunpack.c.l.b16 %v796
        %v1419 = vunpack.c.l.b16 %v797
        %v1420 = vunpack.c.l.b16 %v798
        %v1421 = vunpack.c.l.b16 %v799
        %v1422 = vunpack.c.l.b16 %v800
        %v1423 = vunpack.c.l.b16 %v801
        %v1424 = vunpack.c.l.b16 %v802
        %v1425 = vunpack.c.l.b16 %v803
        %v1426 = vunpack.c.l.b16 %v804
        %v1427 = vunpack.c.l.b16 %v805
        %v1428 = vunpack.c.l.b16 %v806
        %v1429 = vpack.c.b16 %v1398, %v1397
        %v1430 = vpack.c.b16 %v1400, %v1399
        %v1431 = vpack.c.b16 %v1402, %v1401
        %v1432 = vpack.c.b16 %v1404, %v1403
        %v1433 = vpack.c.b16 %v1406, %v1405
        %v1434 = vpack.c.b16 %v1408, %v1407
        %v1435 = vpack.c.b16 %v1410, %v1409
        %v1436 = vpack.c.b16 %v1412, %v1411
        %v1437 = vpack.c.b16 %v1414, %v1413
        %v1438 = vpack.c.b16 %v1416, %v1415
        %v1439 = vpack.c.b16 %v1418, %v1417
        %v1440 = vpack.c.b16 %v1420, %v1419
        %v1441 = vpack.c.b16 %v1422, %v1421
        %v1442 = vpack.c.b16 %v1424, %v1423
        %v1443 = vpack.c.b16 %v1426, %v1425
        %v1444 = vpack.c.b16 %v1428, %v1427
        %1446 = vst [vmem:[#allocation1] ss:$4 sm:$0xff] %v1364
        %v1447 = vld.sshfl [vmem:[#allocation1] sm:$0xff pattern:$0x73625140]
        %v1448 = vld.sshfl [vmem:[#allocation1 + $0x8] sm:$0xff pattern:$0x73625140]
        %v1450 = vsel %vm1132, %v1429, 0
        %v1453 = vsel %vm1132, %v1430, 0
        %v1456 = vsel %vm1132, %v1431, 0
        %v1459 = vsel %vm1132, %v1432, 0
        %v1462 = vsel %vm1132, %v1433, 0
        %v1465 = vsel %vm1132, %v1434, 0
        %v1468 = vsel %vm1132, %v1435, 0
        %v1471 = vsel %vm1132, %v1436, 0
        %v1474 = vsel %vm1132, %v1437, 0
        %v1477 = vsel %vm1132, %v1438, 0
        %v1480 = vsel %vm1132, %v1439, 0
        %v1483 = vsel %vm1132, %v1440, 0
        %v1486 = vsel %vm1132, %v1441, 0
        %v1489 = vsel %vm1132, %v1442, 0
        %v1492 = vsel %vm1132, %v1443, 0
        %v1495 = vsel %vm1132, %v1444, 0
        %v1497 = vsel %vm1181, %v1447, 0
        %v1499 = vsel %vm1181, %v1448, 0
        %1501 = vmatpush.bf16.msra.mxu0 0
        %1502 = vmatpush.bf16.msra.mxu0 0
        %1503 = vmatpush.bf16.msra.mxu0 0
        %1504 = vmatpush.bf16.msra.mxu0 0
        %1505 = vmatpush.bf16.msra.mxu0 0
        %1506 = vmatpush.bf16.msra.mxu0 0
        %1507 = vmatpush.bf16.msra.mxu0 0
        %1508 = vmatpush.bf16.msra.mxu0 %v1497
        %1509 = vmatmul.bf16.gmra.mxu0 %v1450
        %v1510 = vpop.f32.mrf.mxu0
        %v1511 = vadd.f32 0.0, %v1510
        %v1512 = vpop.f32.mrf.mxu0
        %v1513 = vadd.f32 0.0, %v1512
        %1514 = vmatmul.bf16.gmra.mxu0 %v1453
        %v1515 = vpop.f32.mrf.mxu0
        %v1516 = vadd.f32 0.0, %v1515
        %v1517 = vpop.f32.mrf.mxu0
        %v1518 = vadd.f32 0.0, %v1517
        %1519 = vmatmul.bf16.gmra.mxu0 %v1456
        %v1520 = vpop.f32.mrf.mxu0
        %v1521 = vadd.f32 0.0, %v1520
        %v1522 = vpop.f32.mrf.mxu0
        %v1523 = vadd.f32 0.0, %v1522
        %1524 = vmatmul.bf16.gmra.mxu0 %v1459
        %v1525 = vpop.f32.mrf.mxu0
        %v1526 = vadd.f32 0.0, %v1525
        %v1527 = vpop.f32.mrf.mxu0
        %v1528 = vadd.f32 0.0, %v1527
        %1529 = vmatmul.bf16.gmra.mxu0 %v1462
        %v1530 = vpop.f32.mrf.mxu0
        %v1531 = vadd.f32 0.0, %v1530
        %v1532 = vpop.f32.mrf.mxu0
        %v1533 = vadd.f32 0.0, %v1532
        %1534 = vmatmul.bf16.gmra.mxu0 %v1465
        %v1535 = vpop.f32.mrf.mxu0
        %v1536 = vadd.f32 0.0, %v1535
        %v1537 = vpop.f32.mrf.mxu0
        %v1538 = vadd.f32 0.0, %v1537
        %1539 = vmatmul.bf16.gmra.mxu0 %v1468
        %v1540 = vpop.f32.mrf.mxu0
        %v1541 = vadd.f32 0.0, %v1540
        %v1542 = vpop.f32.mrf.mxu0
        %v1543 = vadd.f32 0.0, %v1542
        %1544 = vmatmul.bf16.gmra.mxu0 %v1471
        %v1545 = vpop.f32.mrf.mxu0
        %v1546 = vadd.f32 0.0, %v1545
        %v1547 = vpop.f32.mrf.mxu0
        %v1548 = vadd.f32 0.0, %v1547
        %1549 = vmatmul.bf16.gmra.mxu0 %v1474
        %v1550 = vpop.f32.mrf.mxu0
        %v1551 = vadd.f32 0.0, %v1550
        %v1552 = vpop.f32.mrf.mxu0
        %v1553 = vadd.f32 0.0, %v1552
        %1554 = vmatmul.bf16.gmra.mxu0 %v1477
        %v1555 = vpop.f32.mrf.mxu0
        %v1556 = vadd.f32 0.0, %v1555
        %v1557 = vpop.f32.mrf.mxu0
        %v1558 = vadd.f32 0.0, %v1557
        %1559 = vmatmul.bf16.gmra.mxu0 %v1480
        %v1560 = vpop.f32.mrf.mxu0
        %v1561 = vadd.f32 0.0, %v1560
        %v1562 = vpop.f32.mrf.mxu0
        %v1563 = vadd.f32 0.0, %v1562
        %1564 = vmatmul.bf16.gmra.mxu0 %v1483
        %v1565 = vpop.f32.mrf.mxu0
        %v1566 = vadd.f32 0.0, %v1565
        %v1567 = vpop.f32.mrf.mxu0
        %v1568 = vadd.f32 0.0, %v1567
        %1569 = vmatmul.bf16.gmra.mxu0 %v1486
        %v1570 = vpop.f32.mrf.mxu0
        %v1571 = vadd.f32 0.0, %v1570
        %v1572 = vpop.f32.mrf.mxu0
        %v1573 = vadd.f32 0.0, %v1572
        %1574 = vmatmul.bf16.gmra.mxu0 %v1489
        %v1575 = vpop.f32.mrf.mxu0
        %v1576 = vadd.f32 0.0, %v1575
        %v1577 = vpop.f32.mrf.mxu0
        %v1578 = vadd.f32 0.0, %v1577
        %1579 = vmatmul.bf16.gmra.mxu0 %v1492
        %v1580 = vpop.f32.mrf.mxu0
        %v1581 = vadd.f32 0.0, %v1580
        %v1582 = vpop.f32.mrf.mxu0
        %v1583 = vadd.f32 0.0, %v1582
        %1584 = vmatmul.bf16.gmra.mxu0 %v1495
        %v1585 = vpop.f32.mrf.mxu0
        %v1586 = vadd.f32 0.0, %v1585
        %v1587 = vpop.f32.mrf.mxu0
        %v1588 = vadd.f32 0.0, %v1587
        %1589 = vdwg.mxu0
        %1590 = vmatpush.bf16.msra.mxu0 0
        %1591 = vmatpush.bf16.msra.mxu0 0
        %1592 = vmatpush.bf16.msra.mxu0 0
        %1593 = vmatpush.bf16.msra.mxu0 0
        %1594 = vmatpush.bf16.msra.mxu0 0
        %1595 = vmatpush.bf16.msra.mxu0 0
        %1596 = vmatpush.bf16.msra.mxu0 0
        %1597 = vmatpush.bf16.msra.mxu0 %v1499
        %1598 = vmatmul.bf16.gmra.mxu0 %v1450
        %v1599 = vpop.f32.mrf.mxu0
        %v1600 = vadd.f32 0.0, %v1599
        %v1601 = vpop.f32.mrf.mxu0
        %v1602 = vadd.f32 0.0, %v1601
        %1603 = vmatmul.bf16.gmra.mxu0 %v1453
        %v1604 = vpop.f32.mrf.mxu0
        %v1605 = vadd.f32 0.0, %v1604
        %v1606 = vpop.f32.mrf.mxu0
        %v1607 = vadd.f32 0.0, %v1606
        %1608 = vmatmul.bf16.gmra.mxu0 %v1456
        %v1609 = vpop.f32.mrf.mxu0
        %v1610 = vadd.f32 0.0, %v1609
        %v1611 = vpop.f32.mrf.mxu0
        %v1612 = vadd.f32 0.0, %v1611
        %1613 = vmatmul.bf16.gmra.mxu0 %v1459
        %v1614 = vpop.f32.mrf.mxu0
        %v1615 = vadd.f32 0.0, %v1614
        %v1616 = vpop.f32.mrf.mxu0
        %v1617 = vadd.f32 0.0, %v1616
        %1618 = vmatmul.bf16.gmra.mxu0 %v1462
        %v1619 = vpop.f32.mrf.mxu0
        %v1620 = vadd.f32 0.0, %v1619
        %v1621 = vpop.f32.mrf.mxu0
        %v1622 = vadd.f32 0.0, %v1621
        %1623 = vmatmul.bf16.gmra.mxu0 %v1465
        %v1624 = vpop.f32.mrf.mxu0
        %v1625 = vadd.f32 0.0, %v1624
        %v1626 = vpop.f32.mrf.mxu0
        %v1627 = vadd.f32 0.0, %v1626
        %1628 = vmatmul.bf16.gmra.mxu0 %v1468
        %v1629 = vpop.f32.mrf.mxu0
        %v1630 = vadd.f32 0.0, %v1629
        %v1631 = vpop.f32.mrf.mxu0
        %v1632 = vadd.f32 0.0, %v1631
        %1633 = vmatmul.bf16.gmra.mxu0 %v1471
        %v1634 = vpop.f32.mrf.mxu0
        %v1635 = vadd.f32 0.0, %v1634
        %v1636 = vpop.f32.mrf.mxu0
        %v1637 = vadd.f32 0.0, %v1636
        %1638 = vmatmul.bf16.gmra.mxu0 %v1474
        %v1639 = vpop.f32.mrf.mxu0
        %v1640 = vadd.f32 0.0, %v1639
        %v1641 = vpop.f32.mrf.mxu0
        %v1642 = vadd.f32 0.0, %v1641
        %1643 = vmatmul.bf16.gmra.mxu0 %v1477
        %v1644 = vpop.f32.mrf.mxu0
        %v1645 = vadd.f32 0.0, %v1644
        %v1646 = vpop.f32.mrf.mxu0
        %v1647 = vadd.f32 0.0, %v1646
        %1648 = vmatmul.bf16.gmra.mxu0 %v1480
        %v1649 = vpop.f32.mrf.mxu0
        %v1650 = vadd.f32 0.0, %v1649
        %v1651 = vpop.f32.mrf.mxu0
        %v1652 = vadd.f32 0.0, %v1651
        %1653 = vmatmul.bf16.gmra.mxu0 %v1483
        %v1654 = vpop.f32.mrf.mxu0
        %v1655 = vadd.f32 0.0, %v1654
        %v1656 = vpop.f32.mrf.mxu0
        %v1657 = vadd.f32 0.0, %v1656
        %1658 = vmatmul.bf16.gmra.mxu0 %v1486
        %v1659 = vpop.f32.mrf.mxu0
        %v1660 = vadd.f32 0.0, %v1659
        %v1661 = vpop.f32.mrf.mxu0
        %v1662 = vadd.f32 0.0, %v1661
        %1663 = vmatmul.bf16.gmra.mxu0 %v1489
        %v1664 = vpop.f32.mrf.mxu0
        %v1665 = vadd.f32 0.0, %v1664
        %v1666 = vpop.f32.mrf.mxu0
        %v1667 = vadd.f32 0.0, %v1666
        %1668 = vmatmul.bf16.gmra.mxu0 %v1492
        %v1669 = vpop.f32.mrf.mxu0
        %v1670 = vadd.f32 0.0, %v1669
        %v1671 = vpop.f32.mrf.mxu0
        %v1672 = vadd.f32 0.0, %v1671
        %1673 = vmatmul.bf16.gmra.mxu0 %v1495
        %v1674 = vpop.f32.mrf.mxu0
        %v1675 = vadd.f32 0.0, %v1674
        %v1676 = vpop.f32.mrf.mxu0
        %v1677 = vadd.f32 0.0, %v1676
        %1678 = vdwg.mxu0
        %v1679 = vadd.f32 %v1196, %v1511
        %v1680 = vadd.f32 %v1285, %v1600
        %v1681 = vadd.f32 %v1198, %v1513
        %v1682 = vadd.f32 %v1287, %v1602
        %v1683 = vadd.f32 %v1201, %v1516
        %v1684 = vadd.f32 %v1290, %v1605
        %v1685 = vadd.f32 %v1203, %v1518
        %v1686 = vadd.f32 %v1292, %v1607
        %v1687 = vadd.f32 %v1206, %v1521
        %v1688 = vadd.f32 %v1295, %v1610
        %v1689 = vadd.f32 %v1208, %v1523
        %v1690 = vadd.f32 %v1297, %v1612
        %v1691 = vadd.f32 %v1211, %v1526
        %v1692 = vadd.f32 %v1300, %v1615
        %v1693 = vadd.f32 %v1213, %v1528
        %v1694 = vadd.f32 %v1302, %v1617
        %v1695 = vadd.f32 %v1216, %v1531
        %v1696 = vadd.f32 %v1305, %v1620
        %v1697 = vadd.f32 %v1218, %v1533
        %v1698 = vadd.f32 %v1307, %v1622
        %v1699 = vadd.f32 %v1221, %v1536
        %v1700 = vadd.f32 %v1310, %v1625
        %v1701 = vadd.f32 %v1223, %v1538
        %v1702 = vadd.f32 %v1312, %v1627
        %v1703 = vadd.f32 %v1226, %v1541
        %v1704 = vadd.f32 %v1315, %v1630
        %v1705 = vadd.f32 %v1228, %v1543
        %v1706 = vadd.f32 %v1317, %v1632
        %v1707 = vadd.f32 %v1231, %v1546
        %v1708 = vadd.f32 %v1320, %v1635
        %v1709 = vadd.f32 %v1233, %v1548
        %v1710 = vadd.f32 %v1322, %v1637
        %v1711 = vadd.f32 %v1236, %v1551
        %v1712 = vadd.f32 %v1325, %v1640
        %v1713 = vadd.f32 %v1238, %v1553
        %v1714 = vadd.f32 %v1327, %v1642
        %v1715 = vadd.f32 %v1241, %v1556
        %v1716 = vadd.f32 %v1330, %v1645
        %v1717 = vadd.f32 %v1243, %v1558
        %v1718 = vadd.f32 %v1332, %v1647
        %v1719 = vadd.f32 %v1246, %v1561
        %v1720 = vadd.f32 %v1335, %v1650
        %v1721 = vadd.f32 %v1248, %v1563
        %v1722 = vadd.f32 %v1337, %v1652
        %v1723 = vadd.f32 %v1251, %v1566
        %v1724 = vadd.f32 %v1340, %v1655
        %v1725 = vadd.f32 %v1253, %v1568
        %v1726 = vadd.f32 %v1342, %v1657
        %v1727 = vadd.f32 %v1256, %v1571
        %v1728 = vadd.f32 %v1345, %v1660
        %v1729 = vadd.f32 %v1258, %v1573
        %v1730 = vadd.f32 %v1347, %v1662
        %v1731 = vadd.f32 %v1261, %v1576
        %v1732 = vadd.f32 %v1350, %v1665
        %v1733 = vadd.f32 %v1263, %v1578
        %v1734 = vadd.f32 %v1352, %v1667
        %v1735 = vadd.f32 %v1266, %v1581
        %v1736 = vadd.f32 %v1355, %v1670
        %v1737 = vadd.f32 %v1268, %v1583
        %v1738 = vadd.f32 %v1357, %v1672
        %v1739 = vadd.f32 %v1271, %v1586
        %v1740 = vadd.f32 %v1360, %v1675
        %v1741 = vadd.f32 %v1273, %v1588
        %v1742 = vadd.f32 %v1362, %v1677
        %v1743 = vld [vmem:[%s8] sm:$0x3]
        %v1745 = vperm.slane %v1743, 0
        %v1746 = vperm.slane %v1743, 1
        %v1749 = vadd.f32 %v1679, %v1745
        %v1750 = vadd.f32 %v1680, %v1746
        %v1751 = vadd.f32 %v1681, %v1745
        %v1752 = vadd.f32 %v1682, %v1746
        %v1753 = vadd.f32 %v1683, %v1745
        %v1754 = vadd.f32 %v1684, %v1746
        %v1755 = vadd.f32 %v1685, %v1745
        %v1756 = vadd.f32 %v1686, %v1746
        %v1757 = vadd.f32 %v1687, %v1745
        %v1758 = vadd.f32 %v1688, %v1746
        %v1759 = vadd.f32 %v1689, %v1745
        %v1760 = vadd.f32 %v1690, %v1746
        %v1761 = vadd.f32 %v1691, %v1745
        %v1762 = vadd.f32 %v1692, %v1746
        %v1763 = vadd.f32 %v1693, %v1745
        %v1764 = vadd.f32 %v1694, %v1746
        %v1765 = vadd.f32 %v1695, %v1745
        %v1766 = vadd.f32 %v1696, %v1746
        %v1767 = vadd.f32 %v1697, %v1745
        %v1768 = vadd.f32 %v1698, %v1746
        %v1769 = vadd.f32 %v1699, %v1745
        %v1770 = vadd.f32 %v1700, %v1746
        %v1771 = vadd.f32 %v1701, %v1745
        %v1772 = vadd.f32 %v1702, %v1746
        %v1773 = vadd.f32 %v1703, %v1745
        %v1774 = vadd.f32 %v1704, %v1746
        %v1775 = vadd.f32 %v1705, %v1745
        %v1776 = vadd.f32 %v1706, %v1746
        %v1777 = vadd.f32 %v1707, %v1745
        %v1778 = vadd.f32 %v1708, %v1746
        %v1779 = vadd.f32 %v1709, %v1745
        %v1780 = vadd.f32 %v1710, %v1746
        %v1781 = vadd.f32 %v1711, %v1745
        %v1782 = vadd.f32 %v1712, %v1746
        %v1783 = vadd.f32 %v1713, %v1745
        %v1784 = vadd.f32 %v1714, %v1746
        %v1785 = vadd.f32 %v1715, %v1745
        %v1786 = vadd.f32 %v1716, %v1746
        %v1787 = vadd.f32 %v1717, %v1745
        %v1788 = vadd.f32 %v1718, %v1746
        %v1789 = vadd.f32 %v1719, %v1745
        %v1790 = vadd.f32 %v1720, %v1746
        %v1791 = vadd.f32 %v1721, %v1745
        %v1792 = vadd.f32 %v1722, %v1746
        %v1793 = vadd.f32 %v1723, %v1745
        %v1794 = vadd.f32 %v1724, %v1746
        %v1795 = vadd.f32 %v1725, %v1745
        %v1796 = vadd.f32 %v1726, %v1746
        %v1797 = vadd.f32 %v1727, %v1745
        %v1798 = vadd.f32 %v1728, %v1746
        %v1799 = vadd.f32 %v1729, %v1745
        %v1800 = vadd.f32 %v1730, %v1746
        %v1801 = vadd.f32 %v1731, %v1745
        %v1802 = vadd.f32 %v1732, %v1746
        %v1803 = vadd.f32 %v1733, %v1745
        %v1804 = vadd.f32 %v1734, %v1746
        %v1805 = vadd.f32 %v1735, %v1745
        %v1806 = vadd.f32 %v1736, %v1746
        %v1807 = vadd.f32 %v1737, %v1745
        %v1808 = vadd.f32 %v1738, %v1746
        %v1809 = vadd.f32 %v1739, %v1745
        %v1810 = vadd.f32 %v1740, %v1746
        %v1811 = vadd.f32 %v1741, %v1745
        %v1812 = vadd.f32 %v1742, %v1746
        %v1813 = vmax.f32 %v1749, 0.0
        %v1814 = vmax.f32 %v1750, 0.0
        %v1815 = vmax.f32 %v1751, 0.0
        %v1816 = vmax.f32 %v1752, 0.0
        %v1817 = vmax.f32 %v1753, 0.0
        %v1818 = vmax.f32 %v1754, 0.0
        %v1819 = vmax.f32 %v1755, 0.0
        %v1820 = vmax.f32 %v1756, 0.0
        %v1821 = vmax.f32 %v1757, 0.0
        %v1822 = vmax.f32 %v1758, 0.0
        %v1823 = vmax.f32 %v1759, 0.0
        %v1824 = vmax.f32 %v1760, 0.0
        %v1825 = vmax.f32 %v1761, 0.0
        %v1826 = vmax.f32 %v1762, 0.0
        %v1827 = vmax.f32 %v1763, 0.0
        %v1828 = vmax.f32 %v1764, 0.0
        %v1829 = vmax.f32 %v1765, 0.0
        %v1830 = vmax.f32 %v1766, 0.0
        %v1831 = vmax.f32 %v1767, 0.0
        %v1832 = vmax.f32 %v1768, 0.0
        %v1833 = vmax.f32 %v1769, 0.0
        %v1834 = vmax.f32 %v1770, 0.0
        %v1835 = vmax.f32 %v1771, 0.0
        %v1836 = vmax.f32 %v1772, 0.0
        %v1837 = vmax.f32 %v1773, 0.0
        %v1838 = vmax.f32 %v1774, 0.0
        %v1839 = vmax.f32 %v1775, 0.0
        %v1840 = vmax.f32 %v1776, 0.0
        %v1841 = vmax.f32 %v1777, 0.0
        %v1842 = vmax.f32 %v1778, 0.0
        %v1843 = vmax.f32 %v1779, 0.0
        %v1844 = vmax.f32 %v1780, 0.0
        %v1845 = vmax.f32 %v1781, 0.0
        %v1846 = vmax.f32 %v1782, 0.0
        %v1847 = vmax.f32 %v1783, 0.0
        %v1848 = vmax.f32 %v1784, 0.0
        %v1849 = vmax.f32 %v1785, 0.0
        %v1850 = vmax.f32 %v1786, 0.0
        %v1851 = vmax.f32 %v1787, 0.0
        %v1852 = vmax.f32 %v1788, 0.0
        %v1853 = vmax.f32 %v1789, 0.0
        %v1854 = vmax.f32 %v1790, 0.0
        %v1855 = vmax.f32 %v1791, 0.0
        %v1856 = vmax.f32 %v1792, 0.0
        %v1857 = vmax.f32 %v1793, 0.0
        %v1858 = vmax.f32 %v1794, 0.0
        %v1859 = vmax.f32 %v1795, 0.0
        %v1860 = vmax.f32 %v1796, 0.0
        %v1861 = vmax.f32 %v1797, 0.0
        %v1862 = vmax.f32 %v1798, 0.0
        %v1863 = vmax.f32 %v1799, 0.0
        %v1864 = vmax.f32 %v1800, 0.0
        %v1865 = vmax.f32 %v1801, 0.0
        %v1866 = vmax.f32 %v1802, 0.0
        %v1867 = vmax.f32 %v1803, 0.0
        %v1868 = vmax.f32 %v1804, 0.0
        %v1869 = vmax.f32 %v1805, 0.0
        %v1870 = vmax.f32 %v1806, 0.0
        %v1871 = vmax.f32 %v1807, 0.0
        %v1872 = vmax.f32 %v1808, 0.0
        %v1873 = vmax.f32 %v1809, 0.0
        %v1874 = vmax.f32 %v1810, 0.0
        %v1875 = vmax.f32 %v1811, 0.0
        %v1876 = vmax.f32 %v1812, 0.0
        %v1877 = vpack.c.bf16 %v1815, %v1813
        %v1878 = vpack.c.bf16 %v1816, %v1814
        %v1879 = vpack.c.bf16 %v1819, %v1817
        %v1880 = vpack.c.bf16 %v1820, %v1818
        %v1881 = vpack.c.bf16 %v1823, %v1821
        %v1882 = vpack.c.bf16 %v1824, %v1822
        %v1883 = vpack.c.bf16 %v1827, %v1825
        %v1884 = vpack.c.bf16 %v1828, %v1826
        %v1885 = vpack.c.bf16 %v1831, %v1829
        %v1886 = vpack.c.bf16 %v1832, %v1830
        %v1887 = vpack.c.bf16 %v1835, %v1833
        %v1888 = vpack.c.bf16 %v1836, %v1834
        %v1889 = vpack.c.bf16 %v1839, %v1837
        %v1890 = vpack.c.bf16 %v1840, %v1838
        %v1891 = vpack.c.bf16 %v1843, %v1841
        %v1892 = vpack.c.bf16 %v1844, %v1842
        %v1893 = vpack.c.bf16 %v1847, %v1845
        %v1894 = vpack.c.bf16 %v1848, %v1846
        %v1895 = vpack.c.bf16 %v1851, %v1849
        %v1896 = vpack.c.bf16 %v1852, %v1850
        %v1897 = vpack.c.bf16 %v1855, %v1853
        %v1898 = vpack.c.bf16 %v1856, %v1854
        %v1899 = vpack.c.bf16 %v1859, %v1857
        %v1900 = vpack.c.bf16 %v1860, %v1858
        %v1901 = vpack.c.bf16 %v1863, %v1861
        %v1902 = vpack.c.bf16 %v1864, %v1862
        %v1903 = vpack.c.bf16 %v1867, %v1865
        %v1904 = vpack.c.bf16 %v1868, %v1866
        %v1905 = vpack.c.bf16 %v1871, %v1869
        %v1906 = vpack.c.bf16 %v1872, %v1870
        %v1907 = vpack.c.bf16 %v1875, %v1873
        %v1908 = vpack.c.bf16 %v1876, %v1874
        %v1909 = vld [vmem:[%s9] sm:$0xf]
        %v1910 = vld [vmem:[%s9 + $0x4] sm:$0xf]
        %v1911 = vld [vmem:[%s9 + $0x8] sm:$0xf]
        %v1912 = vld [vmem:[%s9 + $0xc] sm:$0xf]
        %v1913 = vld [vmem:[%s9 + $0x10] sm:$0xf]
        %v1914 = vld [vmem:[%s9 + $0x14] sm:$0xf]
        %v1915 = vld [vmem:[%s9 + $0x18] sm:$0xf]
        %v1916 = vld [vmem:[%s9 + $0x1c] sm:$0xf]
        %v1917 = vld [vmem:[%s9 + $0x20] sm:$0xf]
        %v1918 = vld [vmem:[%s9 + $0x24] sm:$0xf]
        %v1919 = vld [vmem:[%s9 + $0x28] sm:$0xf]
        %v1920 = vld [vmem:[%s9 + $0x2c] sm:$0xf]
        %v1921 = vld [vmem:[%s9 + $0x30] sm:$0xf]
        %v1922 = vld [vmem:[%s9 + $0x34] sm:$0xf]
        %v1923 = vld [vmem:[%s9 + $0x38] sm:$0xf]
        %v1924 = vld [vmem:[%s9 + $0x3c] sm:$0xf]
        %v1925 = vld [vmem:[%s9 + $0x40] sm:$0xf]
        %v1926 = vld [vmem:[%s9 + $0x44] sm:$0xf]
        %v1927 = vld [vmem:[%s9 + $0x48] sm:$0xf]
        %v1928 = vld [vmem:[%s9 + $0x4c] sm:$0xf]
        %v1929 = vld [vmem:[%s9 + $0x50] sm:$0xf]
        %v1930 = vld [vmem:[%s9 + $0x54] sm:$0xf]
        %v1931 = vld [vmem:[%s9 + $0x58] sm:$0xf]
        %v1932 = vld [vmem:[%s9 + $0x5c] sm:$0xf]
        %v1933 = vld [vmem:[%s9 + $0x60] sm:$0xf]
        %v1934 = vld [vmem:[%s9 + $0x64] sm:$0xf]
        %v1935 = vld [vmem:[%s9 + $0x68] sm:$0xf]
        %v1936 = vld [vmem:[%s9 + $0x6c] sm:$0xf]
        %v1937 = vld [vmem:[%s9 + $0x70] sm:$0xf]
        %v1938 = vld [vmem:[%s9 + $0x74] sm:$0xf]
        %v1939 = vld [vmem:[%s9 + $0x78] sm:$0xf]
        %v1940 = vld [vmem:[%s9 + $0x7c] sm:$0xf]
        %v1941 = vld [vmem:[%s5 + $0x4] sm:$0xf]
        %v1942 = vld [vmem:[%s6 + $0x8] sm:$0xff]
        %v1944 = vunpack.c.l.b16 %v1942
        %v1945 = vunpack.c.h.b16 %v1942
        %v1946 = vpack.c.b16 %v1944, %v1944
        %v1947 = vpack.c.b16 %v1945, %v1945
        %v1949 = vsel %vm943, %v1946, 0
        %v1952 = vsel %vm943, %v1947, 0
        %1954 = vmatpush.bf16.msra.mxu0 0
        %1955 = vmatpush.bf16.msra.mxu0 0
        %1956 = vmatpush.bf16.msra.mxu0 0
        %1957 = vmatpush.bf16.msra.mxu0 0
        %1958 = vmatpush.bf16.msra.mxu0 0
        %1959 = vmatpush.bf16.msra.mxu0 0
        %1960 = vmatpush.bf16.msra.mxu0 0
        %1961 = vmatpush.bf16.msra.mxu0 %v1949
        %1962 = vmatmul.bf16.gmra.mxu0 %v896
        %v1963 = vpop.f32.mrf.mxu0
        %v1964 = vadd.f32 0.0, %v1963
        %v1965 = vpop.f32.mrf.mxu0
        %v1966 = vadd.f32 0.0, %v1965
        %1967 = vmatmul.bf16.gmra.mxu0 %v899
        %v1968 = vpop.f32.mrf.mxu0
        %v1969 = vadd.f32 0.0, %v1968
        %v1970 = vpop.f32.mrf.mxu0
        %v1971 = vadd.f32 0.0, %v1970
        %1972 = vmatmul.bf16.gmra.mxu0 %v902
        %v1973 = vpop.f32.mrf.mxu0
        %v1974 = vadd.f32 0.0, %v1973
        %v1975 = vpop.f32.mrf.mxu0
        %v1976 = vadd.f32 0.0, %v1975
        %1977 = vmatmul.bf16.gmra.mxu0 %v905
        %v1978 = vpop.f32.mrf.mxu0
        %v1979 = vadd.f32 0.0, %v1978
        %v1980 = vpop.f32.mrf.mxu0
        %v1981 = vadd.f32 0.0, %v1980
        %1982 = vmatmul.bf16.gmra.mxu0 %v908
        %v1983 = vpop.f32.mrf.mxu0
        %v1984 = vadd.f32 0.0, %v1983
        %v1985 = vpop.f32.mrf.mxu0
        %v1986 = vadd.f32 0.0, %v1985
        %1987 = vmatmul.bf16.gmra.mxu0 %v911
        %v1988 = vpop.f32.mrf.mxu0
        %v1989 = vadd.f32 0.0, %v1988
        %v1990 = vpop.f32.mrf.mxu0
        %v1991 = vadd.f32 0.0, %v1990
        %1992 = vmatmul.bf16.gmra.mxu0 %v914
        %v1993 = vpop.f32.mrf.mxu0
        %v1994 = vadd.f32 0.0, %v1993
        %v1995 = vpop.f32.mrf.mxu0
        %v1996 = vadd.f32 0.0, %v1995
        %1997 = vmatmul.bf16.gmra.mxu0 %v917
        %v1998 = vpop.f32.mrf.mxu0
        %v1999 = vadd.f32 0.0, %v1998
        %v2000 = vpop.f32.mrf.mxu0
        %v2001 = vadd.f32 0.0, %v2000
        %2002 = vmatmul.bf16.gmra.mxu0 %v920
        %v2003 = vpop.f32.mrf.mxu0
        %v2004 = vadd.f32 0.0, %v2003
        %v2005 = vpop.f32.mrf.mxu0
        %v2006 = vadd.f32 0.0, %v2005
        %2007 = vmatmul.bf16.gmra.mxu0 %v923
        %v2008 = vpop.f32.mrf.mxu0
        %v2009 = vadd.f32 0.0, %v2008
        %v2010 = vpop.f32.mrf.mxu0
        %v2011 = vadd.f32 0.0, %v2010
        %2012 = vmatmul.bf16.gmra.mxu0 %v926
        %v2013 = vpop.f32.mrf.mxu0
        %v2014 = vadd.f32 0.0, %v2013
        %v2015 = vpop.f32.mrf.mxu0
        %v2016 = vadd.f32 0.0, %v2015
        %2017 = vmatmul.bf16.gmra.mxu0 %v929
        %v2018 = vpop.f32.mrf.mxu0
        %v2019 = vadd.f32 0.0, %v2018
        %v2020 = vpop.f32.mrf.mxu0
        %v2021 = vadd.f32 0.0, %v2020
        %2022 = vmatmul.bf16.gmra.mxu0 %v932
        %v2023 = vpop.f32.mrf.mxu0
        %v2024 = vadd.f32 0.0, %v2023
        %v2025 = vpop.f32.mrf.mxu0
        %v2026 = vadd.f32 0.0, %v2025
        %2027 = vmatmul.bf16.gmra.mxu0 %v935
        %v2028 = vpop.f32.mrf.mxu0
        %v2029 = vadd.f32 0.0, %v2028
        %v2030 = vpop.f32.mrf.mxu0
        %v2031 = vadd.f32 0.0, %v2030
        %2032 = vmatmul.bf16.gmra.mxu0 %v938
        %v2033 = vpop.f32.mrf.mxu0
        %v2034 = vadd.f32 0.0, %v2033
        %v2035 = vpop.f32.mrf.mxu0
        %v2036 = vadd.f32 0.0, %v2035
        %2037 = vmatmul.bf16.gmra.mxu0 %v941
        %v2038 = vpop.f32.mrf.mxu0
        %v2039 = vadd.f32 0.0, %v2038
        %v2040 = vpop.f32.mrf.mxu0
        %v2041 = vadd.f32 0.0, %v2040
        %2042 = vdwg.mxu0
        %2043 = vmatpush.bf16.msra.mxu0 0
        %2044 = vmatpush.bf16.msra.mxu0 0
        %2045 = vmatpush.bf16.msra.mxu0 0
        %2046 = vmatpush.bf16.msra.mxu0 0
        %2047 = vmatpush.bf16.msra.mxu0 0
        %2048 = vmatpush.bf16.msra.mxu0 0
        %2049 = vmatpush.bf16.msra.mxu0 0
        %2050 = vmatpush.bf16.msra.mxu0 %v1952
        %2051 = vmatmul.bf16.gmra.mxu0 %v896
        %v2052 = vpop.f32.mrf.mxu0
        %v2053 = vadd.f32 0.0, %v2052
        %v2054 = vpop.f32.mrf.mxu0
        %v2055 = vadd.f32 0.0, %v2054
        %2056 = vmatmul.bf16.gmra.mxu0 %v899
        %v2057 = vpop.f32.mrf.mxu0
        %v2058 = vadd.f32 0.0, %v2057
        %v2059 = vpop.f32.mrf.mxu0
        %v2060 = vadd.f32 0.0, %v2059
        %2061 = vmatmul.bf16.gmra.mxu0 %v902
        %v2062 = vpop.f32.mrf.mxu0
        %v2063 = vadd.f32 0.0, %v2062
        %v2064 = vpop.f32.mrf.mxu0
        %v2065 = vadd.f32 0.0, %v2064
        %2066 = vmatmul.bf16.gmra.mxu0 %v905
        %v2067 = vpop.f32.mrf.mxu0
        %v2068 = vadd.f32 0.0, %v2067
        %v2069 = vpop.f32.mrf.mxu0
        %v2070 = vadd.f32 0.0, %v2069
        %2071 = vmatmul.bf16.gmra.mxu0 %v908
        %v2072 = vpop.f32.mrf.mxu0
        %v2073 = vadd.f32 0.0, %v2072
        %v2074 = vpop.f32.mrf.mxu0
        %v2075 = vadd.f32 0.0, %v2074
        %2076 = vmatmul.bf16.gmra.mxu0 %v911
        %v2077 = vpop.f32.mrf.mxu0
        %v2078 = vadd.f32 0.0, %v2077
        %v2079 = vpop.f32.mrf.mxu0
        %v2080 = vadd.f32 0.0, %v2079
        %2081 = vmatmul.bf16.gmra.mxu0 %v914
        %v2082 = vpop.f32.mrf.mxu0
        %v2083 = vadd.f32 0.0, %v2082
        %v2084 = vpop.f32.mrf.mxu0
        %v2085 = vadd.f32 0.0, %v2084
        %2086 = vmatmul.bf16.gmra.mxu0 %v917
        %v2087 = vpop.f32.mrf.mxu0
        %v2088 = vadd.f32 0.0, %v2087
        %v2089 = vpop.f32.mrf.mxu0
        %v2090 = vadd.f32 0.0, %v2089
        %2091 = vmatmul.bf16.gmra.mxu0 %v920
        %v2092 = vpop.f32.mrf.mxu0
        %v2093 = vadd.f32 0.0, %v2092
        %v2094 = vpop.f32.mrf.mxu0
        %v2095 = vadd.f32 0.0, %v2094
        %2096 = vmatmul.bf16.gmra.mxu0 %v923
        %v2097 = vpop.f32.mrf.mxu0
        %v2098 = vadd.f32 0.0, %v2097
        %v2099 = vpop.f32.mrf.mxu0
        %v2100 = vadd.f32 0.0, %v2099
        %2101 = vmatmul.bf16.gmra.mxu0 %v926
        %v2102 = vpop.f32.mrf.mxu0
        %v2103 = vadd.f32 0.0, %v2102
        %v2104 = vpop.f32.mrf.mxu0
        %v2105 = vadd.f32 0.0, %v2104
        %2106 = vmatmul.bf16.gmra.mxu0 %v929
        %v2107 = vpop.f32.mrf.mxu0
        %v2108 = vadd.f32 0.0, %v2107
        %v2109 = vpop.f32.mrf.mxu0
        %v2110 = vadd.f32 0.0, %v2109
        %2111 = vmatmul.bf16.gmra.mxu0 %v932
        %v2112 = vpop.f32.mrf.mxu0
        %v2113 = vadd.f32 0.0, %v2112
        %v2114 = vpop.f32.mrf.mxu0
        %v2115 = vadd.f32 0.0, %v2114
        %2116 = vmatmul.bf16.gmra.mxu0 %v935
        %v2117 = vpop.f32.mrf.mxu0
        %v2118 = vadd.f32 0.0, %v2117
        %v2119 = vpop.f32.mrf.mxu0
        %v2120 = vadd.f32 0.0, %v2119
        %2121 = vmatmul.bf16.gmra.mxu0 %v938
        %v2122 = vpop.f32.mrf.mxu0
        %v2123 = vadd.f32 0.0, %v2122
        %v2124 = vpop.f32.mrf.mxu0
        %v2125 = vadd.f32 0.0, %v2124
        %2126 = vmatmul.bf16.gmra.mxu0 %v941
        %v2127 = vpop.f32.mrf.mxu0
        %v2128 = vadd.f32 0.0, %v2127
        %v2129 = vpop.f32.mrf.mxu0
        %v2130 = vadd.f32 0.0, %v2129
        %2131 = vdwg.mxu0
        %2133 = vst [vmem:[#allocation1] ss:$4 sm:$0xff] %v1941
        %v2134 = vld.sshfl [vmem:[#allocation1] sm:$0xff pattern:$0x73625140]
        %v2135 = vld.sshfl [vmem:[#allocation1 + $0x8] sm:$0xff pattern:$0x73625140]
        %v2136 = vsel %vm1181, %v2134, 0
        %v2138 = vsel %vm1181, %v2135, 0
        %2140 = vmatpush.bf16.msra.mxu0 0
        %2141 = vmatpush.bf16.msra.mxu0 0
        %2142 = vmatpush.bf16.msra.mxu0 0
        %2143 = vmatpush.bf16.msra.mxu0 0
        %2144 = vmatpush.bf16.msra.mxu0 0
        %2145 = vmatpush.bf16.msra.mxu0 0
        %2146 = vmatpush.bf16.msra.mxu0 0
        %2147 = vmatpush.bf16.msra.mxu0 %v2136
        %2148 = vmatmul.bf16.gmra.mxu0 %v1134
        %v2149 = vpop.f32.mrf.mxu0
        %v2150 = vadd.f32 %v1964, %v2149
        %v2151 = vpop.f32.mrf.mxu0
        %v2152 = vadd.f32 %v1966, %v2151
        %2153 = vmatmul.bf16.gmra.mxu0 %v1137
        %v2154 = vpop.f32.mrf.mxu0
        %v2155 = vadd.f32 %v1969, %v2154
        %v2156 = vpop.f32.mrf.mxu0
        %v2157 = vadd.f32 %v1971, %v2156
        %2158 = vmatmul.bf16.gmra.mxu0 %v1140
        %v2159 = vpop.f32.mrf.mxu0
        %v2160 = vadd.f32 %v1974, %v2159
        %v2161 = vpop.f32.mrf.mxu0
        %v2162 = vadd.f32 %v1976, %v2161
        %2163 = vmatmul.bf16.gmra.mxu0 %v1143
        %v2164 = vpop.f32.mrf.mxu0
        %v2165 = vadd.f32 %v1979, %v2164
        %v2166 = vpop.f32.mrf.mxu0
        %v2167 = vadd.f32 %v1981, %v2166
        %2168 = vmatmul.bf16.gmra.mxu0 %v1146
        %v2169 = vpop.f32.mrf.mxu0
        %v2170 = vadd.f32 %v1984, %v2169
        %v2171 = vpop.f32.mrf.mxu0
        %v2172 = vadd.f32 %v1986, %v2171
        %2173 = vmatmul.bf16.gmra.mxu0 %v1149
        %v2174 = vpop.f32.mrf.mxu0
        %v2175 = vadd.f32 %v1989, %v2174
        %v2176 = vpop.f32.mrf.mxu0
        %v2177 = vadd.f32 %v1991, %v2176
        %2178 = vmatmul.bf16.gmra.mxu0 %v1152
        %v2179 = vpop.f32.mrf.mxu0
        %v2180 = vadd.f32 %v1994, %v2179
        %v2181 = vpop.f32.mrf.mxu0
        %v2182 = vadd.f32 %v1996, %v2181
        %2183 = vmatmul.bf16.gmra.mxu0 %v1155
        %v2184 = vpop.f32.mrf.mxu0
        %v2185 = vadd.f32 %v1999, %v2184
        %v2186 = vpop.f32.mrf.mxu0
        %v2187 = vadd.f32 %v2001, %v2186
        %2188 = vmatmul.bf16.gmra.mxu0 %v1158
        %v2189 = vpop.f32.mrf.mxu0
        %v2190 = vadd.f32 %v2004, %v2189
        %v2191 = vpop.f32.mrf.mxu0
        %v2192 = vadd.f32 %v2006, %v2191
        %2193 = vmatmul.bf16.gmra.mxu0 %v1161
        %v2194 = vpop.f32.mrf.mxu0
        %v2195 = vadd.f32 %v2009, %v2194
        %v2196 = vpop.f32.mrf.mxu0
        %v2197 = vadd.f32 %v2011, %v2196
        %2198 = vmatmul.bf16.gmra.mxu0 %v1164
        %v2199 = vpop.f32.mrf.mxu0
        %v2200 = vadd.f32 %v2014, %v2199
        %v2201 = vpop.f32.mrf.mxu0
        %v2202 = vadd.f32 %v2016, %v2201
        %2203 = vmatmul.bf16.gmra.mxu0 %v1167
        %v2204 = vpop.f32.mrf.mxu0
        %v2205 = vadd.f32 %v2019, %v2204
        %v2206 = vpop.f32.mrf.mxu0
        %v2207 = vadd.f32 %v2021, %v2206
        %2208 = vmatmul.bf16.gmra.mxu0 %v1170
        %v2209 = vpop.f32.mrf.mxu0
        %v2210 = vadd.f32 %v2024, %v2209
        %v2211 = vpop.f32.mrf.mxu0
        %v2212 = vadd.f32 %v2026, %v2211
        %2213 = vmatmul.bf16.gmra.mxu0 %v1173
        %v2214 = vpop.f32.mrf.mxu0
        %v2215 = vadd.f32 %v2029, %v2214
        %v2216 = vpop.f32.mrf.mxu0
        %v2217 = vadd.f32 %v2031, %v2216
        %2218 = vmatmul.bf16.gmra.mxu0 %v1176
        %v2219 = vpop.f32.mrf.mxu0
        %v2220 = vadd.f32 %v2034, %v2219
        %v2221 = vpop.f32.mrf.mxu0
        %v2222 = vadd.f32 %v2036, %v2221
        %2223 = vmatmul.bf16.gmra.mxu0 %v1179
        %v2224 = vpop.f32.mrf.mxu0
        %v2225 = vadd.f32 %v2039, %v2224
        %v2226 = vpop.f32.mrf.mxu0
        %v2227 = vadd.f32 %v2041, %v2226
        %2228 = vdwg.mxu0
        %2229 = vmatpush.bf16.msra.mxu0 0
        %2230 = vmatpush.bf16.msra.mxu0 0
        %2231 = vmatpush.bf16.msra.mxu0 0
        %2232 = vmatpush.bf16.msra.mxu0 0
        %2233 = vmatpush.bf16.msra.mxu0 0
        %2234 = vmatpush.bf16.msra.mxu0 0
        %2235 = vmatpush.bf16.msra.mxu0 0
        %2236 = vmatpush.bf16.msra.mxu0 %v2138
        %2237 = vmatmul.bf16.gmra.mxu0 %v1134
        %v2238 = vpop.f32.mrf.mxu0
        %v2239 = vadd.f32 %v2053, %v2238
        %v2240 = vpop.f32.mrf.mxu0
        %v2241 = vadd.f32 %v2055, %v2240
        %2242 = vmatmul.bf16.gmra.mxu0 %v1137
        %v2243 = vpop.f32.mrf.mxu0
        %v2244 = vadd.f32 %v2058, %v2243
        %v2245 = vpop.f32.mrf.mxu0
        %v2246 = vadd.f32 %v2060, %v2245
        %2247 = vmatmul.bf16.gmra.mxu0 %v1140
        %v2248 = vpop.f32.mrf.mxu0
        %v2249 = vadd.f32 %v2063, %v2248
        %v2250 = vpop.f32.mrf.mxu0
        %v2251 = vadd.f32 %v2065, %v2250
        %2252 = vmatmul.bf16.gmra.mxu0 %v1143
        %v2253 = vpop.f32.mrf.mxu0
        %v2254 = vadd.f32 %v2068, %v2253
        %v2255 = vpop.f32.mrf.mxu0
        %v2256 = vadd.f32 %v2070, %v2255
        %2257 = vmatmul.bf16.gmra.mxu0 %v1146
        %v2258 = vpop.f32.mrf.mxu0
        %v2259 = vadd.f32 %v2073, %v2258
        %v2260 = vpop.f32.mrf.mxu0
        %v2261 = vadd.f32 %v2075, %v2260
        %2262 = vmatmul.bf16.gmra.mxu0 %v1149
        %v2263 = vpop.f32.mrf.mxu0
        %v2264 = vadd.f32 %v2078, %v2263
        %v2265 = vpop.f32.mrf.mxu0
        %v2266 = vadd.f32 %v2080, %v2265
        %2267 = vmatmul.bf16.gmra.mxu0 %v1152
        %v2268 = vpop.f32.mrf.mxu0
        %v2269 = vadd.f32 %v2083, %v2268
        %v2270 = vpop.f32.mrf.mxu0
        %v2271 = vadd.f32 %v2085, %v2270
        %2272 = vmatmul.bf16.gmra.mxu0 %v1155
        %v2273 = vpop.f32.mrf.mxu0
        %v2274 = vadd.f32 %v2088, %v2273
        %v2275 = vpop.f32.mrf.mxu0
        %v2276 = vadd.f32 %v2090, %v2275
        %2277 = vmatmul.bf16.gmra.mxu0 %v1158
        %v2278 = vpop.f32.mrf.mxu0
        %v2279 = vadd.f32 %v2093, %v2278
        %v2280 = vpop.f32.mrf.mxu0
        %v2281 = vadd.f32 %v2095, %v2280
        %2282 = vmatmul.bf16.gmra.mxu0 %v1161
        %v2283 = vpop.f32.mrf.mxu0
        %v2284 = vadd.f32 %v2098, %v2283
        %v2285 = vpop.f32.mrf.mxu0
        %v2286 = vadd.f32 %v2100, %v2285
        %2287 = vmatmul.bf16.gmra.mxu0 %v1164
        %v2288 = vpop.f32.mrf.mxu0
        %v2289 = vadd.f32 %v2103, %v2288
        %v2290 = vpop.f32.mrf.mxu0
        %v2291 = vadd.f32 %v2105, %v2290
        %2292 = vmatmul.bf16.gmra.mxu0 %v1167
        %v2293 = vpop.f32.mrf.mxu0
        %v2294 = vadd.f32 %v2108, %v2293
        %v2295 = vpop.f32.mrf.mxu0
        %v2296 = vadd.f32 %v2110, %v2295
        %2297 = vmatmul.bf16.gmra.mxu0 %v1170
        %v2298 = vpop.f32.mrf.mxu0
        %v2299 = vadd.f32 %v2113, %v2298
        %v2300 = vpop.f32.mrf.mxu0
        %v2301 = vadd.f32 %v2115, %v2300
        %2302 = vmatmul.bf16.gmra.mxu0 %v1173
        %v2303 = vpop.f32.mrf.mxu0
        %v2304 = vadd.f32 %v2118, %v2303
        %v2305 = vpop.f32.mrf.mxu0
        %v2306 = vadd.f32 %v2120, %v2305
        %2307 = vmatmul.bf16.gmra.mxu0 %v1176
        %v2308 = vpop.f32.mrf.mxu0
        %v2309 = vadd.f32 %v2123, %v2308
        %v2310 = vpop.f32.mrf.mxu0
        %v2311 = vadd.f32 %v2125, %v2310
        %2312 = vmatmul.bf16.gmra.mxu0 %v1179
        %v2313 = vpop.f32.mrf.mxu0
        %v2314 = vadd.f32 %v2128, %v2313
        %v2315 = vpop.f32.mrf.mxu0
        %v2316 = vadd.f32 %v2130, %v2315
        %2317 = vdwg.mxu0
        %v2318 = vld [vmem:[%s7 + $0x4] sm:$0xf]
        %2320 = vst [vmem:[#allocation1] ss:$4 sm:$0xff] %v2318
        %v2321 = vld.sshfl [vmem:[#allocation1] sm:$0xff pattern:$0x73625140]
        %v2322 = vld.sshfl [vmem:[#allocation1 + $0x8] sm:$0xff pattern:$0x73625140]
        %v2323 = vsel %vm1181, %v2321, 0
        %v2325 = vsel %vm1181, %v2322, 0
        %2327 = vmatpush.bf16.msra.mxu0 0
        %2328 = vmatpush.bf16.msra.mxu0 0
        %2329 = vmatpush.bf16.msra.mxu0 0
        %2330 = vmatpush.bf16.msra.mxu0 0
        %2331 = vmatpush.bf16.msra.mxu0 0
        %2332 = vmatpush.bf16.msra.mxu0 0
        %2333 = vmatpush.bf16.msra.mxu0 0
        %2334 = vmatpush.bf16.msra.mxu0 %v2323
        %2335 = vmatmul.bf16.gmra.mxu0 %v1450
        %v2336 = vpop.f32.mrf.mxu0
        %v2337 = vadd.f32 0.0, %v2336
        %v2338 = vpop.f32.mrf.mxu0
        %v2339 = vadd.f32 0.0, %v2338
        %2340 = vmatmul.bf16.gmra.mxu0 %v1453
        %v2341 = vpop.f32.mrf.mxu0
        %v2342 = vadd.f32 0.0, %v2341
        %v2343 = vpop.f32.mrf.mxu0
        %v2344 = vadd.f32 0.0, %v2343
        %2345 = vmatmul.bf16.gmra.mxu0 %v1456
        %v2346 = vpop.f32.mrf.mxu0
        %v2347 = vadd.f32 0.0, %v2346
        %v2348 = vpop.f32.mrf.mxu0
        %v2349 = vadd.f32 0.0, %v2348
        %2350 = vmatmul.bf16.gmra.mxu0 %v1459
        %v2351 = vpop.f32.mrf.mxu0
        %v2352 = vadd.f32 0.0, %v2351
        %v2353 = vpop.f32.mrf.mxu0
        %v2354 = vadd.f32 0.0, %v2353
        %2355 = vmatmul.bf16.gmra.mxu0 %v1462
        %v2356 = vpop.f32.mrf.mxu0
        %v2357 = vadd.f32 0.0, %v2356
        %v2358 = vpop.f32.mrf.mxu0
        %v2359 = vadd.f32 0.0, %v2358
        %2360 = vmatmul.bf16.gmra.mxu0 %v1465
        %v2361 = vpop.f32.mrf.mxu0
        %v2362 = vadd.f32 0.0, %v2361
        %v2363 = vpop.f32.mrf.mxu0
        %v2364 = vadd.f32 0.0, %v2363
        %2365 = vmatmul.bf16.gmra.mxu0 %v1468
        %v2366 = vpop.f32.mrf.mxu0
        %v2367 = vadd.f32 0.0, %v2366
        %v2368 = vpop.f32.mrf.mxu0
        %v2369 = vadd.f32 0.0, %v2368
        %2370 = vmatmul.bf16.gmra.mxu0 %v1471
        %v2371 = vpop.f32.mrf.mxu0
        %v2372 = vadd.f32 0.0, %v2371
        %v2373 = vpop.f32.mrf.mxu0
        %v2374 = vadd.f32 0.0, %v2373
        %2375 = vmatmul.bf16.gmra.mxu0 %v1474
        %v2376 = vpop.f32.mrf.mxu0
        %v2377 = vadd.f32 0.0, %v2376
        %v2378 = vpop.f32.mrf.mxu0
        %v2379 = vadd.f32 0.0, %v2378
        %2380 = vmatmul.bf16.gmra.mxu0 %v1477
        %v2381 = vpop.f32.mrf.mxu0
        %v2382 = vadd.f32 0.0, %v2381
        %v2383 = vpop.f32.mrf.mxu0
        %v2384 = vadd.f32 0.0, %v2383
        %2385 = vmatmul.bf16.gmra.mxu0 %v1480
        %v2386 = vpop.f32.mrf.mxu0
        %v2387 = vadd.f32 0.0, %v2386
        %v2388 = vpop.f32.mrf.mxu0
        %v2389 = vadd.f32 0.0, %v2388
        %2390 = vmatmul.bf16.gmra.mxu0 %v1483
        %v2391 = vpop.f32.mrf.mxu0
        %v2392 = vadd.f32 0.0, %v2391
        %v2393 = vpop.f32.mrf.mxu0
        %v2394 = vadd.f32 0.0, %v2393
        %2395 = vmatmul.bf16.gmra.mxu0 %v1486
        %v2396 = vpop.f32.mrf.mxu0
        %v2397 = vadd.f32 0.0, %v2396
        %v2398 = vpop.f32.mrf.mxu0
        %v2399 = vadd.f32 0.0, %v2398
        %2400 = vmatmul.bf16.gmra.mxu0 %v1489
        %v2401 = vpop.f32.mrf.mxu0
        %v2402 = vadd.f32 0.0, %v2401
        %v2403 = vpop.f32.mrf.mxu0
        %v2404 = vadd.f32 0.0, %v2403
        %2405 = vmatmul.bf16.gmra.mxu0 %v1492
        %v2406 = vpop.f32.mrf.mxu0
        %v2407 = vadd.f32 0.0, %v2406
        %v2408 = vpop.f32.mrf.mxu0
        %v2409 = vadd.f32 0.0, %v2408
        %2410 = vmatmul.bf16.gmra.mxu0 %v1495
        %v2411 = vpop.f32.mrf.mxu0
        %v2412 = vadd.f32 0.0, %v2411
        %v2413 = vpop.f32.mrf.mxu0
        %v2414 = vadd.f32 0.0, %v2413
        %2415 = vdwg.mxu0
        %2416 = vmatpush.bf16.msra.mxu0 0
        %2417 = vmatpush.bf16.msra.mxu0 0
        %2418 = vmatpush.bf16.msra.mxu0 0
        %2419 = vmatpush.bf16.msra.mxu0 0
        %2420 = vmatpush.bf16.msra.mxu0 0
        %2421 = vmatpush.bf16.msra.mxu0 0
        %2422 = vmatpush.bf16.msra.mxu0 0
        %2423 = vmatpush.bf16.msra.mxu0 %v2325
        %2424 = vmatmul.bf16.gmra.mxu0 %v1450
        %v2425 = vpop.f32.mrf.mxu0
        %v2426 = vadd.f32 0.0, %v2425
        %v2427 = vpop.f32.mrf.mxu0
        %v2428 = vadd.f32 0.0, %v2427
        %2429 = vmatmul.bf16.gmra.mxu0 %v1453
        %v2430 = vpop.f32.mrf.mxu0
        %v2431 = vadd.f32 0.0, %v2430
        %v2432 = vpop.f32.mrf.mxu0
        %v2433 = vadd.f32 0.0, %v2432
        %2434 = vmatmul.bf16.gmra.mxu0 %v1456
        %v2435 = vpop.f32.mrf.mxu0
        %v2436 = vadd.f32 0.0, %v2435
        %v2437 = vpop.f32.mrf.mxu0
        %v2438 = vadd.f32 0.0, %v2437
        %2439 = vmatmul.bf16.gmra.mxu0 %v1459
        %v2440 = vpop.f32.mrf.mxu0
        %v2441 = vadd.f32 0.0, %v2440
        %v2442 = vpop.f32.mrf.mxu0
        %v2443 = vadd.f32 0.0, %v2442
        %2444 = vmatmul.bf16.gmra.mxu0 %v1462
        %v2445 = vpop.f32.mrf.mxu0
        %v2446 = vadd.f32 0.0, %v2445
        %v2447 = vpop.f32.mrf.mxu0
        %v2448 = vadd.f32 0.0, %v2447
        %2449 = vmatmul.bf16.gmra.mxu0 %v1465
        %v2450 = vpop.f32.mrf.mxu0
        %v2451 = vadd.f32 0.0, %v2450
        %v2452 = vpop.f32.mrf.mxu0
        %v2453 = vadd.f32 0.0, %v2452
        %2454 = vmatmul.bf16.gmra.mxu0 %v1468
        %v2455 = vpop.f32.mrf.mxu0
        %v2456 = vadd.f32 0.0, %v2455
        %v2457 = vpop.f32.mrf.mxu0
        %v2458 = vadd.f32 0.0, %v2457
        %2459 = vmatmul.bf16.gmra.mxu0 %v1471
        %v2460 = vpop.f32.mrf.mxu0
        %v2461 = vadd.f32 0.0, %v2460
        %v2462 = vpop.f32.mrf.mxu0
        %v2463 = vadd.f32 0.0, %v2462
        %2464 = vmatmul.bf16.gmra.mxu0 %v1474
        %v2465 = vpop.f32.mrf.mxu0
        %v2466 = vadd.f32 0.0, %v2465
        %v2467 = vpop.f32.mrf.mxu0
        %v2468 = vadd.f32 0.0, %v2467
        %2469 = vmatmul.bf16.gmra.mxu0 %v1477
        %v2470 = vpop.f32.mrf.mxu0
        %v2471 = vadd.f32 0.0, %v2470
        %v2472 = vpop.f32.mrf.mxu0
        %v2473 = vadd.f32 0.0, %v2472
        %2474 = vmatmul.bf16.gmra.mxu0 %v1480
        %v2475 = vpop.f32.mrf.mxu0
        %v2476 = vadd.f32 0.0, %v2475
        %v2477 = vpop.f32.mrf.mxu0
        %v2478 = vadd.f32 0.0, %v2477
        %2479 = vmatmul.bf16.gmra.mxu0 %v1483
        %v2480 = vpop.f32.mrf.mxu0
        %v2481 = vadd.f32 0.0, %v2480
        %v2482 = vpop.f32.mrf.mxu0
        %v2483 = vadd.f32 0.0, %v2482
        %2484 = vmatmul.bf16.gmra.mxu0 %v1486
        %v2485 = vpop.f32.mrf.mxu0
        %v2486 = vadd.f32 0.0, %v2485
        %v2487 = vpop.f32.mrf.mxu0
        %v2488 = vadd.f32 0.0, %v2487
        %2489 = vmatmul.bf16.gmra.mxu0 %v1489
        %v2490 = vpop.f32.mrf.mxu0
        %v2491 = vadd.f32 0.0, %v2490
        %v2492 = vpop.f32.mrf.mxu0
        %v2493 = vadd.f32 0.0, %v2492
        %2494 = vmatmul.bf16.gmra.mxu0 %v1492
        %v2495 = vpop.f32.mrf.mxu0
        %v2496 = vadd.f32 0.0, %v2495
        %v2497 = vpop.f32.mrf.mxu0
        %v2498 = vadd.f32 0.0, %v2497
        %2499 = vmatmul.bf16.gmra.mxu0 %v1495
        %v2500 = vpop.f32.mrf.mxu0
        %v2501 = vadd.f32 0.0, %v2500
        %v2502 = vpop.f32.mrf.mxu0
        %v2503 = vadd.f32 0.0, %v2502
        %2504 = vdwg.mxu0
        %v2505 = vadd.f32 %v2150, %v2337
        %v2506 = vadd.f32 %v2239, %v2426
        %v2507 = vadd.f32 %v2152, %v2339
        %v2508 = vadd.f32 %v2241, %v2428
        %v2509 = vadd.f32 %v2155, %v2342
        %v2510 = vadd.f32 %v2244, %v2431
        %v2511 = vadd.f32 %v2157, %v2344
        %v2512 = vadd.f32 %v2246, %v2433
        %v2513 = vadd.f32 %v2160, %v2347
        %v2514 = vadd.f32 %v2249, %v2436
        %v2515 = vadd.f32 %v2162, %v2349
        %v2516 = vadd.f32 %v2251, %v2438
        %v2517 = vadd.f32 %v2165, %v2352
        %v2518 = vadd.f32 %v2254, %v2441
        %v2519 = vadd.f32 %v2167, %v2354
        %v2520 = vadd.f32 %v2256, %v2443
        %v2521 = vadd.f32 %v2170, %v2357
        %v2522 = vadd.f32 %v2259, %v2446
        %v2523 = vadd.f32 %v2172, %v2359
        %v2524 = vadd.f32 %v2261, %v2448
        %v2525 = vadd.f32 %v2175, %v2362
        %v2526 = vadd.f32 %v2264, %v2451
        %v2527 = vadd.f32 %v2177, %v2364
        %v2528 = vadd.f32 %v2266, %v2453
        %v2529 = vadd.f32 %v2180, %v2367
        %v2530 = vadd.f32 %v2269, %v2456
        %v2531 = vadd.f32 %v2182, %v2369
        %v2532 = vadd.f32 %v2271, %v2458
        %v2533 = vadd.f32 %v2185, %v2372
        %v2534 = vadd.f32 %v2274, %v2461
        %v2535 = vadd.f32 %v2187, %v2374
        %v2536 = vadd.f32 %v2276, %v2463
        %v2537 = vadd.f32 %v2190, %v2377
        %v2538 = vadd.f32 %v2279, %v2466
        %v2539 = vadd.f32 %v2192, %v2379
        %v2540 = vadd.f32 %v2281, %v2468
        %v2541 = vadd.f32 %v2195, %v2382
        %v2542 = vadd.f32 %v2284, %v2471
        %v2543 = vadd.f32 %v2197, %v2384
        %v2544 = vadd.f32 %v2286, %v2473
        %v2545 = vadd.f32 %v2200, %v2387
        %v2546 = vadd.f32 %v2289, %v2476
        %v2547 = vadd.f32 %v2202, %v2389
        %v2548 = vadd.f32 %v2291, %v2478
        %v2549 = vadd.f32 %v2205, %v2392
        %v2550 = vadd.f32 %v2294, %v2481
        %v2551 = vadd.f32 %v2207, %v2394
        %v2552 = vadd.f32 %v2296, %v2483
        %v2553 = vadd.f32 %v2210, %v2397
        %v2554 = vadd.f32 %v2299, %v2486
        %v2555 = vadd.f32 %v2212, %v2399
        %v2556 = vadd.f32 %v2301, %v2488
        %v2557 = vadd.f32 %v2215, %v2402
        %v2558 = vadd.f32 %v2304, %v2491
        %v2559 = vadd.f32 %v2217, %v2404
        %v2560 = vadd.f32 %v2306, %v2493
        %v2561 = vadd.f32 %v2220, %v2407
        %v2562 = vadd.f32 %v2309, %v2496
        %v2563 = vadd.f32 %v2222, %v2409
        %v2564 = vadd.f32 %v2311, %v2498
        %v2565 = vadd.f32 %v2225, %v2412
        %v2566 = vadd.f32 %v2314, %v2501
        %v2567 = vadd.f32 %v2227, %v2414
        %v2568 = vadd.f32 %v2316, %v2503
        %v2569 = vld [vmem:[%s8 + $0x2] sm:$0x3]
        %v2571 = vperm.slane %v2569, 0
        %v2572 = vperm.slane %v2569, 1
        %v2575 = vadd.f32 %v2505, %v2571
        %v2576 = vadd.f32 %v2506, %v2572
        %v2577 = vadd.f32 %v2507, %v2571
        %v2578 = vadd.f32 %v2508, %v2572
        %v2579 = vadd.f32 %v2509, %v2571
        %v2580 = vadd.f32 %v2510, %v2572
        %v2581 = vadd.f32 %v2511, %v2571
        %v2582 = vadd.f32 %v2512, %v2572
        %v2583 = vadd.f32 %v2513, %v2571
        %v2584 = vadd.f32 %v2514, %v2572
        %v2585 = vadd.f32 %v2515, %v2571
        %v2586 = vadd.f32 %v2516, %v2572
        %v2587 = vadd.f32 %v2517, %v2571
        %v2588 = vadd.f32 %v2518, %v2572
        %v2589 = vadd.f32 %v2519, %v2571
        %v2590 = vadd.f32 %v2520, %v2572
        %v2591 = vadd.f32 %v2521, %v2571
        %v2592 = vadd.f32 %v2522, %v2572
        %v2593 = vadd.f32 %v2523, %v2571
        %v2594 = vadd.f32 %v2524, %v2572
        %v2595 = vadd.f32 %v2525, %v2571
        %v2596 = vadd.f32 %v2526, %v2572
        %v2597 = vadd.f32 %v2527, %v2571
        %v2598 = vadd.f32 %v2528, %v2572
        %v2599 = vadd.f32 %v2529, %v2571
        %v2600 = vadd.f32 %v2530, %v2572
        %v2601 = vadd.f32 %v2531, %v2571
        %v2602 = vadd.f32 %v2532, %v2572
        %v2603 = vadd.f32 %v2533, %v2571
        %v2604 = vadd.f32 %v2534, %v2572
        %v2605 = vadd.f32 %v2535, %v2571
        %v2606 = vadd.f32 %v2536, %v2572
        %v2607 = vadd.f32 %v2537, %v2571
        %v2608 = vadd.f32 %v2538, %v2572
        %v2609 = vadd.f32 %v2539, %v2571
        %v2610 = vadd.f32 %v2540, %v2572
        %v2611 = vadd.f32 %v2541, %v2571
        %v2612 = vadd.f32 %v2542, %v2572
        %v2613 = vadd.f32 %v2543, %v2571
        %v2614 = vadd.f32 %v2544, %v2572
        %v2615 = vadd.f32 %v2545, %v2571
        %v2616 = vadd.f32 %v2546, %v2572
        %v2617 = vadd.f32 %v2547, %v2571
        %v2618 = vadd.f32 %v2548, %v2572
        %v2619 = vadd.f32 %v2549, %v2571
        %v2620 = vadd.f32 %v2550, %v2572
        %v2621 = vadd.f32 %v2551, %v2571
        %v2622 = vadd.f32 %v2552, %v2572
        %v2623 = vadd.f32 %v2553, %v2571
        %v2624 = vadd.f32 %v2554, %v2572
        %v2625 = vadd.f32 %v2555, %v2571
        %v2626 = vadd.f32 %v2556, %v2572
        %v2627 = vadd.f32 %v2557, %v2571
        %v2628 = vadd.f32 %v2558, %v2572
        %v2629 = vadd.f32 %v2559, %v2571
        %v2630 = vadd.f32 %v2560, %v2572
        %v2631 = vadd.f32 %v2561, %v2571
        %v2632 = vadd.f32 %v2562, %v2572
        %v2633 = vadd.f32 %v2563, %v2571
        %v2634 = vadd.f32 %v2564, %v2572
        %v2635 = vadd.f32 %v2565, %v2571
        %v2636 = vadd.f32 %v2566, %v2572
        %v2637 = vadd.f32 %v2567, %v2571
        %v2638 = vadd.f32 %v2568, %v2572
        %v2639 = vmax.f32 %v2575, 0.0
        %v2640 = vmax.f32 %v2576, 0.0
        %v2641 = vmax.f32 %v2577, 0.0
        %v2642 = vmax.f32 %v2578, 0.0
        %v2643 = vmax.f32 %v2579, 0.0
        %v2644 = vmax.f32 %v2580, 0.0
        %v2645 = vmax.f32 %v2581, 0.0
        %v2646 = vmax.f32 %v2582, 0.0
        %v2647 = vmax.f32 %v2583, 0.0
        %v2648 = vmax.f32 %v2584, 0.0
        %v2649 = vmax.f32 %v2585, 0.0
        %v2650 = vmax.f32 %v2586, 0.0
        %v2651 = vmax.f32 %v2587, 0.0
        %v2652 = vmax.f32 %v2588, 0.0
        %v2653 = vmax.f32 %v2589, 0.0
        %v2654 = vmax.f32 %v2590, 0.0
        %v2655 = vmax.f32 %v2591, 0.0
        %v2656 = vmax.f32 %v2592, 0.0
        %v2657 = vmax.f32 %v2593, 0.0
        %v2658 = vmax.f32 %v2594, 0.0
        %v2659 = vmax.f32 %v2595, 0.0
        %v2660 = vmax.f32 %v2596, 0.0
        %v2661 = vmax.f32 %v2597, 0.0
        %v2662 = vmax.f32 %v2598, 0.0
        %v2663 = vmax.f32 %v2599, 0.0
        %v2664 = vmax.f32 %v2600, 0.0
        %v2665 = vmax.f32 %v2601, 0.0
        %v2666 = vmax.f32 %v2602, 0.0
        %v2667 = vmax.f32 %v2603, 0.0
        %v2668 = vmax.f32 %v2604, 0.0
        %v2669 = vmax.f32 %v2605, 0.0
        %v2670 = vmax.f32 %v2606, 0.0
        %v2671 = vmax.f32 %v2607, 0.0
        %v2672 = vmax.f32 %v2608, 0.0
        %v2673 = vmax.f32 %v2609, 0.0
        %v2674 = vmax.f32 %v2610, 0.0
        %v2675 = vmax.f32 %v2611, 0.0
        %v2676 = vmax.f32 %v2612, 0.0
        %v2677 = vmax.f32 %v2613, 0.0
        %v2678 = vmax.f32 %v2614, 0.0
        %v2679 = vmax.f32 %v2615, 0.0
        %v2680 = vmax.f32 %v2616, 0.0
        %v2681 = vmax.f32 %v2617, 0.0
        %v2682 = vmax.f32 %v2618, 0.0
        %v2683 = vmax.f32 %v2619, 0.0
        %v2684 = vmax.f32 %v2620, 0.0
        %v2685 = vmax.f32 %v2621, 0.0
        %v2686 = vmax.f32 %v2622, 0.0
        %v2687 = vmax.f32 %v2623, 0.0
        %v2688 = vmax.f32 %v2624, 0.0
        %v2689 = vmax.f32 %v2625, 0.0
        %v2690 = vmax.f32 %v2626, 0.0
        %v2691 = vmax.f32 %v2627, 0.0
        %v2692 = vmax.f32 %v2628, 0.0
        %v2693 = vmax.f32 %v2629, 0.0
        %v2694 = vmax.f32 %v2630, 0.0
        %v2695 = vmax.f32 %v2631, 0.0
        %v2696 = vmax.f32 %v2632, 0.0
        %v2697 = vmax.f32 %v2633, 0.0
        %v2698 = vmax.f32 %v2634, 0.0
        %v2699 = vmax.f32 %v2635, 0.0
        %v2700 = vmax.f32 %v2636, 0.0
        %v2701 = vmax.f32 %v2637, 0.0
        %v2702 = vmax.f32 %v2638, 0.0
        %v2703 = vpack.c.bf16 %v2641, %v2639
        %v2704 = vpack.c.bf16 %v2642, %v2640
        %v2705 = vpack.c.bf16 %v2645, %v2643
        %v2706 = vpack.c.bf16 %v2646, %v2644
        %v2707 = vpack.c.bf16 %v2649, %v2647
        %v2708 = vpack.c.bf16 %v2650, %v2648
        %v2709 = vpack.c.bf16 %v2653, %v2651
        %v2710 = vpack.c.bf16 %v2654, %v2652
        %v2711 = vpack.c.bf16 %v2657, %v2655
        %v2712 = vpack.c.bf16 %v2658, %v2656
        %v2713 = vpack.c.bf16 %v2661, %v2659
        %v2714 = vpack.c.bf16 %v2662, %v2660
        %v2715 = vpack.c.bf16 %v2665, %v2663
        %v2716 = vpack.c.bf16 %v2666, %v2664
        %v2717 = vpack.c.bf16 %v2669, %v2667
        %v2718 = vpack.c.bf16 %v2670, %v2668
        %v2719 = vpack.c.bf16 %v2673, %v2671
        %v2720 = vpack.c.bf16 %v2674, %v2672
        %v2721 = vpack.c.bf16 %v2677, %v2675
        %v2722 = vpack.c.bf16 %v2678, %v2676
        %v2723 = vpack.c.bf16 %v2681, %v2679
        %v2724 = vpack.c.bf16 %v2682, %v2680
        %v2725 = vpack.c.bf16 %v2685, %v2683
        %v2726 = vpack.c.bf16 %v2686, %v2684
        %v2727 = vpack.c.bf16 %v2689, %v2687
        %v2728 = vpack.c.bf16 %v2690, %v2688
        %v2729 = vpack.c.bf16 %v2693, %v2691
        %v2730 = vpack.c.bf16 %v2694, %v2692
        %v2731 = vpack.c.bf16 %v2697, %v2695
        %v2732 = vpack.c.bf16 %v2698, %v2696
        %v2733 = vpack.c.bf16 %v2701, %v2699
        %v2734 = vpack.c.bf16 %v2702, %v2700
        %v2735 = vld [vmem:[%s9 + $0x80] sm:$0xf]
        %v2736 = vld [vmem:[%s9 + $0x84] sm:$0xf]
        %v2737 = vld [vmem:[%s9 + $0x88] sm:$0xf]
        %v2738 = vld [vmem:[%s9 + $0x8c] sm:$0xf]
        %v2739 = vld [vmem:[%s9 + $0x90] sm:$0xf]
        %v2740 = vld [vmem:[%s9 + $0x94] sm:$0xf]
        %v2741 = vld [vmem:[%s9 + $0x98] sm:$0xf]
        %v2742 = vld [vmem:[%s9 + $0x9c] sm:$0xf]
        %v2743 = vld [vmem:[%s9 + $0xa0] sm:$0xf]
        %v2744 = vld [vmem:[%s9 + $0xa4] sm:$0xf]
        %v2745 = vld [vmem:[%s9 + $0xa8] sm:$0xf]
        %v2746 = vld [vmem:[%s9 + $0xac] sm:$0xf]
        %v2747 = vld [vmem:[%s9 + $0xb0] sm:$0xf]
        %v2748 = vld [vmem:[%s9 + $0xb4] sm:$0xf]
        %v2749 = vld [vmem:[%s9 + $0xb8] sm:$0xf]
        %v2750 = vld [vmem:[%s9 + $0xbc] sm:$0xf]
        %v2751 = vld [vmem:[%s9 + $0xc0] sm:$0xf]
        %v2752 = vld [vmem:[%s9 + $0xc4] sm:$0xf]
        %v2753 = vld [vmem:[%s9 + $0xc8] sm:$0xf]
        %v2754 = vld [vmem:[%s9 + $0xcc] sm:$0xf]
        %v2755 = vld [vmem:[%s9 + $0xd0] sm:$0xf]
        %v2756 = vld [vmem:[%s9 + $0xd4] sm:$0xf]
        %v2757 = vld [vmem:[%s9 + $0xd8] sm:$0xf]
        %v2758 = vld [vmem:[%s9 + $0xdc] sm:$0xf]
        %v2759 = vld [vmem:[%s9 + $0xe0] sm:$0xf]
        %v2760 = vld [vmem:[%s9 + $0xe4] sm:$0xf]
        %v2761 = vld [vmem:[%s9 + $0xe8] sm:$0xf]
        %v2762 = vld [vmem:[%s9 + $0xec] sm:$0xf]
        %v2763 = vld [vmem:[%s9 + $0xf0] sm:$0xf]
        %v2764 = vld [vmem:[%s9 + $0xf4] sm:$0xf]
        %v2765 = vld [vmem:[%s9 + $0xf8] sm:$0xf]
        %v2766 = vld [vmem:[%s9 + $0xfc] sm:$0xf]
        %v2799 = vunpack.c.l.b16 %v2735
        %v2800 = vunpack.c.l.b16 %v2736
        %v2801 = vunpack.c.l.b16 %v2737
        %v2802 = vunpack.c.l.b16 %v2738
        %v2803 = vunpack.c.l.b16 %v2739
        %v2804 = vunpack.c.l.b16 %v2740
        %v2805 = vunpack.c.l.b16 %v2741
        %v2806 = vunpack.c.l.b16 %v2742
        %v2807 = vunpack.c.l.b16 %v2743
        %v2808 = vunpack.c.l.b16 %v2744
        %v2809 = vunpack.c.l.b16 %v2745
        %v2810 = vunpack.c.l.b16 %v2746
        %v2811 = vunpack.c.l.b16 %v2747
        %v2812 = vunpack.c.l.b16 %v2748
        %v2813 = vunpack.c.l.b16 %v2749
        %v2814 = vunpack.c.l.b16 %v2750
        %v2815 = vunpack.c.l.b16 %v2751
        %v2816 = vunpack.c.l.b16 %v2752
        %v2817 = vunpack.c.l.b16 %v2753
        %v2818 = vunpack.c.l.b16 %v2754
        %v2819 = vunpack.c.l.b16 %v2755
        %v2820 = vunpack.c.l.b16 %v2756
        %v2821 = vunpack.c.l.b16 %v2757
        %v2822 = vunpack.c.l.b16 %v2758
        %v2823 = vunpack.c.l.b16 %v2759
        %v2824 = vunpack.c.l.b16 %v2760
        %v2825 = vunpack.c.l.b16 %v2761
        %v2826 = vunpack.c.l.b16 %v2762
        %v2827 = vunpack.c.l.b16 %v2763
        %v2828 = vunpack.c.l.b16 %v2764
        %v2829 = vunpack.c.l.b16 %v2765
        %v2830 = vunpack.c.l.b16 %v2766
        %v2831 = vpack.c.b16 %v2800, %v2799
        %v2832 = vpack.c.b16 %v2802, %v2801
        %v2833 = vpack.c.b16 %v2804, %v2803
        %v2834 = vpack.c.b16 %v2806, %v2805
        %v2835 = vpack.c.b16 %v2808, %v2807
        %v2836 = vpack.c.b16 %v2810, %v2809
        %v2837 = vpack.c.b16 %v2812, %v2811
        %v2838 = vpack.c.b16 %v2814, %v2813
        %v2839 = vpack.c.b16 %v2816, %v2815
        %v2840 = vpack.c.b16 %v2818, %v2817
        %v2841 = vpack.c.b16 %v2820, %v2819
        %v2842 = vpack.c.b16 %v2822, %v2821
        %v2843 = vpack.c.b16 %v2824, %v2823
        %v2844 = vpack.c.b16 %v2826, %v2825
        %v2845 = vpack.c.b16 %v2828, %v2827
        %v2846 = vpack.c.b16 %v2830, %v2829
        %2863 = vmatpush.bf16.msra.mxu0 %v2838
        %2864 = vmatpush.bf16.msra.mxu0 %v2837
        %2865 = vmatpush.bf16.msra.mxu0 %v2836
        %2866 = vmatpush.bf16.msra.mxu0 %v2835
        %2867 = vmatpush.bf16.msra.mxu0 %v2834
        %2868 = vmatpush.bf16.msra.mxu0 %v2833
        %2869 = vmatpush.bf16.msra.mxu0 %v2832
        %2870 = vmatpush.bf16.msra.mxu0 %v2831
        %2871 = vmatmul.bf16.gmra.mxu0 %v2703
        %v2872 = vpop.f32.mrf.mxu0
        %v2873 = vadd.f32 0.0, %v2872
        %v2874 = vpop.f32.mrf.mxu0
        %v2875 = vadd.f32 0.0, %v2874
        %2876 = vmatmul.bf16.gmra.mxu0 %v2705
        %v2877 = vpop.f32.mrf.mxu0
        %v2878 = vadd.f32 0.0, %v2877
        %v2879 = vpop.f32.mrf.mxu0
        %v2880 = vadd.f32 0.0, %v2879
        %2881 = vmatmul.bf16.gmra.mxu0 %v2707
        %v2882 = vpop.f32.mrf.mxu0
        %v2883 = vadd.f32 0.0, %v2882
        %v2884 = vpop.f32.mrf.mxu0
        %v2885 = vadd.f32 0.0, %v2884
        %2886 = vmatmul.bf16.gmra.mxu0 %v2709
        %v2887 = vpop.f32.mrf.mxu0
        %v2888 = vadd.f32 0.0, %v2887
        %v2889 = vpop.f32.mrf.mxu0
        %v2890 = vadd.f32 0.0, %v2889
        %2891 = vmatmul.bf16.gmra.mxu0 %v2711
        %v2892 = vpop.f32.mrf.mxu0
        %v2893 = vadd.f32 0.0, %v2892
        %v2894 = vpop.f32.mrf.mxu0
        %v2895 = vadd.f32 0.0, %v2894
        %2896 = vmatmul.bf16.gmra.mxu0 %v2713
        %v2897 = vpop.f32.mrf.mxu0
        %v2898 = vadd.f32 0.0, %v2897
        %v2899 = vpop.f32.mrf.mxu0
        %v2900 = vadd.f32 0.0, %v2899
        %2901 = vmatmul.bf16.gmra.mxu0 %v2715
        %v2902 = vpop.f32.mrf.mxu0
        %v2903 = vadd.f32 0.0, %v2902
        %v2904 = vpop.f32.mrf.mxu0
        %v2905 = vadd.f32 0.0, %v2904
        %2906 = vmatmul.bf16.gmra.mxu0 %v2717
        %v2907 = vpop.f32.mrf.mxu0
        %v2908 = vadd.f32 0.0, %v2907
        %v2909 = vpop.f32.mrf.mxu0
        %v2910 = vadd.f32 0.0, %v2909
        %2911 = vmatmul.bf16.gmra.mxu0 %v2719
        %v2912 = vpop.f32.mrf.mxu0
        %v2913 = vadd.f32 0.0, %v2912
        %v2914 = vpop.f32.mrf.mxu0
        %v2915 = vadd.f32 0.0, %v2914
        %2916 = vmatmul.bf16.gmra.mxu0 %v2721
        %v2917 = vpop.f32.mrf.mxu0
        %v2918 = vadd.f32 0.0, %v2917
        %v2919 = vpop.f32.mrf.mxu0
        %v2920 = vadd.f32 0.0, %v2919
        %2921 = vmatmul.bf16.gmra.mxu0 %v2723
        %v2922 = vpop.f32.mrf.mxu0
        %v2923 = vadd.f32 0.0, %v2922
        %v2924 = vpop.f32.mrf.mxu0
        %v2925 = vadd.f32 0.0, %v2924
        %2926 = vmatmul.bf16.gmra.mxu0 %v2725
        %v2927 = vpop.f32.mrf.mxu0
        %v2928 = vadd.f32 0.0, %v2927
        %v2929 = vpop.f32.mrf.mxu0
        %v2930 = vadd.f32 0.0, %v2929
        %2931 = vmatmul.bf16.gmra.mxu0 %v2727
        %v2932 = vpop.f32.mrf.mxu0
        %v2933 = vadd.f32 0.0, %v2932
        %v2934 = vpop.f32.mrf.mxu0
        %v2935 = vadd.f32 0.0, %v2934
        %2936 = vmatmul.bf16.gmra.mxu0 %v2729
        %v2937 = vpop.f32.mrf.mxu0
        %v2938 = vadd.f32 0.0, %v2937
        %v2939 = vpop.f32.mrf.mxu0
        %v2940 = vadd.f32 0.0, %v2939
        %2941 = vmatmul.bf16.gmra.mxu0 %v2731
        %v2942 = vpop.f32.mrf.mxu0
        %v2943 = vadd.f32 0.0, %v2942
        %v2944 = vpop.f32.mrf.mxu0
        %v2945 = vadd.f32 0.0, %v2944
        %2946 = vmatmul.bf16.gmra.mxu0 %v2733
        %v2947 = vpop.f32.mrf.mxu0
        %v2948 = vadd.f32 0.0, %v2947
        %v2949 = vpop.f32.mrf.mxu0
        %v2950 = vadd.f32 0.0, %v2949
        %2951 = vdwg.mxu0
        %2952 = vmatpush.bf16.msra.mxu0 %v2846
        %2953 = vmatpush.bf16.msra.mxu0 %v2845
        %2954 = vmatpush.bf16.msra.mxu0 %v2844
        %2955 = vmatpush.bf16.msra.mxu0 %v2843
        %2956 = vmatpush.bf16.msra.mxu0 %v2842
        %2957 = vmatpush.bf16.msra.mxu0 %v2841
        %2958 = vmatpush.bf16.msra.mxu0 %v2840
        %2959 = vmatpush.bf16.msra.mxu0 %v2839
        %2960 = vmatmul.bf16.gmra.mxu0 %v2704
        %v2961 = vpop.f32.mrf.mxu0
        %v2962 = vadd.f32 %v2873, %v2961
        %v2963 = vpop.f32.mrf.mxu0
        %v2964 = vadd.f32 %v2875, %v2963
        %2965 = vmatmul.bf16.gmra.mxu0 %v2706
        %v2966 = vpop.f32.mrf.mxu0
        %v2967 = vadd.f32 %v2878, %v2966
        %v2968 = vpop.f32.mrf.mxu0
        %v2969 = vadd.f32 %v2880, %v2968
        %2970 = vmatmul.bf16.gmra.mxu0 %v2708
        %v2971 = vpop.f32.mrf.mxu0
        %v2972 = vadd.f32 %v2883, %v2971
        %v2973 = vpop.f32.mrf.mxu0
        %v2974 = vadd.f32 %v2885, %v2973
        %2975 = vmatmul.bf16.gmra.mxu0 %v2710
        %v2976 = vpop.f32.mrf.mxu0
        %v2977 = vadd.f32 %v2888, %v2976
        %v2978 = vpop.f32.mrf.mxu0
        %v2979 = vadd.f32 %v2890, %v2978
        %2980 = vmatmul.bf16.gmra.mxu0 %v2712
        %v2981 = vpop.f32.mrf.mxu0
        %v2982 = vadd.f32 %v2893, %v2981
        %v2983 = vpop.f32.mrf.mxu0
        %v2984 = vadd.f32 %v2895, %v2983
        %2985 = vmatmul.bf16.gmra.mxu0 %v2714
        %v2986 = vpop.f32.mrf.mxu0
        %v2987 = vadd.f32 %v2898, %v2986
        %v2988 = vpop.f32.mrf.mxu0
        %v2989 = vadd.f32 %v2900, %v2988
        %2990 = vmatmul.bf16.gmra.mxu0 %v2716
        %v2991 = vpop.f32.mrf.mxu0
        %v2992 = vadd.f32 %v2903, %v2991
        %v2993 = vpop.f32.mrf.mxu0
        %v2994 = vadd.f32 %v2905, %v2993
        %2995 = vmatmul.bf16.gmra.mxu0 %v2718
        %v2996 = vpop.f32.mrf.mxu0
        %v2997 = vadd.f32 %v2908, %v2996
        %v2998 = vpop.f32.mrf.mxu0
        %v2999 = vadd.f32 %v2910, %v2998
        %3000 = vmatmul.bf16.gmra.mxu0 %v2720
        %v3001 = vpop.f32.mrf.mxu0
        %v3002 = vadd.f32 %v2913, %v3001
        %v3003 = vpop.f32.mrf.mxu0
        %v3004 = vadd.f32 %v2915, %v3003
        %3005 = vmatmul.bf16.gmra.mxu0 %v2722
        %v3006 = vpop.f32.mrf.mxu0
        %v3007 = vadd.f32 %v2918, %v3006
        %v3008 = vpop.f32.mrf.mxu0
        %v3009 = vadd.f32 %v2920, %v3008
        %3010 = vmatmul.bf16.gmra.mxu0 %v2724
        %v3011 = vpop.f32.mrf.mxu0
        %v3012 = vadd.f32 %v2923, %v3011
        %v3013 = vpop.f32.mrf.mxu0
        %v3014 = vadd.f32 %v2925, %v3013
        %3015 = vmatmul.bf16.gmra.mxu0 %v2726
        %v3016 = vpop.f32.mrf.mxu0
        %v3017 = vadd.f32 %v2928, %v3016
        %v3018 = vpop.f32.mrf.mxu0
        %v3019 = vadd.f32 %v2930, %v3018
        %3020 = vmatmul.bf16.gmra.mxu0 %v2728
        %v3021 = vpop.f32.mrf.mxu0
        %v3022 = vadd.f32 %v2933, %v3021
        %v3023 = vpop.f32.mrf.mxu0
        %v3024 = vadd.f32 %v2935, %v3023
        %3025 = vmatmul.bf16.gmra.mxu0 %v2730
        %v3026 = vpop.f32.mrf.mxu0
        %v3027 = vadd.f32 %v2938, %v3026
        %v3028 = vpop.f32.mrf.mxu0
        %v3029 = vadd.f32 %v2940, %v3028
        %3030 = vmatmul.bf16.gmra.mxu0 %v2732
        %v3031 = vpop.f32.mrf.mxu0
        %v3032 = vadd.f32 %v2943, %v3031
        %v3033 = vpop.f32.mrf.mxu0
        %v3034 = vadd.f32 %v2945, %v3033
        %3035 = vmatmul.bf16.gmra.mxu0 %v2734
        %v3036 = vpop.f32.mrf.mxu0
        %v3037 = vadd.f32 %v2948, %v3036
        %v3038 = vpop.f32.mrf.mxu0
        %v3039 = vadd.f32 %v2950, %v3038
        %3040 = vdwg.mxu0
        %v3073 = vunpack.c.l.b16 %v1909
        %v3074 = vunpack.c.l.b16 %v1910
        %v3075 = vunpack.c.l.b16 %v1911
        %v3076 = vunpack.c.l.b16 %v1912
        %v3077 = vunpack.c.l.b16 %v1913
        %v3078 = vunpack.c.l.b16 %v1914
        %v3079 = vunpack.c.l.b16 %v1915
        %v3080 = vunpack.c.l.b16 %v1916
        %v3081 = vunpack.c.l.b16 %v1917
        %v3082 = vunpack.c.l.b16 %v1918
        %v3083 = vunpack.c.l.b16 %v1919
        %v3084 = vunpack.c.l.b16 %v1920
        %v3085 = vunpack.c.l.b16 %v1921
        %v3086 = vunpack.c.l.b16 %v1922
        %v3087 = vunpack.c.l.b16 %v1923
        %v3088 = vunpack.c.l.b16 %v1924
        %v3089 = vunpack.c.l.b16 %v1925
        %v3090 = vunpack.c.l.b16 %v1926
        %v3091 = vunpack.c.l.b16 %v1927
        %v3092 = vunpack.c.l.b16 %v1928
        %v3093 = vunpack.c.l.b16 %v1929
        %v3094 = vunpack.c.l.b16 %v1930
        %v3095 = vunpack.c.l.b16 %v1931
        %v3096 = vunpack.c.l.b16 %v1932
        %v3097 = vunpack.c.l.b16 %v1933
        %v3098 = vunpack.c.l.b16 %v1934
        %v3099 = vunpack.c.l.b16 %v1935
        %v3100 = vunpack.c.l.b16 %v1936
        %v3101 = vunpack.c.l.b16 %v1937
        %v3102 = vunpack.c.l.b16 %v1938
        %v3103 = vunpack.c.l.b16 %v1939
        %v3104 = vunpack.c.l.b16 %v1940
        %v3105 = vpack.c.b16 %v3074, %v3073
        %v3106 = vpack.c.b16 %v3076, %v3075
        %v3107 = vpack.c.b16 %v3078, %v3077
        %v3108 = vpack.c.b16 %v3080, %v3079
        %v3109 = vpack.c.b16 %v3082, %v3081
        %v3110 = vpack.c.b16 %v3084, %v3083
        %v3111 = vpack.c.b16 %v3086, %v3085
        %v3112 = vpack.c.b16 %v3088, %v3087
        %v3113 = vpack.c.b16 %v3090, %v3089
        %v3114 = vpack.c.b16 %v3092, %v3091
        %v3115 = vpack.c.b16 %v3094, %v3093
        %v3116 = vpack.c.b16 %v3096, %v3095
        %v3117 = vpack.c.b16 %v3098, %v3097
        %v3118 = vpack.c.b16 %v3100, %v3099
        %v3119 = vpack.c.b16 %v3102, %v3101
        %v3120 = vpack.c.b16 %v3104, %v3103
        %3137 = vmatpush.bf16.msra.mxu0 %v3112
        %3138 = vmatpush.bf16.msra.mxu0 %v3111
        %3139 = vmatpush.bf16.msra.mxu0 %v3110
        %3140 = vmatpush.bf16.msra.mxu0 %v3109
        %3141 = vmatpush.bf16.msra.mxu0 %v3108
        %3142 = vmatpush.bf16.msra.mxu0 %v3107
        %3143 = vmatpush.bf16.msra.mxu0 %v3106
        %3144 = vmatpush.bf16.msra.mxu0 %v3105
        %3145 = vmatmul.bf16.gmra.mxu0 %v1877
        %v3146 = vpop.f32.mrf.mxu0
        %v3147 = vadd.f32 %v2962, %v3146
        %v3148 = vpop.f32.mrf.mxu0
        %v3149 = vadd.f32 %v2964, %v3148
        %3150 = vmatmul.bf16.gmra.mxu0 %v1879
        %v3151 = vpop.f32.mrf.mxu0
        %v3152 = vadd.f32 %v2967, %v3151
        %v3153 = vpop.f32.mrf.mxu0
        %v3154 = vadd.f32 %v2969, %v3153
        %3155 = vmatmul.bf16.gmra.mxu0 %v1881
        %v3156 = vpop.f32.mrf.mxu0
        %v3157 = vadd.f32 %v2972, %v3156
        %v3158 = vpop.f32.mrf.mxu0
        %v3159 = vadd.f32 %v2974, %v3158
        %3160 = vmatmul.bf16.gmra.mxu0 %v1883
        %v3161 = vpop.f32.mrf.mxu0
        %v3162 = vadd.f32 %v2977, %v3161
        %v3163 = vpop.f32.mrf.mxu0
        %v3164 = vadd.f32 %v2979, %v3163
        %3165 = vmatmul.bf16.gmra.mxu0 %v1885
        %v3166 = vpop.f32.mrf.mxu0
        %v3167 = vadd.f32 %v2982, %v3166
        %v3168 = vpop.f32.mrf.mxu0
        %v3169 = vadd.f32 %v2984, %v3168
        %3170 = vmatmul.bf16.gmra.mxu0 %v1887
        %v3171 = vpop.f32.mrf.mxu0
        %v3172 = vadd.f32 %v2987, %v3171
        %v3173 = vpop.f32.mrf.mxu0
        %v3174 = vadd.f32 %v2989, %v3173
        %3175 = vmatmul.bf16.gmra.mxu0 %v1889
        %v3176 = vpop.f32.mrf.mxu0
        %v3177 = vadd.f32 %v2992, %v3176
        %v3178 = vpop.f32.mrf.mxu0
        %v3179 = vadd.f32 %v2994, %v3178
        %3180 = vmatmul.bf16.gmra.mxu0 %v1891
        %v3181 = vpop.f32.mrf.mxu0
        %v3182 = vadd.f32 %v2997, %v3181
        %v3183 = vpop.f32.mrf.mxu0
        %v3184 = vadd.f32 %v2999, %v3183
        %3185 = vmatmul.bf16.gmra.mxu0 %v1893
        %v3186 = vpop.f32.mrf.mxu0
        %v3187 = vadd.f32 %v3002, %v3186
        %v3188 = vpop.f32.mrf.mxu0
        %v3189 = vadd.f32 %v3004, %v3188
        %3190 = vmatmul.bf16.gmra.mxu0 %v1895
        %v3191 = vpop.f32.mrf.mxu0
        %v3192 = vadd.f32 %v3007, %v3191
        %v3193 = vpop.f32.mrf.mxu0
        %v3194 = vadd.f32 %v3009, %v3193
        %3195 = vmatmul.bf16.gmra.mxu0 %v1897
        %v3196 = vpop.f32.mrf.mxu0
        %v3197 = vadd.f32 %v3012, %v3196
        %v3198 = vpop.f32.mrf.mxu0
        %v3199 = vadd.f32 %v3014, %v3198
        %3200 = vmatmul.bf16.gmra.mxu0 %v1899
        %v3201 = vpop.f32.mrf.mxu0
        %v3202 = vadd.f32 %v3017, %v3201
        %v3203 = vpop.f32.mrf.mxu0
        %v3204 = vadd.f32 %v3019, %v3203
        %3205 = vmatmul.bf16.gmra.mxu0 %v1901
        %v3206 = vpop.f32.mrf.mxu0
        %v3207 = vadd.f32 %v3022, %v3206
        %v3208 = vpop.f32.mrf.mxu0
        %v3209 = vadd.f32 %v3024, %v3208
        %3210 = vmatmul.bf16.gmra.mxu0 %v1903
        %v3211 = vpop.f32.mrf.mxu0
        %v3212 = vadd.f32 %v3027, %v3211
        %v3213 = vpop.f32.mrf.mxu0
        %v3214 = vadd.f32 %v3029, %v3213
        %3215 = vmatmul.bf16.gmra.mxu0 %v1905
        %v3216 = vpop.f32.mrf.mxu0
        %v3217 = vadd.f32 %v3032, %v3216
        %v3218 = vpop.f32.mrf.mxu0
        %v3219 = vadd.f32 %v3034, %v3218
        %3220 = vmatmul.bf16.gmra.mxu0 %v1907
        %v3221 = vpop.f32.mrf.mxu0
        %v3222 = vadd.f32 %v3037, %v3221
        %v3223 = vpop.f32.mrf.mxu0
        %v3224 = vadd.f32 %v3039, %v3223
        %3225 = vdwg.mxu0
        %3226 = vmatpush.bf16.msra.mxu0 %v3120
        %3227 = vmatpush.bf16.msra.mxu0 %v3119
        %3228 = vmatpush.bf16.msra.mxu0 %v3118
        %3229 = vmatpush.bf16.msra.mxu0 %v3117
        %3230 = vmatpush.bf16.msra.mxu0 %v3116
        %3231 = vmatpush.bf16.msra.mxu0 %v3115
        %3232 = vmatpush.bf16.msra.mxu0 %v3114
        %3233 = vmatpush.bf16.msra.mxu0 %v3113
        %3234 = vmatmul.bf16.gmra.mxu0 %v1878
        %v3235 = vpop.f32.mrf.mxu0
        %v3236 = vadd.f32 %v3147, %v3235
        %v3237 = vpop.f32.mrf.mxu0
        %v3238 = vadd.f32 %v3149, %v3237
        %3239 = vmatmul.bf16.gmra.mxu0 %v1880
        %v3240 = vpop.f32.mrf.mxu0
        %v3241 = vadd.f32 %v3152, %v3240
        %v3242 = vpop.f32.mrf.mxu0
        %v3243 = vadd.f32 %v3154, %v3242
        %3244 = vmatmul.bf16.gmra.mxu0 %v1882
        %v3245 = vpop.f32.mrf.mxu0
        %v3246 = vadd.f32 %v3157, %v3245
        %v3247 = vpop.f32.mrf.mxu0
        %v3248 = vadd.f32 %v3159, %v3247
        %3249 = vmatmul.bf16.gmra.mxu0 %v1884
        %v3250 = vpop.f32.mrf.mxu0
        %v3251 = vadd.f32 %v3162, %v3250
        %v3252 = vpop.f32.mrf.mxu0
        %v3253 = vadd.f32 %v3164, %v3252
        %3254 = vmatmul.bf16.gmra.mxu0 %v1886
        %v3255 = vpop.f32.mrf.mxu0
        %v3256 = vadd.f32 %v3167, %v3255
        %v3257 = vpop.f32.mrf.mxu0
        %v3258 = vadd.f32 %v3169, %v3257
        %3259 = vmatmul.bf16.gmra.mxu0 %v1888
        %v3260 = vpop.f32.mrf.mxu0
        %v3261 = vadd.f32 %v3172, %v3260
        %v3262 = vpop.f32.mrf.mxu0
        %v3263 = vadd.f32 %v3174, %v3262
        %3264 = vmatmul.bf16.gmra.mxu0 %v1890
        %v3265 = vpop.f32.mrf.mxu0
        %v3266 = vadd.f32 %v3177, %v3265
        %v3267 = vpop.f32.mrf.mxu0
        %v3268 = vadd.f32 %v3179, %v3267
        %3269 = vmatmul.bf16.gmra.mxu0 %v1892
        %v3270 = vpop.f32.mrf.mxu0
        %v3271 = vadd.f32 %v3182, %v3270
        %v3272 = vpop.f32.mrf.mxu0
        %v3273 = vadd.f32 %v3184, %v3272
        %3274 = vmatmul.bf16.gmra.mxu0 %v1894
        %v3275 = vpop.f32.mrf.mxu0
        %v3276 = vadd.f32 %v3187, %v3275
        %v3277 = vpop.f32.mrf.mxu0
        %v3278 = vadd.f32 %v3189, %v3277
        %3279 = vmatmul.bf16.gmra.mxu0 %v1896
        %v3280 = vpop.f32.mrf.mxu0
        %v3281 = vadd.f32 %v3192, %v3280
        %v3282 = vpop.f32.mrf.mxu0
        %v3283 = vadd.f32 %v3194, %v3282
        %3284 = vmatmul.bf16.gmra.mxu0 %v1898
        %v3285 = vpop.f32.mrf.mxu0
        %v3286 = vadd.f32 %v3197, %v3285
        %v3287 = vpop.f32.mrf.mxu0
        %v3288 = vadd.f32 %v3199, %v3287
        %3289 = vmatmul.bf16.gmra.mxu0 %v1900
        %v3290 = vpop.f32.mrf.mxu0
        %v3291 = vadd.f32 %v3202, %v3290
        %v3292 = vpop.f32.mrf.mxu0
        %v3293 = vadd.f32 %v3204, %v3292
        %3294 = vmatmul.bf16.gmra.mxu0 %v1902
        %v3295 = vpop.f32.mrf.mxu0
        %v3296 = vadd.f32 %v3207, %v3295
        %v3297 = vpop.f32.mrf.mxu0
        %v3298 = vadd.f32 %v3209, %v3297
        %3299 = vmatmul.bf16.gmra.mxu0 %v1904
        %v3300 = vpop.f32.mrf.mxu0
        %v3301 = vadd.f32 %v3212, %v3300
        %v3302 = vpop.f32.mrf.mxu0
        %v3303 = vadd.f32 %v3214, %v3302
        %3304 = vmatmul.bf16.gmra.mxu0 %v1906
        %v3305 = vpop.f32.mrf.mxu0
        %v3306 = vadd.f32 %v3217, %v3305
        %v3307 = vpop.f32.mrf.mxu0
        %v3308 = vadd.f32 %v3219, %v3307
        %3309 = vmatmul.bf16.gmra.mxu0 %v1908
        %v3310 = vpop.f32.mrf.mxu0
        %v3311 = vadd.f32 %v3222, %v3310
        %v3312 = vpop.f32.mrf.mxu0
        %v3313 = vadd.f32 %v3224, %v3312
        %3314 = vdwg.mxu0
        %v3315 = vld [vmem:[%s5 + $0x8] sm:$0xf]
        %v3316 = vld [vmem:[%s6 + $0x10] sm:$0xff]
        %v3318 = vunpack.c.l.b16 %v3316
        %v3319 = vunpack.c.h.b16 %v3316
        %v3320 = vpack.c.b16 %v3318, %v3318
        %v3321 = vpack.c.b16 %v3319, %v3319
        %v3323 = vsel %vm943, %v3320, 0
        %v3326 = vsel %vm943, %v3321, 0
        %3328 = vmatpush.bf16.msra.mxu0 0
        %3329 = vmatpush.bf16.msra.mxu0 0
        %3330 = vmatpush.bf16.msra.mxu0 0
        %3331 = vmatpush.bf16.msra.mxu0 0
        %3332 = vmatpush.bf16.msra.mxu0 0
        %3333 = vmatpush.bf16.msra.mxu0 0
        %3334 = vmatpush.bf16.msra.mxu0 0
        %3335 = vmatpush.bf16.msra.mxu0 %v3323
        %3336 = vmatmul.bf16.gmra.mxu0 %v896
        %v3337 = vpop.f32.mrf.mxu0
        %v3338 = vadd.f32 0.0, %v3337
        %v3339 = vpop.f32.mrf.mxu0
        %v3340 = vadd.f32 0.0, %v3339
        %3341 = vmatmul.bf16.gmra.mxu0 %v899
        %v3342 = vpop.f32.mrf.mxu0
        %v3343 = vadd.f32 0.0, %v3342
        %v3344 = vpop.f32.mrf.mxu0
        %v3345 = vadd.f32 0.0, %v3344
        %3346 = vmatmul.bf16.gmra.mxu0 %v902
        %v3347 = vpop.f32.mrf.mxu0
        %v3348 = vadd.f32 0.0, %v3347
        %v3349 = vpop.f32.mrf.mxu0
        %v3350 = vadd.f32 0.0, %v3349
        %3351 = vmatmul.bf16.gmra.mxu0 %v905
        %v3352 = vpop.f32.mrf.mxu0
        %v3353 = vadd.f32 0.0, %v3352
        %v3354 = vpop.f32.mrf.mxu0
        %v3355 = vadd.f32 0.0, %v3354
        %3356 = vmatmul.bf16.gmra.mxu0 %v908
        %v3357 = vpop.f32.mrf.mxu0
        %v3358 = vadd.f32 0.0, %v3357
        %v3359 = vpop.f32.mrf.mxu0
        %v3360 = vadd.f32 0.0, %v3359
        %3361 = vmatmul.bf16.gmra.mxu0 %v911
        %v3362 = vpop.f32.mrf.mxu0
        %v3363 = vadd.f32 0.0, %v3362
        %v3364 = vpop.f32.mrf.mxu0
        %v3365 = vadd.f32 0.0, %v3364
        %3366 = vmatmul.bf16.gmra.mxu0 %v914
        %v3367 = vpop.f32.mrf.mxu0
        %v3368 = vadd.f32 0.0, %v3367
        %v3369 = vpop.f32.mrf.mxu0
        %v3370 = vadd.f32 0.0, %v3369
        %3371 = vmatmul.bf16.gmra.mxu0 %v917
        %v3372 = vpop.f32.mrf.mxu0
        %v3373 = vadd.f32 0.0, %v3372
        %v3374 = vpop.f32.mrf.mxu0
        %v3375 = vadd.f32 0.0, %v3374
        %3376 = vmatmul.bf16.gmra.mxu0 %v920
        %v3377 = vpop.f32.mrf.mxu0
        %v3378 = vadd.f32 0.0, %v3377
        %v3379 = vpop.f32.mrf.mxu0
        %v3380 = vadd.f32 0.0, %v3379
        %3381 = vmatmul.bf16.gmra.mxu0 %v923
        %v3382 = vpop.f32.mrf.mxu0
        %v3383 = vadd.f32 0.0, %v3382
        %v3384 = vpop.f32.mrf.mxu0
        %v3385 = vadd.f32 0.0, %v3384
        %3386 = vmatmul.bf16.gmra.mxu0 %v926
        %v3387 = vpop.f32.mrf.mxu0
        %v3388 = vadd.f32 0.0, %v3387
        %v3389 = vpop.f32.mrf.mxu0
        %v3390 = vadd.f32 0.0, %v3389
        %3391 = vmatmul.bf16.gmra.mxu0 %v929
        %v3392 = vpop.f32.mrf.mxu0
        %v3393 = vadd.f32 0.0, %v3392
        %v3394 = vpop.f32.mrf.mxu0
        %v3395 = vadd.f32 0.0, %v3394
        %3396 = vmatmul.bf16.gmra.mxu0 %v932
        %v3397 = vpop.f32.mrf.mxu0
        %v3398 = vadd.f32 0.0, %v3397
        %v3399 = vpop.f32.mrf.mxu0
        %v3400 = vadd.f32 0.0, %v3399
        %3401 = vmatmul.bf16.gmra.mxu0 %v935
        %v3402 = vpop.f32.mrf.mxu0
        %v3403 = vadd.f32 0.0, %v3402
        %v3404 = vpop.f32.mrf.mxu0
        %v3405 = vadd.f32 0.0, %v3404
        %3406 = vmatmul.bf16.gmra.mxu0 %v938
        %v3407 = vpop.f32.mrf.mxu0
        %v3408 = vadd.f32 0.0, %v3407
        %v3409 = vpop.f32.mrf.mxu0
        %v3410 = vadd.f32 0.0, %v3409
        %3411 = vmatmul.bf16.gmra.mxu0 %v941
        %v3412 = vpop.f32.mrf.mxu0
        %v3413 = vadd.f32 0.0, %v3412
        %v3414 = vpop.f32.mrf.mxu0
        %v3415 = vadd.f32 0.0, %v3414
        %3416 = vdwg.mxu0
        %3417 = vmatpush.bf16.msra.mxu0 0
        %3418 = vmatpush.bf16.msra.mxu0 0
        %3419 = vmatpush.bf16.msra.mxu0 0
        %3420 = vmatpush.bf16.msra.mxu0 0
        %3421 = vmatpush.bf16.msra.mxu0 0
        %3422 = vmatpush.bf16.msra.mxu0 0
        %3423 = vmatpush.bf16.msra.mxu0 0
        %3424 = vmatpush.bf16.msra.mxu0 %v3326
        %3425 = vmatmul.bf16.gmra.mxu0 %v896
        %v3426 = vpop.f32.mrf.mxu0
        %v3427 = vadd.f32 0.0, %v3426
        %v3428 = vpop.f32.mrf.mxu0
        %v3429 = vadd.f32 0.0, %v3428
        %3430 = vmatmul.bf16.gmra.mxu0 %v899
        %v3431 = vpop.f32.mrf.mxu0
        %v3432 = vadd.f32 0.0, %v3431
        %v3433 = vpop.f32.mrf.mxu0
        %v3434 = vadd.f32 0.0, %v3433
        %3435 = vmatmul.bf16.gmra.mxu0 %v902
        %v3436 = vpop.f32.mrf.mxu0
        %v3437 = vadd.f32 0.0, %v3436
        %v3438 = vpop.f32.mrf.mxu0
        %v3439 = vadd.f32 0.0, %v3438
        %3440 = vmatmul.bf16.gmra.mxu0 %v905
        %v3441 = vpop.f32.mrf.mxu0
        %v3442 = vadd.f32 0.0, %v3441
        %v3443 = vpop.f32.mrf.mxu0
        %v3444 = vadd.f32 0.0, %v3443
        %3445 = vmatmul.bf16.gmra.mxu0 %v908
        %v3446 = vpop.f32.mrf.mxu0
        %v3447 = vadd.f32 0.0, %v3446
        %v3448 = vpop.f32.mrf.mxu0
        %v3449 = vadd.f32 0.0, %v3448
        %3450 = vmatmul.bf16.gmra.mxu0 %v911
        %v3451 = vpop.f32.mrf.mxu0
        %v3452 = vadd.f32 0.0, %v3451
        %v3453 = vpop.f32.mrf.mxu0
        %v3454 = vadd.f32 0.0, %v3453
        %3455 = vmatmul.bf16.gmra.mxu0 %v914
        %v3456 = vpop.f32.mrf.mxu0
        %v3457 = vadd.f32 0.0, %v3456
        %v3458 = vpop.f32.mrf.mxu0
        %v3459 = vadd.f32 0.0, %v3458
        %3460 = vmatmul.bf16.gmra.mxu0 %v917
        %v3461 = vpop.f32.mrf.mxu0
        %v3462 = vadd.f32 0.0, %v3461
        %v3463 = vpop.f32.mrf.mxu0
        %v3464 = vadd.f32 0.0, %v3463
        %3465 = vmatmul.bf16.gmra.mxu0 %v920
        %v3466 = vpop.f32.mrf.mxu0
        %v3467 = vadd.f32 0.0, %v3466
        %v3468 = vpop.f32.mrf.mxu0
        %v3469 = vadd.f32 0.0, %v3468
        %3470 = vmatmul.bf16.gmra.mxu0 %v923
        %v3471 = vpop.f32.mrf.mxu0
        %v3472 = vadd.f32 0.0, %v3471
        %v3473 = vpop.f32.mrf.mxu0
        %v3474 = vadd.f32 0.0, %v3473
        %3475 = vmatmul.bf16.gmra.mxu0 %v926
        %v3476 = vpop.f32.mrf.mxu0
        %v3477 = vadd.f32 0.0, %v3476
        %v3478 = vpop.f32.mrf.mxu0
        %v3479 = vadd.f32 0.0, %v3478
        %3480 = vmatmul.bf16.gmra.mxu0 %v929
        %v3481 = vpop.f32.mrf.mxu0
        %v3482 = vadd.f32 0.0, %v3481
        %v3483 = vpop.f32.mrf.mxu0
        %v3484 = vadd.f32 0.0, %v3483
        %3485 = vmatmul.bf16.gmra.mxu0 %v932
        %v3486 = vpop.f32.mrf.mxu0
        %v3487 = vadd.f32 0.0, %v3486
        %v3488 = vpop.f32.mrf.mxu0
        %v3489 = vadd.f32 0.0, %v3488
        %3490 = vmatmul.bf16.gmra.mxu0 %v935
        %v3491 = vpop.f32.mrf.mxu0
        %v3492 = vadd.f32 0.0, %v3491
        %v3493 = vpop.f32.mrf.mxu0
        %v3494 = vadd.f32 0.0, %v3493
        %3495 = vmatmul.bf16.gmra.mxu0 %v938
        %v3496 = vpop.f32.mrf.mxu0
        %v3497 = vadd.f32 0.0, %v3496
        %v3498 = vpop.f32.mrf.mxu0
        %v3499 = vadd.f32 0.0, %v3498
        %3500 = vmatmul.bf16.gmra.mxu0 %v941
        %v3501 = vpop.f32.mrf.mxu0
        %v3502 = vadd.f32 0.0, %v3501
        %v3503 = vpop.f32.mrf.mxu0
        %v3504 = vadd.f32 0.0, %v3503
        %3505 = vdwg.mxu0
        %3507 = vst [vmem:[#allocation1] ss:$4 sm:$0xff] %v3315
        %v3508 = vld.sshfl [vmem:[#allocation1] sm:$0xff pattern:$0x73625140]
        %v3509 = vld.sshfl [vmem:[#allocation1 + $0x8] sm:$0xff pattern:$0x73625140]
        %v3510 = vsel %vm1181, %v3508, 0
        %v3512 = vsel %vm1181, %v3509, 0
        %3514 = vmatpush.bf16.msra.mxu0 0
        %3515 = vmatpush.bf16.msra.mxu0 0
        %3516 = vmatpush.bf16.msra.mxu0 0
        %3517 = vmatpush.bf16.msra.mxu0 0
        %3518 = vmatpush.bf16.msra.mxu0 0
        %3519 = vmatpush.bf16.msra.mxu0 0
        %3520 = vmatpush.bf16.msra.mxu0 0
        %3521 = vmatpush.bf16.msra.mxu0 %v3510
        %3522 = vmatmul.bf16.gmra.mxu0 %v1134
        %v3523 = vpop.f32.mrf.mxu0
        %v3524 = vadd.f32 %v3338, %v3523
        %v3525 = vpop.f32.mrf.mxu0
        %v3526 = vadd.f32 %v3340, %v3525
        %3527 = vmatmul.bf16.gmra.mxu0 %v1137
        %v3528 = vpop.f32.mrf.mxu0
        %v3529 = vadd.f32 %v3343, %v3528
        %v3530 = vpop.f32.mrf.mxu0
        %v3531 = vadd.f32 %v3345, %v3530
        %3532 = vmatmul.bf16.gmra.mxu0 %v1140
        %v3533 = vpop.f32.mrf.mxu0
        %v3534 = vadd.f32 %v3348, %v3533
        %v3535 = vpop.f32.mrf.mxu0
        %v3536 = vadd.f32 %v3350, %v3535
        %3537 = vmatmul.bf16.gmra.mxu0 %v1143
        %v3538 = vpop.f32.mrf.mxu0
        %v3539 = vadd.f32 %v3353, %v3538
        %v3540 = vpop.f32.mrf.mxu0
        %v3541 = vadd.f32 %v3355, %v3540
        %3542 = vmatmul.bf16.gmra.mxu0 %v1146
        %v3543 = vpop.f32.mrf.mxu0
        %v3544 = vadd.f32 %v3358, %v3543
        %v3545 = vpop.f32.mrf.mxu0
        %v3546 = vadd.f32 %v3360, %v3545
        %3547 = vmatmul.bf16.gmra.mxu0 %v1149
        %v3548 = vpop.f32.mrf.mxu0
        %v3549 = vadd.f32 %v3363, %v3548
        %v3550 = vpop.f32.mrf.mxu0
        %v3551 = vadd.f32 %v3365, %v3550
        %3552 = vmatmul.bf16.gmra.mxu0 %v1152
        %v3553 = vpop.f32.mrf.mxu0
        %v3554 = vadd.f32 %v3368, %v3553
        %v3555 = vpop.f32.mrf.mxu0
        %v3556 = vadd.f32 %v3370, %v3555
        %3557 = vmatmul.bf16.gmra.mxu0 %v1155
        %v3558 = vpop.f32.mrf.mxu0
        %v3559 = vadd.f32 %v3373, %v3558
        %v3560 = vpop.f32.mrf.mxu0
        %v3561 = vadd.f32 %v3375, %v3560
        %3562 = vmatmul.bf16.gmra.mxu0 %v1158
        %v3563 = vpop.f32.mrf.mxu0
        %v3564 = vadd.f32 %v3378, %v3563
        %v3565 = vpop.f32.mrf.mxu0
        %v3566 = vadd.f32 %v3380, %v3565
        %3567 = vmatmul.bf16.gmra.mxu0 %v1161
        %v3568 = vpop.f32.mrf.mxu0
        %v3569 = vadd.f32 %v3383, %v3568
        %v3570 = vpop.f32.mrf.mxu0
        %v3571 = vadd.f32 %v3385, %v3570
        %3572 = vmatmul.bf16.gmra.mxu0 %v1164
        %v3573 = vpop.f32.mrf.mxu0
        %v3574 = vadd.f32 %v3388, %v3573
        %v3575 = vpop.f32.mrf.mxu0
        %v3576 = vadd.f32 %v3390, %v3575
        %3577 = vmatmul.bf16.gmra.mxu0 %v1167
        %v3578 = vpop.f32.mrf.mxu0
        %v3579 = vadd.f32 %v3393, %v3578
        %v3580 = vpop.f32.mrf.mxu0
        %v3581 = vadd.f32 %v3395, %v3580
        %3582 = vmatmul.bf16.gmra.mxu0 %v1170
        %v3583 = vpop.f32.mrf.mxu0
        %v3584 = vadd.f32 %v3398, %v3583
        %v3585 = vpop.f32.mrf.mxu0
        %v3586 = vadd.f32 %v3400, %v3585
        %3587 = vmatmul.bf16.gmra.mxu0 %v1173
        %v3588 = vpop.f32.mrf.mxu0
        %v3589 = vadd.f32 %v3403, %v3588
        %v3590 = vpop.f32.mrf.mxu0
        %v3591 = vadd.f32 %v3405, %v3590
        %3592 = vmatmul.bf16.gmra.mxu0 %v1176
        %v3593 = vpop.f32.mrf.mxu0
        %v3594 = vadd.f32 %v3408, %v3593
        %v3595 = vpop.f32.mrf.mxu0
        %v3596 = vadd.f32 %v3410, %v3595
        %3597 = vmatmul.bf16.gmra.mxu0 %v1179
        %v3598 = vpop.f32.mrf.mxu0
        %v3599 = vadd.f32 %v3413, %v3598
        %v3600 = vpop.f32.mrf.mxu0
        %v3601 = vadd.f32 %v3415, %v3600
        %3602 = vdwg.mxu0
        %3603 = vmatpush.bf16.msra.mxu0 0
        %3604 = vmatpush.bf16.msra.mxu0 0
        %3605 = vmatpush.bf16.msra.mxu0 0
        %3606 = vmatpush.bf16.msra.mxu0 0
        %3607 = vmatpush.bf16.msra.mxu0 0
        %3608 = vmatpush.bf16.msra.mxu0 0
        %3609 = vmatpush.bf16.msra.mxu0 0
        %3610 = vmatpush.bf16.msra.mxu0 %v3512
        %3611 = vmatmul.bf16.gmra.mxu0 %v1134
        %v3612 = vpop.f32.mrf.mxu0
        %v3613 = vadd.f32 %v3427, %v3612
        %v3614 = vpop.f32.mrf.mxu0
        %v3615 = vadd.f32 %v3429, %v3614
        %3616 = vmatmul.bf16.gmra.mxu0 %v1137
        %v3617 = vpop.f32.mrf.mxu0
        %v3618 = vadd.f32 %v3432, %v3617
        %v3619 = vpop.f32.mrf.mxu0
        %v3620 = vadd.f32 %v3434, %v3619
        %3621 = vmatmul.bf16.gmra.mxu0 %v1140
        %v3622 = vpop.f32.mrf.mxu0
        %v3623 = vadd.f32 %v3437, %v3622
        %v3624 = vpop.f32.mrf.mxu0
        %v3625 = vadd.f32 %v3439, %v3624
        %3626 = vmatmul.bf16.gmra.mxu0 %v1143
        %v3627 = vpop.f32.mrf.mxu0
        %v3628 = vadd.f32 %v3442, %v3627
        %v3629 = vpop.f32.mrf.mxu0
        %v3630 = vadd.f32 %v3444, %v3629
        %3631 = vmatmul.bf16.gmra.mxu0 %v1146
        %v3632 = vpop.f32.mrf.mxu0
        %v3633 = vadd.f32 %v3447, %v3632
        %v3634 = vpop.f32.mrf.mxu0
        %v3635 = vadd.f32 %v3449, %v3634
        %3636 = vmatmul.bf16.gmra.mxu0 %v1149
        %v3637 = vpop.f32.mrf.mxu0
        %v3638 = vadd.f32 %v3452, %v3637
        %v3639 = vpop.f32.mrf.mxu0
        %v3640 = vadd.f32 %v3454, %v3639
        %3641 = vmatmul.bf16.gmra.mxu0 %v1152
        %v3642 = vpop.f32.mrf.mxu0
        %v3643 = vadd.f32 %v3457, %v3642
        %v3644 = vpop.f32.mrf.mxu0
        %v3645 = vadd.f32 %v3459, %v3644
        %3646 = vmatmul.bf16.gmra.mxu0 %v1155
        %v3647 = vpop.f32.mrf.mxu0
        %v3648 = vadd.f32 %v3462, %v3647
        %v3649 = vpop.f32.mrf.mxu0
        %v3650 = vadd.f32 %v3464, %v3649
        %3651 = vmatmul.bf16.gmra.mxu0 %v1158
        %v3652 = vpop.f32.mrf.mxu0
        %v3653 = vadd.f32 %v3467, %v3652
        %v3654 = vpop.f32.mrf.mxu0
        %v3655 = vadd.f32 %v3469, %v3654
        %3656 = vmatmul.bf16.gmra.mxu0 %v1161
        %v3657 = vpop.f32.mrf.mxu0
        %v3658 = vadd.f32 %v3472, %v3657
        %v3659 = vpop.f32.mrf.mxu0
        %v3660 = vadd.f32 %v3474, %v3659
        %3661 = vmatmul.bf16.gmra.mxu0 %v1164
        %v3662 = vpop.f32.mrf.mxu0
        %v3663 = vadd.f32 %v3477, %v3662
        %v3664 = vpop.f32.mrf.mxu0
        %v3665 = vadd.f32 %v3479, %v3664
        %3666 = vmatmul.bf16.gmra.mxu0 %v1167
        %v3667 = vpop.f32.mrf.mxu0
        %v3668 = vadd.f32 %v3482, %v3667
        %v3669 = vpop.f32.mrf.mxu0
        %v3670 = vadd.f32 %v3484, %v3669
        %3671 = vmatmul.bf16.gmra.mxu0 %v1170
        %v3672 = vpop.f32.mrf.mxu0
        %v3673 = vadd.f32 %v3487, %v3672
        %v3674 = vpop.f32.mrf.mxu0
        %v3675 = vadd.f32 %v3489, %v3674
        %3676 = vmatmul.bf16.gmra.mxu0 %v1173
        %v3677 = vpop.f32.mrf.mxu0
        %v3678 = vadd.f32 %v3492, %v3677
        %v3679 = vpop.f32.mrf.mxu0
        %v3680 = vadd.f32 %v3494, %v3679
        %3681 = vmatmul.bf16.gmra.mxu0 %v1176
        %v3682 = vpop.f32.mrf.mxu0
        %v3683 = vadd.f32 %v3497, %v3682
        %v3684 = vpop.f32.mrf.mxu0
        %v3685 = vadd.f32 %v3499, %v3684
        %3686 = vmatmul.bf16.gmra.mxu0 %v1179
        %v3687 = vpop.f32.mrf.mxu0
        %v3688 = vadd.f32 %v3502, %v3687
        %v3689 = vpop.f32.mrf.mxu0
        %v3690 = vadd.f32 %v3504, %v3689
        %3691 = vdwg.mxu0
        %v3692 = vld [vmem:[%s7 + $0x8] sm:$0xf]
        %3694 = vst [vmem:[#allocation1] ss:$4 sm:$0xff] %v3692
        %v3695 = vld.sshfl [vmem:[#allocation1] sm:$0xff pattern:$0x73625140]
        %v3696 = vld.sshfl [vmem:[#allocation1 + $0x8] sm:$0xff pattern:$0x73625140]
        %v3697 = vsel %vm1181, %v3695, 0
        %v3699 = vsel %vm1181, %v3696, 0
        %3701 = vmatpush.bf16.msra.mxu0 0
        %3702 = vmatpush.bf16.msra.mxu0 0
        %3703 = vmatpush.bf16.msra.mxu0 0
        %3704 = vmatpush.bf16.msra.mxu0 0
        %3705 = vmatpush.bf16.msra.mxu0 0
        %3706 = vmatpush.bf16.msra.mxu0 0
        %3707 = vmatpush.bf16.msra.mxu0 0
        %3708 = vmatpush.bf16.msra.mxu0 %v3697
        %3709 = vmatmul.bf16.gmra.mxu0 %v1450
        %v3710 = vpop.f32.mrf.mxu0
        %v3711 = vadd.f32 0.0, %v3710
        %v3712 = vpop.f32.mrf.mxu0
        %v3713 = vadd.f32 0.0, %v3712
        %3714 = vmatmul.bf16.gmra.mxu0 %v1453
        %v3715 = vpop.f32.mrf.mxu0
        %v3716 = vadd.f32 0.0, %v3715
        %v3717 = vpop.f32.mrf.mxu0
        %v3718 = vadd.f32 0.0, %v3717
        %3719 = vmatmul.bf16.gmra.mxu0 %v1456
        %v3720 = vpop.f32.mrf.mxu0
        %v3721 = vadd.f32 0.0, %v3720
        %v3722 = vpop.f32.mrf.mxu0
        %v3723 = vadd.f32 0.0, %v3722
        %3724 = vmatmul.bf16.gmra.mxu0 %v1459
        %v3725 = vpop.f32.mrf.mxu0
        %v3726 = vadd.f32 0.0, %v3725
        %v3727 = vpop.f32.mrf.mxu0
        %v3728 = vadd.f32 0.0, %v3727
        %3729 = vmatmul.bf16.gmra.mxu0 %v1462
        %v3730 = vpop.f32.mrf.mxu0
        %v3731 = vadd.f32 0.0, %v3730
        %v3732 = vpop.f32.mrf.mxu0
        %v3733 = vadd.f32 0.0, %v3732
        %3734 = vmatmul.bf16.gmra.mxu0 %v1465
        %v3735 = vpop.f32.mrf.mxu0
        %v3736 = vadd.f32 0.0, %v3735
        %v3737 = vpop.f32.mrf.mxu0
        %v3738 = vadd.f32 0.0, %v3737
        %3739 = vmatmul.bf16.gmra.mxu0 %v1468
        %v3740 = vpop.f32.mrf.mxu0
        %v3741 = vadd.f32 0.0, %v3740
        %v3742 = vpop.f32.mrf.mxu0
        %v3743 = vadd.f32 0.0, %v3742
        %3744 = vmatmul.bf16.gmra.mxu0 %v1471
        %v3745 = vpop.f32.mrf.mxu0
        %v3746 = vadd.f32 0.0, %v3745
        %v3747 = vpop.f32.mrf.mxu0
        %v3748 = vadd.f32 0.0, %v3747
        %3749 = vmatmul.bf16.gmra.mxu0 %v1474
        %v3750 = vpop.f32.mrf.mxu0
        %v3751 = vadd.f32 0.0, %v3750
        %v3752 = vpop.f32.mrf.mxu0
        %v3753 = vadd.f32 0.0, %v3752
        %3754 = vmatmul.bf16.gmra.mxu0 %v1477
        %v3755 = vpop.f32.mrf.mxu0
        %v3756 = vadd.f32 0.0, %v3755
        %v3757 = vpop.f32.mrf.mxu0
        %v3758 = vadd.f32 0.0, %v3757
        %3759 = vmatmul.bf16.gmra.mxu0 %v1480
        %v3760 = vpop.f32.mrf.mxu0
        %v3761 = vadd.f32 0.0, %v3760
        %v3762 = vpop.f32.mrf.mxu0
        %v3763 = vadd.f32 0.0, %v3762
        %3764 = vmatmul.bf16.gmra.mxu0 %v1483
        %v3765 = vpop.f32.mrf.mxu0
        %v3766 = vadd.f32 0.0, %v3765
        %v3767 = vpop.f32.mrf.mxu0
        %v3768 = vadd.f32 0.0, %v3767
        %3769 = vmatmul.bf16.gmra.mxu0 %v1486
        %v3770 = vpop.f32.mrf.mxu0
        %v3771 = vadd.f32 0.0, %v3770
        %v3772 = vpop.f32.mrf.mxu0
        %v3773 = vadd.f32 0.0, %v3772
        %3774 = vmatmul.bf16.gmra.mxu0 %v1489
        %v3775 = vpop.f32.mrf.mxu0
        %v3776 = vadd.f32 0.0, %v3775
        %v3777 = vpop.f32.mrf.mxu0
        %v3778 = vadd.f32 0.0, %v3777
        %3779 = vmatmul.bf16.gmra.mxu0 %v1492
        %v3780 = vpop.f32.mrf.mxu0
        %v3781 = vadd.f32 0.0, %v3780
        %v3782 = vpop.f32.mrf.mxu0
        %v3783 = vadd.f32 0.0, %v3782
        %3784 = vmatmul.bf16.gmra.mxu0 %v1495
        %v3785 = vpop.f32.mrf.mxu0
        %v3786 = vadd.f32 0.0, %v3785
        %v3787 = vpop.f32.mrf.mxu0
        %v3788 = vadd.f32 0.0, %v3787
        %3789 = vdwg.mxu0
        %3790 = vmatpush.bf16.msra.mxu0 0
        %3791 = vmatpush.bf16.msra.mxu0 0
        %3792 = vmatpush.bf16.msra.mxu0 0
        %3793 = vmatpush.bf16.msra.mxu0 0
        %3794 = vmatpush.bf16.msra.mxu0 0
        %3795 = vmatpush.bf16.msra.mxu0 0
        %3796 = vmatpush.bf16.msra.mxu0 0
        %3797 = vmatpush.bf16.msra.mxu0 %v3699
        %3798 = vmatmul.bf16.gmra.mxu0 %v1450
        %v3799 = vpop.f32.mrf.mxu0
        %v3800 = vadd.f32 0.0, %v3799
        %v3801 = vpop.f32.mrf.mxu0
        %v3802 = vadd.f32 0.0, %v3801
        %3803 = vmatmul.bf16.gmra.mxu0 %v1453
        %v3804 = vpop.f32.mrf.mxu0
        %v3805 = vadd.f32 0.0, %v3804
        %v3806 = vpop.f32.mrf.mxu0
        %v3807 = vadd.f32 0.0, %v3806
        %3808 = vmatmul.bf16.gmra.mxu0 %v1456
        %v3809 = vpop.f32.mrf.mxu0
        %v3810 = vadd.f32 0.0, %v3809
        %v3811 = vpop.f32.mrf.mxu0
        %v3812 = vadd.f32 0.0, %v3811
        %3813 = vmatmul.bf16.gmra.mxu0 %v1459
        %v3814 = vpop.f32.mrf.mxu0
        %v3815 = vadd.f32 0.0, %v3814
        %v3816 = vpop.f32.mrf.mxu0
        %v3817 = vadd.f32 0.0, %v3816
        %3818 = vmatmul.bf16.gmra.mxu0 %v1462
        %v3819 = vpop.f32.mrf.mxu0
        %v3820 = vadd.f32 0.0, %v3819
        %v3821 = vpop.f32.mrf.mxu0
        %v3822 = vadd.f32 0.0, %v3821
        %3823 = vmatmul.bf16.gmra.mxu0 %v1465
        %v3824 = vpop.f32.mrf.mxu0
        %v3825 = vadd.f32 0.0, %v3824
        %v3826 = vpop.f32.mrf.mxu0
        %v3827 = vadd.f32 0.0, %v3826
        %3828 = vmatmul.bf16.gmra.mxu0 %v1468
        %v3829 = vpop.f32.mrf.mxu0
        %v3830 = vadd.f32 0.0, %v3829
        %v3831 = vpop.f32.mrf.mxu0
        %v3832 = vadd.f32 0.0, %v3831
        %3833 = vmatmul.bf16.gmra.mxu0 %v1471
        %v3834 = vpop.f32.mrf.mxu0
        %v3835 = vadd.f32 0.0, %v3834
        %v3836 = vpop.f32.mrf.mxu0
        %v3837 = vadd.f32 0.0, %v3836
        %3838 = vmatmul.bf16.gmra.mxu0 %v1474
        %v3839 = vpop.f32.mrf.mxu0
        %v3840 = vadd.f32 0.0, %v3839
        %v3841 = vpop.f32.mrf.mxu0
        %v3842 = vadd.f32 0.0, %v3841
        %3843 = vmatmul.bf16.gmra.mxu0 %v1477
        %v3844 = vpop.f32.mrf.mxu0
        %v3845 = vadd.f32 0.0, %v3844
        %v3846 = vpop.f32.mrf.mxu0
        %v3847 = vadd.f32 0.0, %v3846
        %3848 = vmatmul.bf16.gmra.mxu0 %v1480
        %v3849 = vpop.f32.mrf.mxu0
        %v3850 = vadd.f32 0.0, %v3849
        %v3851 = vpop.f32.mrf.mxu0
        %v3852 = vadd.f32 0.0, %v3851
        %3853 = vmatmul.bf16.gmra.mxu0 %v1483
        %v3854 = vpop.f32.mrf.mxu0
        %v3855 = vadd.f32 0.0, %v3854
        %v3856 = vpop.f32.mrf.mxu0
        %v3857 = vadd.f32 0.0, %v3856
        %3858 = vmatmul.bf16.gmra.mxu0 %v1486
        %v3859 = vpop.f32.mrf.mxu0
        %v3860 = vadd.f32 0.0, %v3859
        %v3861 = vpop.f32.mrf.mxu0
        %v3862 = vadd.f32 0.0, %v3861
        %3863 = vmatmul.bf16.gmra.mxu0 %v1489
        %v3864 = vpop.f32.mrf.mxu0
        %v3865 = vadd.f32 0.0, %v3864
        %v3866 = vpop.f32.mrf.mxu0
        %v3867 = vadd.f32 0.0, %v3866
        %3868 = vmatmul.bf16.gmra.mxu0 %v1492
        %v3869 = vpop.f32.mrf.mxu0
        %v3870 = vadd.f32 0.0, %v3869
        %v3871 = vpop.f32.mrf.mxu0
        %v3872 = vadd.f32 0.0, %v3871
        %3873 = vmatmul.bf16.gmra.mxu0 %v1495
        %v3874 = vpop.f32.mrf.mxu0
        %v3875 = vadd.f32 0.0, %v3874
        %v3876 = vpop.f32.mrf.mxu0
        %v3877 = vadd.f32 0.0, %v3876
        %3878 = vdwg.mxu0
        %v3879 = vadd.f32 %v3524, %v3711
        %v3880 = vadd.f32 %v3613, %v3800
        %v3881 = vadd.f32 %v3526, %v3713
        %v3882 = vadd.f32 %v3615, %v3802
        %v3883 = vadd.f32 %v3529, %v3716
        %v3884 = vadd.f32 %v3618, %v3805
        %v3885 = vadd.f32 %v3531, %v3718
        %v3886 = vadd.f32 %v3620, %v3807
        %v3887 = vadd.f32 %v3534, %v3721
        %v3888 = vadd.f32 %v3623, %v3810
        %v3889 = vadd.f32 %v3536, %v3723
        %v3890 = vadd.f32 %v3625, %v3812
        %v3891 = vadd.f32 %v3539, %v3726
        %v3892 = vadd.f32 %v3628, %v3815
        %v3893 = vadd.f32 %v3541, %v3728
        %v3894 = vadd.f32 %v3630, %v3817
        %v3895 = vadd.f32 %v3544, %v3731
        %v3896 = vadd.f32 %v3633, %v3820
        %v3897 = vadd.f32 %v3546, %v3733
        %v3898 = vadd.f32 %v3635, %v3822
        %v3899 = vadd.f32 %v3549, %v3736
        %v3900 = vadd.f32 %v3638, %v3825
        %v3901 = vadd.f32 %v3551, %v3738
        %v3902 = vadd.f32 %v3640, %v3827
        %v3903 = vadd.f32 %v3554, %v3741
        %v3904 = vadd.f32 %v3643, %v3830
        %v3905 = vadd.f32 %v3556, %v3743
        %v3906 = vadd.f32 %v3645, %v3832
        %v3907 = vadd.f32 %v3559, %v3746
        %v3908 = vadd.f32 %v3648, %v3835
        %v3909 = vadd.f32 %v3561, %v3748
        %v3910 = vadd.f32 %v3650, %v3837
        %v3911 = vadd.f32 %v3564, %v3751
        %v3912 = vadd.f32 %v3653, %v3840
        %v3913 = vadd.f32 %v3566, %v3753
        %v3914 = vadd.f32 %v3655, %v3842
        %v3915 = vadd.f32 %v3569, %v3756
        %v3916 = vadd.f32 %v3658, %v3845
        %v3917 = vadd.f32 %v3571, %v3758
        %v3918 = vadd.f32 %v3660, %v3847
        %v3919 = vadd.f32 %v3574, %v3761
        %v3920 = vadd.f32 %v3663, %v3850
        %v3921 = vadd.f32 %v3576, %v3763
        %v3922 = vadd.f32 %v3665, %v3852
        %v3923 = vadd.f32 %v3579, %v3766
        %v3924 = vadd.f32 %v3668, %v3855
        %v3925 = vadd.f32 %v3581, %v3768
        %v3926 = vadd.f32 %v3670, %v3857
        %v3927 = vadd.f32 %v3584, %v3771
        %v3928 = vadd.f32 %v3673, %v3860
        %v3929 = vadd.f32 %v3586, %v3773
        %v3930 = vadd.f32 %v3675, %v3862
        %v3931 = vadd.f32 %v3589, %v3776
        %v3932 = vadd.f32 %v3678, %v3865
        %v3933 = vadd.f32 %v3591, %v3778
        %v3934 = vadd.f32 %v3680, %v3867
        %v3935 = vadd.f32 %v3594, %v3781
        %v3936 = vadd.f32 %v3683, %v3870
        %v3937 = vadd.f32 %v3596, %v3783
        %v3938 = vadd.f32 %v3685, %v3872
        %v3939 = vadd.f32 %v3599, %v3786
        %v3940 = vadd.f32 %v3688, %v3875
        %v3941 = vadd.f32 %v3601, %v3788
        %v3942 = vadd.f32 %v3690, %v3877
        %v3943 = vld [vmem:[%s8 + $0x4] sm:$0x3]
        %v3945 = vperm.slane %v3943, 0
        %v3946 = vperm.slane %v3943, 1
        %v3949 = vadd.f32 %v3879, %v3945
        %v3950 = vadd.f32 %v3880, %v3946
        %v3951 = vadd.f32 %v3881, %v3945
        %v3952 = vadd.f32 %v3882, %v3946
        %v3953 = vadd.f32 %v3883, %v3945
        %v3954 = vadd.f32 %v3884, %v3946
        %v3955 = vadd.f32 %v3885, %v3945
        %v3956 = vadd.f32 %v3886, %v3946
        %v3957 = vadd.f32 %v3887, %v3945
        %v3958 = vadd.f32 %v3888, %v3946
        %v3959 = vadd.f32 %v3889, %v3945
        %v3960 = vadd.f32 %v3890, %v3946
        %v3961 = vadd.f32 %v3891, %v3945
        %v3962 = vadd.f32 %v3892, %v3946
        %v3963 = vadd.f32 %v3893, %v3945
        %v3964 = vadd.f32 %v3894, %v3946
        %v3965 = vadd.f32 %v3895, %v3945
        %v3966 = vadd.f32 %v3896, %v3946
        %v3967 = vadd.f32 %v3897, %v3945
        %v3968 = vadd.f32 %v3898, %v3946
        %v3969 = vadd.f32 %v3899, %v3945
        %v3970 = vadd.f32 %v3900, %v3946
        %v3971 = vadd.f32 %v3901, %v3945
        %v3972 = vadd.f32 %v3902, %v3946
        %v3973 = vadd.f32 %v3903, %v3945
        %v3974 = vadd.f32 %v3904, %v3946
        %v3975 = vadd.f32 %v3905, %v3945
        %v3976 = vadd.f32 %v3906, %v3946
        %v3977 = vadd.f32 %v3907, %v3945
        %v3978 = vadd.f32 %v3908, %v3946
        %v3979 = vadd.f32 %v3909, %v3945
        %v3980 = vadd.f32 %v3910, %v3946
        %v3981 = vadd.f32 %v3911, %v3945
        %v3982 = vadd.f32 %v3912, %v3946
        %v3983 = vadd.f32 %v3913, %v3945
        %v3984 = vadd.f32 %v3914, %v3946
        %v3985 = vadd.f32 %v3915, %v3945
        %v3986 = vadd.f32 %v3916, %v3946
        %v3987 = vadd.f32 %v3917, %v3945
        %v3988 = vadd.f32 %v3918, %v3946
        %v3989 = vadd.f32 %v3919, %v3945
        %v3990 = vadd.f32 %v3920, %v3946
        %v3991 = vadd.f32 %v3921, %v3945
        %v3992 = vadd.f32 %v3922, %v3946
        %v3993 = vadd.f32 %v3923, %v3945
        %v3994 = vadd.f32 %v3924, %v3946
        %v3995 = vadd.f32 %v3925, %v3945
        %v3996 = vadd.f32 %v3926, %v3946
        %v3997 = vadd.f32 %v3927, %v3945
        %v3998 = vadd.f32 %v3928, %v3946
        %v3999 = vadd.f32 %v3929, %v3945
        %v4000 = vadd.f32 %v3930, %v3946
        %v4001 = vadd.f32 %v3931, %v3945
        %v4002 = vadd.f32 %v3932, %v3946
        %v4003 = vadd.f32 %v3933, %v3945
        %v4004 = vadd.f32 %v3934, %v3946
        %v4005 = vadd.f32 %v3935, %v3945
        %v4006 = vadd.f32 %v3936, %v3946
        %v4007 = vadd.f32 %v3937, %v3945
        %v4008 = vadd.f32 %v3938, %v3946
        %v4009 = vadd.f32 %v3939, %v3945
        %v4010 = vadd.f32 %v3940, %v3946
        %v4011 = vadd.f32 %v3941, %v3945
        %v4012 = vadd.f32 %v3942, %v3946
        %v4013 = vmax.f32 %v3949, 0.0
        %v4014 = vmax.f32 %v3950, 0.0
        %v4015 = vmax.f32 %v3951, 0.0
        %v4016 = vmax.f32 %v3952, 0.0
        %v4017 = vmax.f32 %v3953, 0.0
        %v4018 = vmax.f32 %v3954, 0.0
        %v4019 = vmax.f32 %v3955, 0.0
        %v4020 = vmax.f32 %v3956, 0.0
        %v4021 = vmax.f32 %v3957, 0.0
        %v4022 = vmax.f32 %v3958, 0.0
        %v4023 = vmax.f32 %v3959, 0.0
        %v4024 = vmax.f32 %v3960, 0.0
        %v4025 = vmax.f32 %v3961, 0.0
        %v4026 = vmax.f32 %v3962, 0.0
        %v4027 = vmax.f32 %v3963, 0.0
        %v4028 = vmax.f32 %v3964, 0.0
        %v4029 = vmax.f32 %v3965, 0.0
        %v4030 = vmax.f32 %v3966, 0.0
        %v4031 = vmax.f32 %v3967, 0.0
        %v4032 = vmax.f32 %v3968, 0.0
        %v4033 = vmax.f32 %v3969, 0.0
        %v4034 = vmax.f32 %v3970, 0.0
        %v4035 = vmax.f32 %v3971, 0.0
        %v4036 = vmax.f32 %v3972, 0.0
        %v4037 = vmax.f32 %v3973, 0.0
        %v4038 = vmax.f32 %v3974, 0.0
        %v4039 = vmax.f32 %v3975, 0.0
        %v4040 = vmax.f32 %v3976, 0.0
        %v4041 = vmax.f32 %v3977, 0.0
        %v4042 = vmax.f32 %v3978, 0.0
        %v4043 = vmax.f32 %v3979, 0.0
        %v4044 = vmax.f32 %v3980, 0.0
        %v4045 = vmax.f32 %v3981, 0.0
        %v4046 = vmax.f32 %v3982, 0.0
        %v4047 = vmax.f32 %v3983, 0.0
        %v4048 = vmax.f32 %v3984, 0.0
        %v4049 = vmax.f32 %v3985, 0.0
        %v4050 = vmax.f32 %v3986, 0.0
        %v4051 = vmax.f32 %v3987, 0.0
        %v4052 = vmax.f32 %v3988, 0.0
        %v4053 = vmax.f32 %v3989, 0.0
        %v4054 = vmax.f32 %v3990, 0.0
        %v4055 = vmax.f32 %v3991, 0.0
        %v4056 = vmax.f32 %v3992, 0.0
        %v4057 = vmax.f32 %v3993, 0.0
        %v4058 = vmax.f32 %v3994, 0.0
        %v4059 = vmax.f32 %v3995, 0.0
        %v4060 = vmax.f32 %v3996, 0.0
        %v4061 = vmax.f32 %v3997, 0.0
        %v4062 = vmax.f32 %v3998, 0.0
        %v4063 = vmax.f32 %v3999, 0.0
        %v4064 = vmax.f32 %v4000, 0.0
        %v4065 = vmax.f32 %v4001, 0.0
        %v4066 = vmax.f32 %v4002, 0.0
        %v4067 = vmax.f32 %v4003, 0.0
        %v4068 = vmax.f32 %v4004, 0.0
        %v4069 = vmax.f32 %v4005, 0.0
        %v4070 = vmax.f32 %v4006, 0.0
        %v4071 = vmax.f32 %v4007, 0.0
        %v4072 = vmax.f32 %v4008, 0.0
        %v4073 = vmax.f32 %v4009, 0.0
        %v4074 = vmax.f32 %v4010, 0.0
        %v4075 = vmax.f32 %v4011, 0.0
        %v4076 = vmax.f32 %v4012, 0.0
        %v4077 = vpack.c.bf16 %v4015, %v4013
        %v4078 = vpack.c.bf16 %v4016, %v4014
        %v4079 = vpack.c.bf16 %v4019, %v4017
        %v4080 = vpack.c.bf16 %v4020, %v4018
        %v4081 = vpack.c.bf16 %v4023, %v4021
        %v4082 = vpack.c.bf16 %v4024, %v4022
        %v4083 = vpack.c.bf16 %v4027, %v4025
        %v4084 = vpack.c.bf16 %v4028, %v4026
        %v4085 = vpack.c.bf16 %v4031, %v4029
        %v4086 = vpack.c.bf16 %v4032, %v4030
        %v4087 = vpack.c.bf16 %v4035, %v4033
        %v4088 = vpack.c.bf16 %v4036, %v4034
        %v4089 = vpack.c.bf16 %v4039, %v4037
        %v4090 = vpack.c.bf16 %v4040, %v4038
        %v4091 = vpack.c.bf16 %v4043, %v4041
        %v4092 = vpack.c.bf16 %v4044, %v4042
        %v4093 = vpack.c.bf16 %v4047, %v4045
        %v4094 = vpack.c.bf16 %v4048, %v4046
        %v4095 = vpack.c.bf16 %v4051, %v4049
        %v4096 = vpack.c.bf16 %v4052, %v4050
        %v4097 = vpack.c.bf16 %v4055, %v4053
        %v4098 = vpack.c.bf16 %v4056, %v4054
        %v4099 = vpack.c.bf16 %v4059, %v4057
        %v4100 = vpack.c.bf16 %v4060, %v4058
        %v4101 = vpack.c.bf16 %v4063, %v4061
        %v4102 = vpack.c.bf16 %v4064, %v4062
        %v4103 = vpack.c.bf16 %v4067, %v4065
        %v4104 = vpack.c.bf16 %v4068, %v4066
        %v4105 = vpack.c.bf16 %v4071, %v4069
        %v4106 = vpack.c.bf16 %v4072, %v4070
        %v4107 = vpack.c.bf16 %v4075, %v4073
        %v4108 = vpack.c.bf16 %v4076, %v4074
        %v4109 = vld [vmem:[%s9 + $0x100] sm:$0xf]
        %v4110 = vld [vmem:[%s9 + $0x104] sm:$0xf]
        %v4111 = vld [vmem:[%s9 + $0x108] sm:$0xf]
        %v4112 = vld [vmem:[%s9 + $0x10c] sm:$0xf]
        %v4113 = vld [vmem:[%s9 + $0x110] sm:$0xf]
        %v4114 = vld [vmem:[%s9 + $0x114] sm:$0xf]
        %v4115 = vld [vmem:[%s9 + $0x118] sm:$0xf]
        %v4116 = vld [vmem:[%s9 + $0x11c] sm:$0xf]
        %v4117 = vld [vmem:[%s9 + $0x120] sm:$0xf]
        %v4118 = vld [vmem:[%s9 + $0x124] sm:$0xf]
        %v4119 = vld [vmem:[%s9 + $0x128] sm:$0xf]
        %v4120 = vld [vmem:[%s9 + $0x12c] sm:$0xf]
        %v4121 = vld [vmem:[%s9 + $0x130] sm:$0xf]
        %v4122 = vld [vmem:[%s9 + $0x134] sm:$0xf]
        %v4123 = vld [vmem:[%s9 + $0x138] sm:$0xf]
        %v4124 = vld [vmem:[%s9 + $0x13c] sm:$0xf]
        %v4125 = vld [vmem:[%s9 + $0x140] sm:$0xf]
        %v4126 = vld [vmem:[%s9 + $0x144] sm:$0xf]
        %v4127 = vld [vmem:[%s9 + $0x148] sm:$0xf]
        %v4128 = vld [vmem:[%s9 + $0x14c] sm:$0xf]
        %v4129 = vld [vmem:[%s9 + $0x150] sm:$0xf]
        %v4130 = vld [vmem:[%s9 + $0x154] sm:$0xf]
        %v4131 = vld [vmem:[%s9 + $0x158] sm:$0xf]
        %v4132 = vld [vmem:[%s9 + $0x15c] sm:$0xf]
        %v4133 = vld [vmem:[%s9 + $0x160] sm:$0xf]
        %v4134 = vld [vmem:[%s9 + $0x164] sm:$0xf]
        %v4135 = vld [vmem:[%s9 + $0x168] sm:$0xf]
        %v4136 = vld [vmem:[%s9 + $0x16c] sm:$0xf]
        %v4137 = vld [vmem:[%s9 + $0x170] sm:$0xf]
        %v4138 = vld [vmem:[%s9 + $0x174] sm:$0xf]
        %v4139 = vld [vmem:[%s9 + $0x178] sm:$0xf]
        %v4140 = vld [vmem:[%s9 + $0x17c] sm:$0xf]
        %v4173 = vunpack.c.l.b16 %v4109
        %v4174 = vunpack.c.l.b16 %v4110
        %v4175 = vunpack.c.l.b16 %v4111
        %v4176 = vunpack.c.l.b16 %v4112
        %v4177 = vunpack.c.l.b16 %v4113
        %v4178 = vunpack.c.l.b16 %v4114
        %v4179 = vunpack.c.l.b16 %v4115
        %v4180 = vunpack.c.l.b16 %v4116
        %v4181 = vunpack.c.l.b16 %v4117
        %v4182 = vunpack.c.l.b16 %v4118
        %v4183 = vunpack.c.l.b16 %v4119
        %v4184 = vunpack.c.l.b16 %v4120
        %v4185 = vunpack.c.l.b16 %v4121
        %v4186 = vunpack.c.l.b16 %v4122
        %v4187 = vunpack.c.l.b16 %v4123
        %v4188 = vunpack.c.l.b16 %v4124
        %v4189 = vunpack.c.l.b16 %v4125
        %v4190 = vunpack.c.l.b16 %v4126
        %v4191 = vunpack.c.l.b16 %v4127
        %v4192 = vunpack.c.l.b16 %v4128
        %v4193 = vunpack.c.l.b16 %v4129
        %v4194 = vunpack.c.l.b16 %v4130
        %v4195 = vunpack.c.l.b16 %v4131
        %v4196 = vunpack.c.l.b16 %v4132
        %v4197 = vunpack.c.l.b16 %v4133
        %v4198 = vunpack.c.l.b16 %v4134
        %v4199 = vunpack.c.l.b16 %v4135
        %v4200 = vunpack.c.l.b16 %v4136
        %v4201 = vunpack.c.l.b16 %v4137
        %v4202 = vunpack.c.l.b16 %v4138
        %v4203 = vunpack.c.l.b16 %v4139
        %v4204 = vunpack.c.l.b16 %v4140
        %v4205 = vpack.c.b16 %v4174, %v4173
        %v4206 = vpack.c.b16 %v4176, %v4175
        %v4207 = vpack.c.b16 %v4178, %v4177
        %v4208 = vpack.c.b16 %v4180, %v4179
        %v4209 = vpack.c.b16 %v4182, %v4181
        %v4210 = vpack.c.b16 %v4184, %v4183
        %v4211 = vpack.c.b16 %v4186, %v4185
        %v4212 = vpack.c.b16 %v4188, %v4187
        %v4213 = vpack.c.b16 %v4190, %v4189
        %v4214 = vpack.c.b16 %v4192, %v4191
        %v4215 = vpack.c.b16 %v4194, %v4193
        %v4216 = vpack.c.b16 %v4196, %v4195
        %v4217 = vpack.c.b16 %v4198, %v4197
        %v4218 = vpack.c.b16 %v4200, %v4199
        %v4219 = vpack.c.b16 %v4202, %v4201
        %v4220 = vpack.c.b16 %v4204, %v4203
        %4237 = vmatpush.bf16.msra.mxu0 %v4212
        %4238 = vmatpush.bf16.msra.mxu0 %v4211
        %4239 = vmatpush.bf16.msra.mxu0 %v4210
        %4240 = vmatpush.bf16.msra.mxu0 %v4209
        %4241 = vmatpush.bf16.msra.mxu0 %v4208
        %4242 = vmatpush.bf16.msra.mxu0 %v4207
        %4243 = vmatpush.bf16.msra.mxu0 %v4206
        %4244 = vmatpush.bf16.msra.mxu0 %v4205
        %4245 = vmatmul.bf16.gmra.mxu0 %v4077
        %v4246 = vpop.f32.mrf.mxu0
        %v4247 = vadd.f32 0.0, %v4246
        %v4248 = vpop.f32.mrf.mxu0
        %v4249 = vadd.f32 0.0, %v4248
        %4250 = vmatmul.bf16.gmra.mxu0 %v4079
        %v4251 = vpop.f32.mrf.mxu0
        %v4252 = vadd.f32 0.0, %v4251
        %v4253 = vpop.f32.mrf.mxu0
        %v4254 = vadd.f32 0.0, %v4253
        %4255 = vmatmul.bf16.gmra.mxu0 %v4081
        %v4256 = vpop.f32.mrf.mxu0
        %v4257 = vadd.f32 0.0, %v4256
        %v4258 = vpop.f32.mrf.mxu0
        %v4259 = vadd.f32 0.0, %v4258
        %4260 = vmatmul.bf16.gmra.mxu0 %v4083
        %v4261 = vpop.f32.mrf.mxu0
        %v4262 = vadd.f32 0.0, %v4261
        %v4263 = vpop.f32.mrf.mxu0
        %v4264 = vadd.f32 0.0, %v4263
        %4265 = vmatmul.bf16.gmra.mxu0 %v4085
        %v4266 = vpop.f32.mrf.mxu0
        %v4267 = vadd.f32 0.0, %v4266
        %v4268 = vpop.f32.mrf.mxu0
        %v4269 = vadd.f32 0.0, %v4268
        %4270 = vmatmul.bf16.gmra.mxu0 %v4087
        %v4271 = vpop.f32.mrf.mxu0
        %v4272 = vadd.f32 0.0, %v4271
        %v4273 = vpop.f32.mrf.mxu0
        %v4274 = vadd.f32 0.0, %v4273
        %4275 = vmatmul.bf16.gmra.mxu0 %v4089
        %v4276 = vpop.f32.mrf.mxu0
        %v4277 = vadd.f32 0.0, %v4276
        %v4278 = vpop.f32.mrf.mxu0
        %v4279 = vadd.f32 0.0, %v4278
        %4280 = vmatmul.bf16.gmra.mxu0 %v4091
        %v4281 = vpop.f32.mrf.mxu0
        %v4282 = vadd.f32 0.0, %v4281
        %v4283 = vpop.f32.mrf.mxu0
        %v4284 = vadd.f32 0.0, %v4283
        %4285 = vmatmul.bf16.gmra.mxu0 %v4093
        %v4286 = vpop.f32.mrf.mxu0
        %v4287 = vadd.f32 0.0, %v4286
        %v4288 = vpop.f32.mrf.mxu0
        %v4289 = vadd.f32 0.0, %v4288
        %4290 = vmatmul.bf16.gmra.mxu0 %v4095
        %v4291 = vpop.f32.mrf.mxu0
        %v4292 = vadd.f32 0.0, %v4291
        %v4293 = vpop.f32.mrf.mxu0
        %v4294 = vadd.f32 0.0, %v4293
        %4295 = vmatmul.bf16.gmra.mxu0 %v4097
        %v4296 = vpop.f32.mrf.mxu0
        %v4297 = vadd.f32 0.0, %v4296
        %v4298 = vpop.f32.mrf.mxu0
        %v4299 = vadd.f32 0.0, %v4298
        %4300 = vmatmul.bf16.gmra.mxu0 %v4099
        %v4301 = vpop.f32.mrf.mxu0
        %v4302 = vadd.f32 0.0, %v4301
        %v4303 = vpop.f32.mrf.mxu0
        %v4304 = vadd.f32 0.0, %v4303
        %4305 = vmatmul.bf16.gmra.mxu0 %v4101
        %v4306 = vpop.f32.mrf.mxu0
        %v4307 = vadd.f32 0.0, %v4306
        %v4308 = vpop.f32.mrf.mxu0
        %v4309 = vadd.f32 0.0, %v4308
        %4310 = vmatmul.bf16.gmra.mxu0 %v4103
        %v4311 = vpop.f32.mrf.mxu0
        %v4312 = vadd.f32 0.0, %v4311
        %v4313 = vpop.f32.mrf.mxu0
        %v4314 = vadd.f32 0.0, %v4313
        %4315 = vmatmul.bf16.gmra.mxu0 %v4105
        %v4316 = vpop.f32.mrf.mxu0
        %v4317 = vadd.f32 0.0, %v4316
        %v4318 = vpop.f32.mrf.mxu0
        %v4319 = vadd.f32 0.0, %v4318
        %4320 = vmatmul.bf16.gmra.mxu0 %v4107
        %v4321 = vpop.f32.mrf.mxu0
        %v4322 = vadd.f32 0.0, %v4321
        %v4323 = vpop.f32.mrf.mxu0
        %v4324 = vadd.f32 0.0, %v4323
        %4325 = vdwg.mxu0
        %4326 = vmatpush.bf16.msra.mxu0 %v4220
        %4327 = vmatpush.bf16.msra.mxu0 %v4219
        %4328 = vmatpush.bf16.msra.mxu0 %v4218
        %4329 = vmatpush.bf16.msra.mxu0 %v4217
        %4330 = vmatpush.bf16.msra.mxu0 %v4216
        %4331 = vmatpush.bf16.msra.mxu0 %v4215
        %4332 = vmatpush.bf16.msra.mxu0 %v4214
        %4333 = vmatpush.bf16.msra.mxu0 %v4213
        %4334 = vmatmul.bf16.gmra.mxu0 %v4078
        %v4335 = vpop.f32.mrf.mxu0
        %v4336 = vadd.f32 %v4247, %v4335
        %v4337 = vpop.f32.mrf.mxu0
        %v4338 = vadd.f32 %v4249, %v4337
        %4339 = vmatmul.bf16.gmra.mxu0 %v4080
        %v4340 = vpop.f32.mrf.mxu0
        %v4341 = vadd.f32 %v4252, %v4340
        %v4342 = vpop.f32.mrf.mxu0
        %v4343 = vadd.f32 %v4254, %v4342
        %4344 = vmatmul.bf16.gmra.mxu0 %v4082
        %v4345 = vpop.f32.mrf.mxu0
        %v4346 = vadd.f32 %v4257, %v4345
        %v4347 = vpop.f32.mrf.mxu0
        %v4348 = vadd.f32 %v4259, %v4347
        %4349 = vmatmul.bf16.gmra.mxu0 %v4084
        %v4350 = vpop.f32.mrf.mxu0
        %v4351 = vadd.f32 %v4262, %v4350
        %v4352 = vpop.f32.mrf.mxu0
        %v4353 = vadd.f32 %v4264, %v4352
        %4354 = vmatmul.bf16.gmra.mxu0 %v4086
        %v4355 = vpop.f32.mrf.mxu0
        %v4356 = vadd.f32 %v4267, %v4355
        %v4357 = vpop.f32.mrf.mxu0
        %v4358 = vadd.f32 %v4269, %v4357
        %4359 = vmatmul.bf16.gmra.mxu0 %v4088
        %v4360 = vpop.f32.mrf.mxu0
        %v4361 = vadd.f32 %v4272, %v4360
        %v4362 = vpop.f32.mrf.mxu0
        %v4363 = vadd.f32 %v4274, %v4362
        %4364 = vmatmul.bf16.gmra.mxu0 %v4090
        %v4365 = vpop.f32.mrf.mxu0
        %v4366 = vadd.f32 %v4277, %v4365
        %v4367 = vpop.f32.mrf.mxu0
        %v4368 = vadd.f32 %v4279, %v4367
        %4369 = vmatmul.bf16.gmra.mxu0 %v4092
        %v4370 = vpop.f32.mrf.mxu0
        %v4371 = vadd.f32 %v4282, %v4370
        %v4372 = vpop.f32.mrf.mxu0
        %v4373 = vadd.f32 %v4284, %v4372
        %4374 = vmatmul.bf16.gmra.mxu0 %v4094
        %v4375 = vpop.f32.mrf.mxu0
        %v4376 = vadd.f32 %v4287, %v4375
        %v4377 = vpop.f32.mrf.mxu0
        %v4378 = vadd.f32 %v4289, %v4377
        %4379 = vmatmul.bf16.gmra.mxu0 %v4096
        %v4380 = vpop.f32.mrf.mxu0
        %v4381 = vadd.f32 %v4292, %v4380
        %v4382 = vpop.f32.mrf.mxu0
        %v4383 = vadd.f32 %v4294, %v4382
        %4384 = vmatmul.bf16.gmra.mxu0 %v4098
        %v4385 = vpop.f32.mrf.mxu0
        %v4386 = vadd.f32 %v4297, %v4385
        %v4387 = vpop.f32.mrf.mxu0
        %v4388 = vadd.f32 %v4299, %v4387
        %4389 = vmatmul.bf16.gmra.mxu0 %v4100
        %v4390 = vpop.f32.mrf.mxu0
        %v4391 = vadd.f32 %v4302, %v4390
        %v4392 = vpop.f32.mrf.mxu0
        %v4393 = vadd.f32 %v4304, %v4392
        %4394 = vmatmul.bf16.gmra.mxu0 %v4102
        %v4395 = vpop.f32.mrf.mxu0
        %v4396 = vadd.f32 %v4307, %v4395
        %v4397 = vpop.f32.mrf.mxu0
        %v4398 = vadd.f32 %v4309, %v4397
        %4399 = vmatmul.bf16.gmra.mxu0 %v4104
        %v4400 = vpop.f32.mrf.mxu0
        %v4401 = vadd.f32 %v4312, %v4400
        %v4402 = vpop.f32.mrf.mxu0
        %v4403 = vadd.f32 %v4314, %v4402
        %4404 = vmatmul.bf16.gmra.mxu0 %v4106
        %v4405 = vpop.f32.mrf.mxu0
        %v4406 = vadd.f32 %v4317, %v4405
        %v4407 = vpop.f32.mrf.mxu0
        %v4408 = vadd.f32 %v4319, %v4407
        %4409 = vmatmul.bf16.gmra.mxu0 %v4108
        %v4410 = vpop.f32.mrf.mxu0
        %v4411 = vadd.f32 %v4322, %v4410
        %v4412 = vpop.f32.mrf.mxu0
        %v4413 = vadd.f32 %v4324, %v4412
        %4414 = vdwg.mxu0
        %v4415 = vadd.f32 %v3236, %v4336
        %v4416 = vadd.f32 %v3238, %v4338
        %v4417 = vadd.f32 %v3241, %v4341
        %v4418 = vadd.f32 %v3243, %v4343
        %v4419 = vadd.f32 %v3246, %v4346
        %v4420 = vadd.f32 %v3248, %v4348
        %v4421 = vadd.f32 %v3251, %v4351
        %v4422 = vadd.f32 %v3253, %v4353
        %v4423 = vadd.f32 %v3256, %v4356
        %v4424 = vadd.f32 %v3258, %v4358
        %v4425 = vadd.f32 %v3261, %v4361
        %v4426 = vadd.f32 %v3263, %v4363
        %v4427 = vadd.f32 %v3266, %v4366
        %v4428 = vadd.f32 %v3268, %v4368
        %v4429 = vadd.f32 %v3271, %v4371
        %v4430 = vadd.f32 %v3273, %v4373
        %v4431 = vadd.f32 %v3276, %v4376
        %v4432 = vadd.f32 %v3278, %v4378
        %v4433 = vadd.f32 %v3281, %v4381
        %v4434 = vadd.f32 %v3283, %v4383
        %v4435 = vadd.f32 %v3286, %v4386
        %v4436 = vadd.f32 %v3288, %v4388
        %v4437 = vadd.f32 %v3291, %v4391
        %v4438 = vadd.f32 %v3293, %v4393
        %v4439 = vadd.f32 %v3296, %v4396
        %v4440 = vadd.f32 %v3298, %v4398
        %v4441 = vadd.f32 %v3301, %v4401
        %v4442 = vadd.f32 %v3303, %v4403
        %v4443 = vadd.f32 %v3306, %v4406
        %v4444 = vadd.f32 %v3308, %v4408
        %v4445 = vadd.f32 %v3311, %v4411
        %v4446 = vadd.f32 %v3313, %v4413
        %v4447 = vld [vmem:[%s5 + $0xc] sm:$0xf]
        %v4448 = vld [vmem:[%s6 + $0x18] sm:$0xff]
        %v4450 = vunpack.c.l.b16 %v4448
        %v4451 = vunpack.c.h.b16 %v4448
        %v4452 = vpack.c.b16 %v4450, %v4450
        %v4453 = vpack.c.b16 %v4451, %v4451
        %v4455 = vsel %vm943, %v4452, 0
        %v4458 = vsel %vm943, %v4453, 0
        %4460 = vmatpush.bf16.msra.mxu0 0
        %4461 = vmatpush.bf16.msra.mxu0 0
        %4462 = vmatpush.bf16.msra.mxu0 0
        %4463 = vmatpush.bf16.msra.mxu0 0
        %4464 = vmatpush.bf16.msra.mxu0 0
        %4465 = vmatpush.bf16.msra.mxu0 0
        %4466 = vmatpush.bf16.msra.mxu0 0
        %4467 = vmatpush.bf16.msra.mxu0 %v4455
        %4468 = vmatmul.bf16.gmra.mxu0 %v896
        %v4469 = vpop.f32.mrf.mxu0
        %v4470 = vadd.f32 0.0, %v4469
        %v4471 = vpop.f32.mrf.mxu0
        %v4472 = vadd.f32 0.0, %v4471
        %4473 = vmatmul.bf16.gmra.mxu0 %v899
        %v4474 = vpop.f32.mrf.mxu0
        %v4475 = vadd.f32 0.0, %v4474
        %v4476 = vpop.f32.mrf.mxu0
        %v4477 = vadd.f32 0.0, %v4476
        %4478 = vmatmul.bf16.gmra.mxu0 %v902
        %v4479 = vpop.f32.mrf.mxu0
        %v4480 = vadd.f32 0.0, %v4479
        %v4481 = vpop.f32.mrf.mxu0
        %v4482 = vadd.f32 0.0, %v4481
        %4483 = vmatmul.bf16.gmra.mxu0 %v905
        %v4484 = vpop.f32.mrf.mxu0
        %v4485 = vadd.f32 0.0, %v4484
        %v4486 = vpop.f32.mrf.mxu0
        %v4487 = vadd.f32 0.0, %v4486
        %4488 = vmatmul.bf16.gmra.mxu0 %v908
        %v4489 = vpop.f32.mrf.mxu0
        %v4490 = vadd.f32 0.0, %v4489
        %v4491 = vpop.f32.mrf.mxu0
        %v4492 = vadd.f32 0.0, %v4491
        %4493 = vmatmul.bf16.gmra.mxu0 %v911
        %v4494 = vpop.f32.mrf.mxu0
        %v4495 = vadd.f32 0.0, %v4494
        %v4496 = vpop.f32.mrf.mxu0
        %v4497 = vadd.f32 0.0, %v4496
        %4498 = vmatmul.bf16.gmra.mxu0 %v914
        %v4499 = vpop.f32.mrf.mxu0
        %v4500 = vadd.f32 0.0, %v4499
        %v4501 = vpop.f32.mrf.mxu0
        %v4502 = vadd.f32 0.0, %v4501
        %4503 = vmatmul.bf16.gmra.mxu0 %v917
        %v4504 = vpop.f32.mrf.mxu0
        %v4505 = vadd.f32 0.0, %v4504
        %v4506 = vpop.f32.mrf.mxu0
        %v4507 = vadd.f32 0.0, %v4506
        %4508 = vmatmul.bf16.gmra.mxu0 %v920
        %v4509 = vpop.f32.mrf.mxu0
        %v4510 = vadd.f32 0.0, %v4509
        %v4511 = vpop.f32.mrf.mxu0
        %v4512 = vadd.f32 0.0, %v4511
        %4513 = vmatmul.bf16.gmra.mxu0 %v923
        %v4514 = vpop.f32.mrf.mxu0
        %v4515 = vadd.f32 0.0, %v4514
        %v4516 = vpop.f32.mrf.mxu0
        %v4517 = vadd.f32 0.0, %v4516
        %4518 = vmatmul.bf16.gmra.mxu0 %v926
        %v4519 = vpop.f32.mrf.mxu0
        %v4520 = vadd.f32 0.0, %v4519
        %v4521 = vpop.f32.mrf.mxu0
        %v4522 = vadd.f32 0.0, %v4521
        %4523 = vmatmul.bf16.gmra.mxu0 %v929
        %v4524 = vpop.f32.mrf.mxu0
        %v4525 = vadd.f32 0.0, %v4524
        %v4526 = vpop.f32.mrf.mxu0
        %v4527 = vadd.f32 0.0, %v4526
        %4528 = vmatmul.bf16.gmra.mxu0 %v932
        %v4529 = vpop.f32.mrf.mxu0
        %v4530 = vadd.f32 0.0, %v4529
        %v4531 = vpop.f32.mrf.mxu0
        %v4532 = vadd.f32 0.0, %v4531
        %4533 = vmatmul.bf16.gmra.mxu0 %v935
        %v4534 = vpop.f32.mrf.mxu0
        %v4535 = vadd.f32 0.0, %v4534
        %v4536 = vpop.f32.mrf.mxu0
        %v4537 = vadd.f32 0.0, %v4536
        %4538 = vmatmul.bf16.gmra.mxu0 %v938
        %v4539 = vpop.f32.mrf.mxu0
        %v4540 = vadd.f32 0.0, %v4539
        %v4541 = vpop.f32.mrf.mxu0
        %v4542 = vadd.f32 0.0, %v4541
        %4543 = vmatmul.bf16.gmra.mxu0 %v941
        %v4544 = vpop.f32.mrf.mxu0
        %v4545 = vadd.f32 0.0, %v4544
        %v4546 = vpop.f32.mrf.mxu0
        %v4547 = vadd.f32 0.0, %v4546
        %4548 = vdwg.mxu0
        %4549 = vmatpush.bf16.msra.mxu0 0
        %4550 = vmatpush.bf16.msra.mxu0 0
        %4551 = vmatpush.bf16.msra.mxu0 0
        %4552 = vmatpush.bf16.msra.mxu0 0
        %4553 = vmatpush.bf16.msra.mxu0 0
        %4554 = vmatpush.bf16.msra.mxu0 0
        %4555 = vmatpush.bf16.msra.mxu0 0
        %4556 = vmatpush.bf16.msra.mxu0 %v4458
        %4557 = vmatmul.bf16.gmra.mxu0 %v896
        %v4558 = vpop.f32.mrf.mxu0
        %v4559 = vadd.f32 0.0, %v4558
        %v4560 = vpop.f32.mrf.mxu0
        %v4561 = vadd.f32 0.0, %v4560
        %4562 = vmatmul.bf16.gmra.mxu0 %v899
        %v4563 = vpop.f32.mrf.mxu0
        %v4564 = vadd.f32 0.0, %v4563
        %v4565 = vpop.f32.mrf.mxu0
        %v4566 = vadd.f32 0.0, %v4565
        %4567 = vmatmul.bf16.gmra.mxu0 %v902
        %v4568 = vpop.f32.mrf.mxu0
        %v4569 = vadd.f32 0.0, %v4568
        %v4570 = vpop.f32.mrf.mxu0
        %v4571 = vadd.f32 0.0, %v4570
        %4572 = vmatmul.bf16.gmra.mxu0 %v905
        %v4573 = vpop.f32.mrf.mxu0
        %v4574 = vadd.f32 0.0, %v4573
        %v4575 = vpop.f32.mrf.mxu0
        %v4576 = vadd.f32 0.0, %v4575
        %4577 = vmatmul.bf16.gmra.mxu0 %v908
        %v4578 = vpop.f32.mrf.mxu0
        %v4579 = vadd.f32 0.0, %v4578
        %v4580 = vpop.f32.mrf.mxu0
        %v4581 = vadd.f32 0.0, %v4580
        %4582 = vmatmul.bf16.gmra.mxu0 %v911
        %v4583 = vpop.f32.mrf.mxu0
        %v4584 = vadd.f32 0.0, %v4583
        %v4585 = vpop.f32.mrf.mxu0
        %v4586 = vadd.f32 0.0, %v4585
        %4587 = vmatmul.bf16.gmra.mxu0 %v914
        %v4588 = vpop.f32.mrf.mxu0
        %v4589 = vadd.f32 0.0, %v4588
        %v4590 = vpop.f32.mrf.mxu0
        %v4591 = vadd.f32 0.0, %v4590
        %4592 = vmatmul.bf16.gmra.mxu0 %v917
        %v4593 = vpop.f32.mrf.mxu0
        %v4594 = vadd.f32 0.0, %v4593
        %v4595 = vpop.f32.mrf.mxu0
        %v4596 = vadd.f32 0.0, %v4595
        %4597 = vmatmul.bf16.gmra.mxu0 %v920
        %v4598 = vpop.f32.mrf.mxu0
        %v4599 = vadd.f32 0.0, %v4598
        %v4600 = vpop.f32.mrf.mxu0
        %v4601 = vadd.f32 0.0, %v4600
        %4602 = vmatmul.bf16.gmra.mxu0 %v923
        %v4603 = vpop.f32.mrf.mxu0
        %v4604 = vadd.f32 0.0, %v4603
        %v4605 = vpop.f32.mrf.mxu0
        %v4606 = vadd.f32 0.0, %v4605
        %4607 = vmatmul.bf16.gmra.mxu0 %v926
        %v4608 = vpop.f32.mrf.mxu0
        %v4609 = vadd.f32 0.0, %v4608
        %v4610 = vpop.f32.mrf.mxu0
        %v4611 = vadd.f32 0.0, %v4610
        %4612 = vmatmul.bf16.gmra.mxu0 %v929
        %v4613 = vpop.f32.mrf.mxu0
        %v4614 = vadd.f32 0.0, %v4613
        %v4615 = vpop.f32.mrf.mxu0
        %v4616 = vadd.f32 0.0, %v4615
        %4617 = vmatmul.bf16.gmra.mxu0 %v932
        %v4618 = vpop.f32.mrf.mxu0
        %v4619 = vadd.f32 0.0, %v4618
        %v4620 = vpop.f32.mrf.mxu0
        %v4621 = vadd.f32 0.0, %v4620
        %4622 = vmatmul.bf16.gmra.mxu0 %v935
        %v4623 = vpop.f32.mrf.mxu0
        %v4624 = vadd.f32 0.0, %v4623
        %v4625 = vpop.f32.mrf.mxu0
        %v4626 = vadd.f32 0.0, %v4625
        %4627 = vmatmul.bf16.gmra.mxu0 %v938
        %v4628 = vpop.f32.mrf.mxu0
        %v4629 = vadd.f32 0.0, %v4628
        %v4630 = vpop.f32.mrf.mxu0
        %v4631 = vadd.f32 0.0, %v4630
        %4632 = vmatmul.bf16.gmra.mxu0 %v941
        %v4633 = vpop.f32.mrf.mxu0
        %v4634 = vadd.f32 0.0, %v4633
        %v4635 = vpop.f32.mrf.mxu0
        %v4636 = vadd.f32 0.0, %v4635
        %4637 = vdwg.mxu0
        %4639 = vst [vmem:[#allocation1] ss:$4 sm:$0xff] %v4447
        %v4640 = vld.sshfl [vmem:[#allocation1] sm:$0xff pattern:$0x73625140]
        %v4641 = vld.sshfl [vmem:[#allocation1 + $0x8] sm:$0xff pattern:$0x73625140]
        %v4642 = vsel %vm1181, %v4640, 0
        %v4644 = vsel %vm1181, %v4641, 0
        %4646 = vmatpush.bf16.msra.mxu0 0
        %4647 = vmatpush.bf16.msra.mxu0 0
        %4648 = vmatpush.bf16.msra.mxu0 0
        %4649 = vmatpush.bf16.msra.mxu0 0
        %4650 = vmatpush.bf16.msra.mxu0 0
        %4651 = vmatpush.bf16.msra.mxu0 0
        %4652 = vmatpush.bf16.msra.mxu0 0
        %4653 = vmatpush.bf16.msra.mxu0 %v4642
        %4654 = vmatmul.bf16.gmra.mxu0 %v1134
        %v4655 = vpop.f32.mrf.mxu0
        %v4656 = vadd.f32 %v4470, %v4655
        %v4657 = vpop.f32.mrf.mxu0
        %v4658 = vadd.f32 %v4472, %v4657
        %4659 = vmatmul.bf16.gmra.mxu0 %v1137
        %v4660 = vpop.f32.mrf.mxu0
        %v4661 = vadd.f32 %v4475, %v4660
        %v4662 = vpop.f32.mrf.mxu0
        %v4663 = vadd.f32 %v4477, %v4662
        %4664 = vmatmul.bf16.gmra.mxu0 %v1140
        %v4665 = vpop.f32.mrf.mxu0
        %v4666 = vadd.f32 %v4480, %v4665
        %v4667 = vpop.f32.mrf.mxu0
        %v4668 = vadd.f32 %v4482, %v4667
        %4669 = vmatmul.bf16.gmra.mxu0 %v1143
        %v4670 = vpop.f32.mrf.mxu0
        %v4671 = vadd.f32 %v4485, %v4670
        %v4672 = vpop.f32.mrf.mxu0
        %v4673 = vadd.f32 %v4487, %v4672
        %4674 = vmatmul.bf16.gmra.mxu0 %v1146
        %v4675 = vpop.f32.mrf.mxu0
        %v4676 = vadd.f32 %v4490, %v4675
        %v4677 = vpop.f32.mrf.mxu0
        %v4678 = vadd.f32 %v4492, %v4677
        %4679 = vmatmul.bf16.gmra.mxu0 %v1149
        %v4680 = vpop.f32.mrf.mxu0
        %v4681 = vadd.f32 %v4495, %v4680
        %v4682 = vpop.f32.mrf.mxu0
        %v4683 = vadd.f32 %v4497, %v4682
        %4684 = vmatmul.bf16.gmra.mxu0 %v1152
        %v4685 = vpop.f32.mrf.mxu0
        %v4686 = vadd.f32 %v4500, %v4685
        %v4687 = vpop.f32.mrf.mxu0
        %v4688 = vadd.f32 %v4502, %v4687
        %4689 = vmatmul.bf16.gmra.mxu0 %v1155
        %v4690 = vpop.f32.mrf.mxu0
        %v4691 = vadd.f32 %v4505, %v4690
        %v4692 = vpop.f32.mrf.mxu0
        %v4693 = vadd.f32 %v4507, %v4692
        %4694 = vmatmul.bf16.gmra.mxu0 %v1158
        %v4695 = vpop.f32.mrf.mxu0
        %v4696 = vadd.f32 %v4510, %v4695
        %v4697 = vpop.f32.mrf.mxu0
        %v4698 = vadd.f32 %v4512, %v4697
        %4699 = vmatmul.bf16.gmra.mxu0 %v1161
        %v4700 = vpop.f32.mrf.mxu0
        %v4701 = vadd.f32 %v4515, %v4700
        %v4702 = vpop.f32.mrf.mxu0
        %v4703 = vadd.f32 %v4517, %v4702
        %4704 = vmatmul.bf16.gmra.mxu0 %v1164
        %v4705 = vpop.f32.mrf.mxu0
        %v4706 = vadd.f32 %v4520, %v4705
        %v4707 = vpop.f32.mrf.mxu0
        %v4708 = vadd.f32 %v4522, %v4707
        %4709 = vmatmul.bf16.gmra.mxu0 %v1167
        %v4710 = vpop.f32.mrf.mxu0
        %v4711 = vadd.f32 %v4525, %v4710
        %v4712 = vpop.f32.mrf.mxu0
        %v4713 = vadd.f32 %v4527, %v4712
        %4714 = vmatmul.bf16.gmra.mxu0 %v1170
        %v4715 = vpop.f32.mrf.mxu0
        %v4716 = vadd.f32 %v4530, %v4715
        %v4717 = vpop.f32.mrf.mxu0
        %v4718 = vadd.f32 %v4532, %v4717
        %4719 = vmatmul.bf16.gmra.mxu0 %v1173
        %v4720 = vpop.f32.mrf.mxu0
        %v4721 = vadd.f32 %v4535, %v4720
        %v4722 = vpop.f32.mrf.mxu0
        %v4723 = vadd.f32 %v4537, %v4722
        %4724 = vmatmul.bf16.gmra.mxu0 %v1176
        %v4725 = vpop.f32.mrf.mxu0
        %v4726 = vadd.f32 %v4540, %v4725
        %v4727 = vpop.f32.mrf.mxu0
        %v4728 = vadd.f32 %v4542, %v4727
        %4729 = vmatmul.bf16.gmra.mxu0 %v1179
        %v4730 = vpop.f32.mrf.mxu0
        %v4731 = vadd.f32 %v4545, %v4730
        %v4732 = vpop.f32.mrf.mxu0
        %v4733 = vadd.f32 %v4547, %v4732
        %4734 = vdwg.mxu0
        %4735 = vmatpush.bf16.msra.mxu0 0
        %4736 = vmatpush.bf16.msra.mxu0 0
        %4737 = vmatpush.bf16.msra.mxu0 0
        %4738 = vmatpush.bf16.msra.mxu0 0
        %4739 = vmatpush.bf16.msra.mxu0 0
        %4740 = vmatpush.bf16.msra.mxu0 0
        %4741 = vmatpush.bf16.msra.mxu0 0
        %4742 = vmatpush.bf16.msra.mxu0 %v4644
        %4743 = vmatmul.bf16.gmra.mxu0 %v1134
        %v4744 = vpop.f32.mrf.mxu0
        %v4745 = vadd.f32 %v4559, %v4744
        %v4746 = vpop.f32.mrf.mxu0
        %v4747 = vadd.f32 %v4561, %v4746
        %4748 = vmatmul.bf16.gmra.mxu0 %v1137
        %v4749 = vpop.f32.mrf.mxu0
        %v4750 = vadd.f32 %v4564, %v4749
        %v4751 = vpop.f32.mrf.mxu0
        %v4752 = vadd.f32 %v4566, %v4751
        %4753 = vmatmul.bf16.gmra.mxu0 %v1140
        %v4754 = vpop.f32.mrf.mxu0
        %v4755 = vadd.f32 %v4569, %v4754
        %v4756 = vpop.f32.mrf.mxu0
        %v4757 = vadd.f32 %v4571, %v4756
        %4758 = vmatmul.bf16.gmra.mxu0 %v1143
        %v4759 = vpop.f32.mrf.mxu0
        %v4760 = vadd.f32 %v4574, %v4759
        %v4761 = vpop.f32.mrf.mxu0
        %v4762 = vadd.f32 %v4576, %v4761
        %4763 = vmatmul.bf16.gmra.mxu0 %v1146
        %v4764 = vpop.f32.mrf.mxu0
        %v4765 = vadd.f32 %v4579, %v4764
        %v4766 = vpop.f32.mrf.mxu0
        %v4767 = vadd.f32 %v4581, %v4766
        %4768 = vmatmul.bf16.gmra.mxu0 %v1149
        %v4769 = vpop.f32.mrf.mxu0
        %v4770 = vadd.f32 %v4584, %v4769
        %v4771 = vpop.f32.mrf.mxu0
        %v4772 = vadd.f32 %v4586, %v4771
        %4773 = vmatmul.bf16.gmra.mxu0 %v1152
        %v4774 = vpop.f32.mrf.mxu0
        %v4775 = vadd.f32 %v4589, %v4774
        %v4776 = vpop.f32.mrf.mxu0
        %v4777 = vadd.f32 %v4591, %v4776
        %4778 = vmatmul.bf16.gmra.mxu0 %v1155
        %v4779 = vpop.f32.mrf.mxu0
        %v4780 = vadd.f32 %v4594, %v4779
        %v4781 = vpop.f32.mrf.mxu0
        %v4782 = vadd.f32 %v4596, %v4781
        %4783 = vmatmul.bf16.gmra.mxu0 %v1158
        %v4784 = vpop.f32.mrf.mxu0
        %v4785 = vadd.f32 %v4599, %v4784
        %v4786 = vpop.f32.mrf.mxu0
        %v4787 = vadd.f32 %v4601, %v4786
        %4788 = vmatmul.bf16.gmra.mxu0 %v1161
        %v4789 = vpop.f32.mrf.mxu0
        %v4790 = vadd.f32 %v4604, %v4789
        %v4791 = vpop.f32.mrf.mxu0
        %v4792 = vadd.f32 %v4606, %v4791
        %4793 = vmatmul.bf16.gmra.mxu0 %v1164
        %v4794 = vpop.f32.mrf.mxu0
        %v4795 = vadd.f32 %v4609, %v4794
        %v4796 = vpop.f32.mrf.mxu0
        %v4797 = vadd.f32 %v4611, %v4796
        %4798 = vmatmul.bf16.gmra.mxu0 %v1167
        %v4799 = vpop.f32.mrf.mxu0
        %v4800 = vadd.f32 %v4614, %v4799
        %v4801 = vpop.f32.mrf.mxu0
        %v4802 = vadd.f32 %v4616, %v4801
        %4803 = vmatmul.bf16.gmra.mxu0 %v1170
        %v4804 = vpop.f32.mrf.mxu0
        %v4805 = vadd.f32 %v4619, %v4804
        %v4806 = vpop.f32.mrf.mxu0
        %v4807 = vadd.f32 %v4621, %v4806
        %4808 = vmatmul.bf16.gmra.mxu0 %v1173
        %v4809 = vpop.f32.mrf.mxu0
        %v4810 = vadd.f32 %v4624, %v4809
        %v4811 = vpop.f32.mrf.mxu0
        %v4812 = vadd.f32 %v4626, %v4811
        %4813 = vmatmul.bf16.gmra.mxu0 %v1176
        %v4814 = vpop.f32.mrf.mxu0
        %v4815 = vadd.f32 %v4629, %v4814
        %v4816 = vpop.f32.mrf.mxu0
        %v4817 = vadd.f32 %v4631, %v4816
        %4818 = vmatmul.bf16.gmra.mxu0 %v1179
        %v4819 = vpop.f32.mrf.mxu0
        %v4820 = vadd.f32 %v4634, %v4819
        %v4821 = vpop.f32.mrf.mxu0
        %v4822 = vadd.f32 %v4636, %v4821
        %4823 = vdwg.mxu0
        %v4824 = vld [vmem:[%s7 + $0xc] sm:$0xf]
        %4826 = vst [vmem:[#allocation1] ss:$4 sm:$0xff] %v4824
        %v4827 = vld.sshfl [vmem:[#allocation1] sm:$0xff pattern:$0x73625140]
        %v4828 = vld.sshfl [vmem:[#allocation1 + $0x8] sm:$0xff pattern:$0x73625140]
        %v4829 = vsel %vm1181, %v4827, 0
        %v4831 = vsel %vm1181, %v4828, 0
        %4833 = vmatpush.bf16.msra.mxu0 0
        %4834 = vmatpush.bf16.msra.mxu0 0
        %4835 = vmatpush.bf16.msra.mxu0 0
        %4836 = vmatpush.bf16.msra.mxu0 0
        %4837 = vmatpush.bf16.msra.mxu0 0
        %4838 = vmatpush.bf16.msra.mxu0 0
        %4839 = vmatpush.bf16.msra.mxu0 0
        %4840 = vmatpush.bf16.msra.mxu0 %v4829
        %4841 = vmatmul.bf16.gmra.mxu0 %v1450
        %v4842 = vpop.f32.mrf.mxu0
        %v4843 = vadd.f32 0.0, %v4842
        %v4844 = vpop.f32.mrf.mxu0
        %v4845 = vadd.f32 0.0, %v4844
        %4846 = vmatmul.bf16.gmra.mxu0 %v1453
        %v4847 = vpop.f32.mrf.mxu0
        %v4848 = vadd.f32 0.0, %v4847
        %v4849 = vpop.f32.mrf.mxu0
        %v4850 = vadd.f32 0.0, %v4849
        %4851 = vmatmul.bf16.gmra.mxu0 %v1456
        %v4852 = vpop.f32.mrf.mxu0
        %v4853 = vadd.f32 0.0, %v4852
        %v4854 = vpop.f32.mrf.mxu0
        %v4855 = vadd.f32 0.0, %v4854
        %4856 = vmatmul.bf16.gmra.mxu0 %v1459
        %v4857 = vpop.f32.mrf.mxu0
        %v4858 = vadd.f32 0.0, %v4857
        %v4859 = vpop.f32.mrf.mxu0
        %v4860 = vadd.f32 0.0, %v4859
        %4861 = vmatmul.bf16.gmra.mxu0 %v1462
        %v4862 = vpop.f32.mrf.mxu0
        %v4863 = vadd.f32 0.0, %v4862
        %v4864 = vpop.f32.mrf.mxu0
        %v4865 = vadd.f32 0.0, %v4864
        %4866 = vmatmul.bf16.gmra.mxu0 %v1465
        %v4867 = vpop.f32.mrf.mxu0
        %v4868 = vadd.f32 0.0, %v4867
        %v4869 = vpop.f32.mrf.mxu0
        %v4870 = vadd.f32 0.0, %v4869
        %4871 = vmatmul.bf16.gmra.mxu0 %v1468
        %v4872 = vpop.f32.mrf.mxu0
        %v4873 = vadd.f32 0.0, %v4872
        %v4874 = vpop.f32.mrf.mxu0
        %v4875 = vadd.f32 0.0, %v4874
        %4876 = vmatmul.bf16.gmra.mxu0 %v1471
        %v4877 = vpop.f32.mrf.mxu0
        %v4878 = vadd.f32 0.0, %v4877
        %v4879 = vpop.f32.mrf.mxu0
        %v4880 = vadd.f32 0.0, %v4879
        %4881 = vmatmul.bf16.gmra.mxu0 %v1474
        %v4882 = vpop.f32.mrf.mxu0
        %v4883 = vadd.f32 0.0, %v4882
        %v4884 = vpop.f32.mrf.mxu0
        %v4885 = vadd.f32 0.0, %v4884
        %4886 = vmatmul.bf16.gmra.mxu0 %v1477
        %v4887 = vpop.f32.mrf.mxu0
        %v4888 = vadd.f32 0.0, %v4887
        %v4889 = vpop.f32.mrf.mxu0
        %v4890 = vadd.f32 0.0, %v4889
        %4891 = vmatmul.bf16.gmra.mxu0 %v1480
        %v4892 = vpop.f32.mrf.mxu0
        %v4893 = vadd.f32 0.0, %v4892
        %v4894 = vpop.f32.mrf.mxu0
        %v4895 = vadd.f32 0.0, %v4894
        %4896 = vmatmul.bf16.gmra.mxu0 %v1483
        %v4897 = vpop.f32.mrf.mxu0
        %v4898 = vadd.f32 0.0, %v4897
        %v4899 = vpop.f32.mrf.mxu0
        %v4900 = vadd.f32 0.0, %v4899
        %4901 = vmatmul.bf16.gmra.mxu0 %v1486
        %v4902 = vpop.f32.mrf.mxu0
        %v4903 = vadd.f32 0.0, %v4902
        %v4904 = vpop.f32.mrf.mxu0
        %v4905 = vadd.f32 0.0, %v4904
        %4906 = vmatmul.bf16.gmra.mxu0 %v1489
        %v4907 = vpop.f32.mrf.mxu0
        %v4908 = vadd.f32 0.0, %v4907
        %v4909 = vpop.f32.mrf.mxu0
        %v4910 = vadd.f32 0.0, %v4909
        %4911 = vmatmul.bf16.gmra.mxu0 %v1492
        %v4912 = vpop.f32.mrf.mxu0
        %v4913 = vadd.f32 0.0, %v4912
        %v4914 = vpop.f32.mrf.mxu0
        %v4915 = vadd.f32 0.0, %v4914
        %4916 = vmatmul.bf16.gmra.mxu0 %v1495
        %v4917 = vpop.f32.mrf.mxu0
        %v4918 = vadd.f32 0.0, %v4917
        %v4919 = vpop.f32.mrf.mxu0
        %v4920 = vadd.f32 0.0, %v4919
        %4921 = vdwg.mxu0
        %4922 = vmatpush.bf16.msra.mxu0 0
        %4923 = vmatpush.bf16.msra.mxu0 0
        %4924 = vmatpush.bf16.msra.mxu0 0
        %4925 = vmatpush.bf16.msra.mxu0 0
        %4926 = vmatpush.bf16.msra.mxu0 0
        %4927 = vmatpush.bf16.msra.mxu0 0
        %4928 = vmatpush.bf16.msra.mxu0 0
        %4929 = vmatpush.bf16.msra.mxu0 %v4831
        %4930 = vmatmul.bf16.gmra.mxu0 %v1450
        %v4931 = vpop.f32.mrf.mxu0
        %v4932 = vadd.f32 0.0, %v4931
        %v4933 = vpop.f32.mrf.mxu0
        %v4934 = vadd.f32 0.0, %v4933
        %4935 = vmatmul.bf16.gmra.mxu0 %v1453
        %v4936 = vpop.f32.mrf.mxu0
        %v4937 = vadd.f32 0.0, %v4936
        %v4938 = vpop.f32.mrf.mxu0
        %v4939 = vadd.f32 0.0, %v4938
        %4940 = vmatmul.bf16.gmra.mxu0 %v1456
        %v4941 = vpop.f32.mrf.mxu0
        %v4942 = vadd.f32 0.0, %v4941
        %v4943 = vpop.f32.mrf.mxu0
        %v4944 = vadd.f32 0.0, %v4943
        %4945 = vmatmul.bf16.gmra.mxu0 %v1459
        %v4946 = vpop.f32.mrf.mxu0
        %v4947 = vadd.f32 0.0, %v4946
        %v4948 = vpop.f32.mrf.mxu0
        %v4949 = vadd.f32 0.0, %v4948
        %4950 = vmatmul.bf16.gmra.mxu0 %v1462
        %v4951 = vpop.f32.mrf.mxu0
        %v4952 = vadd.f32 0.0, %v4951
        %v4953 = vpop.f32.mrf.mxu0
        %v4954 = vadd.f32 0.0, %v4953
        %4955 = vmatmul.bf16.gmra.mxu0 %v1465
        %v4956 = vpop.f32.mrf.mxu0
        %v4957 = vadd.f32 0.0, %v4956
        %v4958 = vpop.f32.mrf.mxu0
        %v4959 = vadd.f32 0.0, %v4958
        %4960 = vmatmul.bf16.gmra.mxu0 %v1468
        %v4961 = vpop.f32.mrf.mxu0
        %v4962 = vadd.f32 0.0, %v4961
        %v4963 = vpop.f32.mrf.mxu0
        %v4964 = vadd.f32 0.0, %v4963
        %4965 = vmatmul.bf16.gmra.mxu0 %v1471
        %v4966 = vpop.f32.mrf.mxu0
        %v4967 = vadd.f32 0.0, %v4966
        %v4968 = vpop.f32.mrf.mxu0
        %v4969 = vadd.f32 0.0, %v4968
        %4970 = vmatmul.bf16.gmra.mxu0 %v1474
        %v4971 = vpop.f32.mrf.mxu0
        %v4972 = vadd.f32 0.0, %v4971
        %v4973 = vpop.f32.mrf.mxu0
        %v4974 = vadd.f32 0.0, %v4973
        %4975 = vmatmul.bf16.gmra.mxu0 %v1477
        %v4976 = vpop.f32.mrf.mxu0
        %v4977 = vadd.f32 0.0, %v4976
        %v4978 = vpop.f32.mrf.mxu0
        %v4979 = vadd.f32 0.0, %v4978
        %4980 = vmatmul.bf16.gmra.mxu0 %v1480
        %v4981 = vpop.f32.mrf.mxu0
        %v4982 = vadd.f32 0.0, %v4981
        %v4983 = vpop.f32.mrf.mxu0
        %v4984 = vadd.f32 0.0, %v4983
        %4985 = vmatmul.bf16.gmra.mxu0 %v1483
        %v4986 = vpop.f32.mrf.mxu0
        %v4987 = vadd.f32 0.0, %v4986
        %v4988 = vpop.f32.mrf.mxu0
        %v4989 = vadd.f32 0.0, %v4988
        %4990 = vmatmul.bf16.gmra.mxu0 %v1486
        %v4991 = vpop.f32.mrf.mxu0
        %v4992 = vadd.f32 0.0, %v4991
        %v4993 = vpop.f32.mrf.mxu0
        %v4994 = vadd.f32 0.0, %v4993
        %4995 = vmatmul.bf16.gmra.mxu0 %v1489
        %v4996 = vpop.f32.mrf.mxu0
        %v4997 = vadd.f32 0.0, %v4996
        %v4998 = vpop.f32.mrf.mxu0
        %v4999 = vadd.f32 0.0, %v4998
        %5000 = vmatmul.bf16.gmra.mxu0 %v1492
        %v5001 = vpop.f32.mrf.mxu0
        %v5002 = vadd.f32 0.0, %v5001
        %v5003 = vpop.f32.mrf.mxu0
        %v5004 = vadd.f32 0.0, %v5003
        %5005 = vmatmul.bf16.gmra.mxu0 %v1495
        %v5006 = vpop.f32.mrf.mxu0
        %v5007 = vadd.f32 0.0, %v5006
        %v5008 = vpop.f32.mrf.mxu0
        %v5009 = vadd.f32 0.0, %v5008
        %5010 = vdwg.mxu0
        %v5011 = vadd.f32 %v4656, %v4843
        %v5012 = vadd.f32 %v4745, %v4932
        %v5013 = vadd.f32 %v4658, %v4845
        %v5014 = vadd.f32 %v4747, %v4934
        %v5015 = vadd.f32 %v4661, %v4848
        %v5016 = vadd.f32 %v4750, %v4937
        %v5017 = vadd.f32 %v4663, %v4850
        %v5018 = vadd.f32 %v4752, %v4939
        %v5019 = vadd.f32 %v4666, %v4853
        %v5020 = vadd.f32 %v4755, %v4942
        %v5021 = vadd.f32 %v4668, %v4855
        %v5022 = vadd.f32 %v4757, %v4944
        %v5023 = vadd.f32 %v4671, %v4858
        %v5024 = vadd.f32 %v4760, %v4947
        %v5025 = vadd.f32 %v4673, %v4860
        %v5026 = vadd.f32 %v4762, %v4949
        %v5027 = vadd.f32 %v4676, %v4863
        %v5028 = vadd.f32 %v4765, %v4952
        %v5029 = vadd.f32 %v4678, %v4865
        %v5030 = vadd.f32 %v4767, %v4954
        %v5031 = vadd.f32 %v4681, %v4868
        %v5032 = vadd.f32 %v4770, %v4957
        %v5033 = vadd.f32 %v4683, %v4870
        %v5034 = vadd.f32 %v4772, %v4959
        %v5035 = vadd.f32 %v4686, %v4873
        %v5036 = vadd.f32 %v4775, %v4962
        %v5037 = vadd.f32 %v4688, %v4875
        %v5038 = vadd.f32 %v4777, %v4964
        %v5039 = vadd.f32 %v4691, %v4878
        %v5040 = vadd.f32 %v4780, %v4967
        %v5041 = vadd.f32 %v4693, %v4880
        %v5042 = vadd.f32 %v4782, %v4969
        %v5043 = vadd.f32 %v4696, %v4883
        %v5044 = vadd.f32 %v4785, %v4972
        %v5045 = vadd.f32 %v4698, %v4885
        %v5046 = vadd.f32 %v4787, %v4974
        %v5047 = vadd.f32 %v4701, %v4888
        %v5048 = vadd.f32 %v4790, %v4977
        %v5049 = vadd.f32 %v4703, %v4890
        %v5050 = vadd.f32 %v4792, %v4979
        %v5051 = vadd.f32 %v4706, %v4893
        %v5052 = vadd.f32 %v4795, %v4982
        %v5053 = vadd.f32 %v4708, %v4895
        %v5054 = vadd.f32 %v4797, %v4984
        %v5055 = vadd.f32 %v4711, %v4898
        %v5056 = vadd.f32 %v4800, %v4987
        %v5057 = vadd.f32 %v4713, %v4900
        %v5058 = vadd.f32 %v4802, %v4989
        %v5059 = vadd.f32 %v4716, %v4903
        %v5060 = vadd.f32 %v4805, %v4992
        %v5061 = vadd.f32 %v4718, %v4905
        %v5062 = vadd.f32 %v4807, %v4994
        %v5063 = vadd.f32 %v4721, %v4908
        %v5064 = vadd.f32 %v4810, %v4997
        %v5065 = vadd.f32 %v4723, %v4910
        %v5066 = vadd.f32 %v4812, %v4999
        %v5067 = vadd.f32 %v4726, %v4913
        %v5068 = vadd.f32 %v4815, %v5002
        %v5069 = vadd.f32 %v4728, %v4915
        %v5070 = vadd.f32 %v4817, %v5004
        %v5071 = vadd.f32 %v4731, %v4918
        %v5072 = vadd.f32 %v4820, %v5007
        %v5073 = vadd.f32 %v4733, %v4920
        %v5074 = vadd.f32 %v4822, %v5009
        %v5075 = vld [vmem:[%s8 + $0x6] sm:$0x3]
        %v5077 = vperm.slane %v5075, 0
        %v5078 = vperm.slane %v5075, 1
        %v5081 = vadd.f32 %v5011, %v5077
        %v5082 = vadd.f32 %v5012, %v5078
        %v5083 = vadd.f32 %v5013, %v5077
        %v5084 = vadd.f32 %v5014, %v5078
        %v5085 = vadd.f32 %v5015, %v5077
        %v5086 = vadd.f32 %v5016, %v5078
        %v5087 = vadd.f32 %v5017, %v5077
        %v5088 = vadd.f32 %v5018, %v5078
        %v5089 = vadd.f32 %v5019, %v5077
        %v5090 = vadd.f32 %v5020, %v5078
        %v5091 = vadd.f32 %v5021, %v5077
        %v5092 = vadd.f32 %v5022, %v5078
        %v5093 = vadd.f32 %v5023, %v5077
        %v5094 = vadd.f32 %v5024, %v5078
        %v5095 = vadd.f32 %v5025, %v5077
        %v5096 = vadd.f32 %v5026, %v5078
        %v5097 = vadd.f32 %v5027, %v5077
        %v5098 = vadd.f32 %v5028, %v5078
        %v5099 = vadd.f32 %v5029, %v5077
        %v5100 = vadd.f32 %v5030, %v5078
        %v5101 = vadd.f32 %v5031, %v5077
        %v5102 = vadd.f32 %v5032, %v5078
        %v5103 = vadd.f32 %v5033, %v5077
        %v5104 = vadd.f32 %v5034, %v5078
        %v5105 = vadd.f32 %v5035, %v5077
        %v5106 = vadd.f32 %v5036, %v5078
        %v5107 = vadd.f32 %v5037, %v5077
        %v5108 = vadd.f32 %v5038, %v5078
        %v5109 = vadd.f32 %v5039, %v5077
        %v5110 = vadd.f32 %v5040, %v5078
        %v5111 = vadd.f32 %v5041, %v5077
        %v5112 = vadd.f32 %v5042, %v5078
        %v5113 = vadd.f32 %v5043, %v5077
        %v5114 = vadd.f32 %v5044, %v5078
        %v5115 = vadd.f32 %v5045, %v5077
        %v5116 = vadd.f32 %v5046, %v5078
        %v5117 = vadd.f32 %v5047, %v5077
        %v5118 = vadd.f32 %v5048, %v5078
        %v5119 = vadd.f32 %v5049, %v5077
        %v5120 = vadd.f32 %v5050, %v5078
        %v5121 = vadd.f32 %v5051, %v5077
        %v5122 = vadd.f32 %v5052, %v5078
        %v5123 = vadd.f32 %v5053, %v5077
        %v5124 = vadd.f32 %v5054, %v5078
        %v5125 = vadd.f32 %v5055, %v5077
        %v5126 = vadd.f32 %v5056, %v5078
        %v5127 = vadd.f32 %v5057, %v5077
        %v5128 = vadd.f32 %v5058, %v5078
        %v5129 = vadd.f32 %v5059, %v5077
        %v5130 = vadd.f32 %v5060, %v5078
        %v5131 = vadd.f32 %v5061, %v5077
        %v5132 = vadd.f32 %v5062, %v5078
        %v5133 = vadd.f32 %v5063, %v5077
        %v5134 = vadd.f32 %v5064, %v5078
        %v5135 = vadd.f32 %v5065, %v5077
        %v5136 = vadd.f32 %v5066, %v5078
        %v5137 = vadd.f32 %v5067, %v5077
        %v5138 = vadd.f32 %v5068, %v5078
        %v5139 = vadd.f32 %v5069, %v5077
        %v5140 = vadd.f32 %v5070, %v5078
        %v5141 = vadd.f32 %v5071, %v5077
        %v5142 = vadd.f32 %v5072, %v5078
        %v5143 = vadd.f32 %v5073, %v5077
        %v5144 = vadd.f32 %v5074, %v5078
        %v5145 = vmax.f32 %v5081, 0.0
        %v5146 = vmax.f32 %v5082, 0.0
        %v5147 = vmax.f32 %v5083, 0.0
        %v5148 = vmax.f32 %v5084, 0.0
        %v5149 = vmax.f32 %v5085, 0.0
        %v5150 = vmax.f32 %v5086, 0.0
        %v5151 = vmax.f32 %v5087, 0.0
        %v5152 = vmax.f32 %v5088, 0.0
        %v5153 = vmax.f32 %v5089, 0.0
        %v5154 = vmax.f32 %v5090, 0.0
        %v5155 = vmax.f32 %v5091, 0.0
        %v5156 = vmax.f32 %v5092, 0.0
        %v5157 = vmax.f32 %v5093, 0.0
        %v5158 = vmax.f32 %v5094, 0.0
        %v5159 = vmax.f32 %v5095, 0.0
        %v5160 = vmax.f32 %v5096, 0.0
        %v5161 = vmax.f32 %v5097, 0.0
        %v5162 = vmax.f32 %v5098, 0.0
        %v5163 = vmax.f32 %v5099, 0.0
        %v5164 = vmax.f32 %v5100, 0.0
        %v5165 = vmax.f32 %v5101, 0.0
        %v5166 = vmax.f32 %v5102, 0.0
        %v5167 = vmax.f32 %v5103, 0.0
        %v5168 = vmax.f32 %v5104, 0.0
        %v5169 = vmax.f32 %v5105, 0.0
        %v5170 = vmax.f32 %v5106, 0.0
        %v5171 = vmax.f32 %v5107, 0.0
        %v5172 = vmax.f32 %v5108, 0.0
        %v5173 = vmax.f32 %v5109, 0.0
        %v5174 = vmax.f32 %v5110, 0.0
        %v5175 = vmax.f32 %v5111, 0.0
        %v5176 = vmax.f32 %v5112, 0.0
        %v5177 = vmax.f32 %v5113, 0.0
        %v5178 = vmax.f32 %v5114, 0.0
        %v5179 = vmax.f32 %v5115, 0.0
        %v5180 = vmax.f32 %v5116, 0.0
        %v5181 = vmax.f32 %v5117, 0.0
        %v5182 = vmax.f32 %v5118, 0.0
        %v5183 = vmax.f32 %v5119, 0.0
        %v5184 = vmax.f32 %v5120, 0.0
        %v5185 = vmax.f32 %v5121, 0.0
        %v5186 = vmax.f32 %v5122, 0.0
        %v5187 = vmax.f32 %v5123, 0.0
        %v5188 = vmax.f32 %v5124, 0.0
        %v5189 = vmax.f32 %v5125, 0.0
        %v5190 = vmax.f32 %v5126, 0.0
        %v5191 = vmax.f32 %v5127, 0.0
        %v5192 = vmax.f32 %v5128, 0.0
        %v5193 = vmax.f32 %v5129, 0.0
        %v5194 = vmax.f32 %v5130, 0.0
        %v5195 = vmax.f32 %v5131, 0.0
        %v5196 = vmax.f32 %v5132, 0.0
        %v5197 = vmax.f32 %v5133, 0.0
        %v5198 = vmax.f32 %v5134, 0.0
        %v5199 = vmax.f32 %v5135, 0.0
        %v5200 = vmax.f32 %v5136, 0.0
        %v5201 = vmax.f32 %v5137, 0.0
        %v5202 = vmax.f32 %v5138, 0.0
        %v5203 = vmax.f32 %v5139, 0.0
        %v5204 = vmax.f32 %v5140, 0.0
        %v5205 = vmax.f32 %v5141, 0.0
        %v5206 = vmax.f32 %v5142, 0.0
        %v5207 = vmax.f32 %v5143, 0.0
        %v5208 = vmax.f32 %v5144, 0.0
        %v5209 = vpack.c.bf16 %v5147, %v5145
        %v5210 = vpack.c.bf16 %v5148, %v5146
        %v5211 = vpack.c.bf16 %v5151, %v5149
        %v5212 = vpack.c.bf16 %v5152, %v5150
        %v5213 = vpack.c.bf16 %v5155, %v5153
        %v5214 = vpack.c.bf16 %v5156, %v5154
        %v5215 = vpack.c.bf16 %v5159, %v5157
        %v5216 = vpack.c.bf16 %v5160, %v5158
        %v5217 = vpack.c.bf16 %v5163, %v5161
        %v5218 = vpack.c.bf16 %v5164, %v5162
        %v5219 = vpack.c.bf16 %v5167, %v5165
        %v5220 = vpack.c.bf16 %v5168, %v5166
        %v5221 = vpack.c.bf16 %v5171, %v5169
        %v5222 = vpack.c.bf16 %v5172, %v5170
        %v5223 = vpack.c.bf16 %v5175, %v5173
        %v5224 = vpack.c.bf16 %v5176, %v5174
        %v5225 = vpack.c.bf16 %v5179, %v5177
        %v5226 = vpack.c.bf16 %v5180, %v5178
        %v5227 = vpack.c.bf16 %v5183, %v5181
        %v5228 = vpack.c.bf16 %v5184, %v5182
        %v5229 = vpack.c.bf16 %v5187, %v5185
        %v5230 = vpack.c.bf16 %v5188, %v5186
        %v5231 = vpack.c.bf16 %v5191, %v5189
        %v5232 = vpack.c.bf16 %v5192, %v5190
        %v5233 = vpack.c.bf16 %v5195, %v5193
        %v5234 = vpack.c.bf16 %v5196, %v5194
        %v5235 = vpack.c.bf16 %v5199, %v5197
        %v5236 = vpack.c.bf16 %v5200, %v5198
        %v5237 = vpack.c.bf16 %v5203, %v5201
        %v5238 = vpack.c.bf16 %v5204, %v5202
        %v5239 = vpack.c.bf16 %v5207, %v5205
        %v5240 = vpack.c.bf16 %v5208, %v5206
        %v5241 = vld [vmem:[%s9 + $0x180] sm:$0xf]
        %v5242 = vld [vmem:[%s9 + $0x184] sm:$0xf]
        %v5243 = vld [vmem:[%s9 + $0x188] sm:$0xf]
        %v5244 = vld [vmem:[%s9 + $0x18c] sm:$0xf]
        %v5245 = vld [vmem:[%s9 + $0x190] sm:$0xf]
        %v5246 = vld [vmem:[%s9 + $0x194] sm:$0xf]
        %v5247 = vld [vmem:[%s9 + $0x198] sm:$0xf]
        %v5248 = vld [vmem:[%s9 + $0x19c] sm:$0xf]
        %v5249 = vld [vmem:[%s9 + $0x1a0] sm:$0xf]
        %v5250 = vld [vmem:[%s9 + $0x1a4] sm:$0xf]
        %v5251 = vld [vmem:[%s9 + $0x1a8] sm:$0xf]
        %v5252 = vld [vmem:[%s9 + $0x1ac] sm:$0xf]
        %v5253 = vld [vmem:[%s9 + $0x1b0] sm:$0xf]
        %v5254 = vld [vmem:[%s9 + $0x1b4] sm:$0xf]
        %v5255 = vld [vmem:[%s9 + $0x1b8] sm:$0xf]
        %v5256 = vld [vmem:[%s9 + $0x1bc] sm:$0xf]
        %v5257 = vld [vmem:[%s9 + $0x1c0] sm:$0xf]
        %v5258 = vld [vmem:[%s9 + $0x1c4] sm:$0xf]
        %v5259 = vld [vmem:[%s9 + $0x1c8] sm:$0xf]
        %v5260 = vld [vmem:[%s9 + $0x1cc] sm:$0xf]
        %v5261 = vld [vmem:[%s9 + $0x1d0] sm:$0xf]
        %v5262 = vld [vmem:[%s9 + $0x1d4] sm:$0xf]
        %v5263 = vld [vmem:[%s9 + $0x1d8] sm:$0xf]
        %v5264 = vld [vmem:[%s9 + $0x1dc] sm:$0xf]
        %v5265 = vld [vmem:[%s9 + $0x1e0] sm:$0xf]
        %v5266 = vld [vmem:[%s9 + $0x1e4] sm:$0xf]
        %v5267 = vld [vmem:[%s9 + $0x1e8] sm:$0xf]
        %v5268 = vld [vmem:[%s9 + $0x1ec] sm:$0xf]
        %v5269 = vld [vmem:[%s9 + $0x1f0] sm:$0xf]
        %v5270 = vld [vmem:[%s9 + $0x1f4] sm:$0xf]
        %v5271 = vld [vmem:[%s9 + $0x1f8] sm:$0xf]
        %v5272 = vld [vmem:[%s9 + $0x1fc] sm:$0xf]
        %v5305 = vunpack.c.l.b16 %v5241
        %v5306 = vunpack.c.l.b16 %v5242
        %v5307 = vunpack.c.l.b16 %v5243
        %v5308 = vunpack.c.l.b16 %v5244
        %v5309 = vunpack.c.l.b16 %v5245
        %v5310 = vunpack.c.l.b16 %v5246
        %v5311 = vunpack.c.l.b16 %v5247
        %v5312 = vunpack.c.l.b16 %v5248
        %v5313 = vunpack.c.l.b16 %v5249
        %v5314 = vunpack.c.l.b16 %v5250
        %v5315 = vunpack.c.l.b16 %v5251
        %v5316 = vunpack.c.l.b16 %v5252
        %v5317 = vunpack.c.l.b16 %v5253
        %v5318 = vunpack.c.l.b16 %v5254
        %v5319 = vunpack.c.l.b16 %v5255
        %v5320 = vunpack.c.l.b16 %v5256
        %v5321 = vunpack.c.l.b16 %v5257
        %v5322 = vunpack.c.l.b16 %v5258
        %v5323 = vunpack.c.l.b16 %v5259
        %v5324 = vunpack.c.l.b16 %v5260
        %v5325 = vunpack.c.l.b16 %v5261
        %v5326 = vunpack.c.l.b16 %v5262
        %v5327 = vunpack.c.l.b16 %v5263
        %v5328 = vunpack.c.l.b16 %v5264
        %v5329 = vunpack.c.l.b16 %v5265
        %v5330 = vunpack.c.l.b16 %v5266
        %v5331 = vunpack.c.l.b16 %v5267
        %v5332 = vunpack.c.l.b16 %v5268
        %v5333 = vunpack.c.l.b16 %v5269
        %v5334 = vunpack.c.l.b16 %v5270
        %v5335 = vunpack.c.l.b16 %v5271
        %v5336 = vunpack.c.l.b16 %v5272
        %v5337 = vpack.c.b16 %v5306, %v5305
        %v5338 = vpack.c.b16 %v5308, %v5307
        %v5339 = vpack.c.b16 %v5310, %v5309
        %v5340 = vpack.c.b16 %v5312, %v5311
        %v5341 = vpack.c.b16 %v5314, %v5313
        %v5342 = vpack.c.b16 %v5316, %v5315
        %v5343 = vpack.c.b16 %v5318, %v5317
        %v5344 = vpack.c.b16 %v5320, %v5319
        %v5345 = vpack.c.b16 %v5322, %v5321
        %v5346 = vpack.c.b16 %v5324, %v5323
        %v5347 = vpack.c.b16 %v5326, %v5325
        %v5348 = vpack.c.b16 %v5328, %v5327
        %v5349 = vpack.c.b16 %v5330, %v5329
        %v5350 = vpack.c.b16 %v5332, %v5331
        %v5351 = vpack.c.b16 %v5334, %v5333
        %v5352 = vpack.c.b16 %v5336, %v5335
        %5369 = vmatpush.bf16.msra.mxu0 %v5344
        %5370 = vmatpush.bf16.msra.mxu0 %v5343
        %5371 = vmatpush.bf16.msra.mxu0 %v5342
        %5372 = vmatpush.bf16.msra.mxu0 %v5341
        %5373 = vmatpush.bf16.msra.mxu0 %v5340
        %5374 = vmatpush.bf16.msra.mxu0 %v5339
        %5375 = vmatpush.bf16.msra.mxu0 %v5338
        %5376 = vmatpush.bf16.msra.mxu0 %v5337
        %5377 = vmatmul.bf16.gmra.mxu0 %v5209
        %v5378 = vpop.f32.mrf.mxu0
        %v5379 = vadd.f32 0.0, %v5378
        %v5380 = vpop.f32.mrf.mxu0
        %v5381 = vadd.f32 0.0, %v5380
        %5382 = vmatmul.bf16.gmra.mxu0 %v5211
        %v5383 = vpop.f32.mrf.mxu0
        %v5384 = vadd.f32 0.0, %v5383
        %v5385 = vpop.f32.mrf.mxu0
        %v5386 = vadd.f32 0.0, %v5385
        %5387 = vmatmul.bf16.gmra.mxu0 %v5213
        %v5388 = vpop.f32.mrf.mxu0
        %v5389 = vadd.f32 0.0, %v5388
        %v5390 = vpop.f32.mrf.mxu0
        %v5391 = vadd.f32 0.0, %v5390
        %5392 = vmatmul.bf16.gmra.mxu0 %v5215
        %v5393 = vpop.f32.mrf.mxu0
        %v5394 = vadd.f32 0.0, %v5393
        %v5395 = vpop.f32.mrf.mxu0
        %v5396 = vadd.f32 0.0, %v5395
        %5397 = vmatmul.bf16.gmra.mxu0 %v5217
        %v5398 = vpop.f32.mrf.mxu0
        %v5399 = vadd.f32 0.0, %v5398
        %v5400 = vpop.f32.mrf.mxu0
        %v5401 = vadd.f32 0.0, %v5400
        %5402 = vmatmul.bf16.gmra.mxu0 %v5219
        %v5403 = vpop.f32.mrf.mxu0
        %v5404 = vadd.f32 0.0, %v5403
        %v5405 = vpop.f32.mrf.mxu0
        %v5406 = vadd.f32 0.0, %v5405
        %5407 = vmatmul.bf16.gmra.mxu0 %v5221
        %v5408 = vpop.f32.mrf.mxu0
        %v5409 = vadd.f32 0.0, %v5408
        %v5410 = vpop.f32.mrf.mxu0
        %v5411 = vadd.f32 0.0, %v5410
        %5412 = vmatmul.bf16.gmra.mxu0 %v5223
        %v5413 = vpop.f32.mrf.mxu0
        %v5414 = vadd.f32 0.0, %v5413
        %v5415 = vpop.f32.mrf.mxu0
        %v5416 = vadd.f32 0.0, %v5415
        %5417 = vmatmul.bf16.gmra.mxu0 %v5225
        %v5418 = vpop.f32.mrf.mxu0
        %v5419 = vadd.f32 0.0, %v5418
        %v5420 = vpop.f32.mrf.mxu0
        %v5421 = vadd.f32 0.0, %v5420
        %5422 = vmatmul.bf16.gmra.mxu0 %v5227
        %v5423 = vpop.f32.mrf.mxu0
        %v5424 = vadd.f32 0.0, %v5423
        %v5425 = vpop.f32.mrf.mxu0
        %v5426 = vadd.f32 0.0, %v5425
        %5427 = vmatmul.bf16.gmra.mxu0 %v5229
        %v5428 = vpop.f32.mrf.mxu0
        %v5429 = vadd.f32 0.0, %v5428
        %v5430 = vpop.f32.mrf.mxu0
        %v5431 = vadd.f32 0.0, %v5430
        %5432 = vmatmul.bf16.gmra.mxu0 %v5231
        %v5433 = vpop.f32.mrf.mxu0
        %v5434 = vadd.f32 0.0, %v5433
        %v5435 = vpop.f32.mrf.mxu0
        %v5436 = vadd.f32 0.0, %v5435
        %5437 = vmatmul.bf16.gmra.mxu0 %v5233
        %v5438 = vpop.f32.mrf.mxu0
        %v5439 = vadd.f32 0.0, %v5438
        %v5440 = vpop.f32.mrf.mxu0
        %v5441 = vadd.f32 0.0, %v5440
        %5442 = vmatmul.bf16.gmra.mxu0 %v5235
        %v5443 = vpop.f32.mrf.mxu0
        %v5444 = vadd.f32 0.0, %v5443
        %v5445 = vpop.f32.mrf.mxu0
        %v5446 = vadd.f32 0.0, %v5445
        %5447 = vmatmul.bf16.gmra.mxu0 %v5237
        %v5448 = vpop.f32.mrf.mxu0
        %v5449 = vadd.f32 0.0, %v5448
        %v5450 = vpop.f32.mrf.mxu0
        %v5451 = vadd.f32 0.0, %v5450
        %5452 = vmatmul.bf16.gmra.mxu0 %v5239
        %v5453 = vpop.f32.mrf.mxu0
        %v5454 = vadd.f32 0.0, %v5453
        %v5455 = vpop.f32.mrf.mxu0
        %v5456 = vadd.f32 0.0, %v5455
        %5457 = vdwg.mxu0
        %5458 = vmatpush.bf16.msra.mxu0 %v5352
        %5459 = vmatpush.bf16.msra.mxu0 %v5351
        %5460 = vmatpush.bf16.msra.mxu0 %v5350
        %5461 = vmatpush.bf16.msra.mxu0 %v5349
        %5462 = vmatpush.bf16.msra.mxu0 %v5348
        %5463 = vmatpush.bf16.msra.mxu0 %v5347
        %5464 = vmatpush.bf16.msra.mxu0 %v5346
        %5465 = vmatpush.bf16.msra.mxu0 %v5345
        %5466 = vmatmul.bf16.gmra.mxu0 %v5210
        %v5467 = vpop.f32.mrf.mxu0
        %v5468 = vadd.f32 %v5379, %v5467
        %v5469 = vpop.f32.mrf.mxu0
        %v5470 = vadd.f32 %v5381, %v5469
        %5471 = vmatmul.bf16.gmra.mxu0 %v5212
        %v5472 = vpop.f32.mrf.mxu0
        %v5473 = vadd.f32 %v5384, %v5472
        %v5474 = vpop.f32.mrf.mxu0
        %v5475 = vadd.f32 %v5386, %v5474
        %5476 = vmatmul.bf16.gmra.mxu0 %v5214
        %v5477 = vpop.f32.mrf.mxu0
        %v5478 = vadd.f32 %v5389, %v5477
        %v5479 = vpop.f32.mrf.mxu0
        %v5480 = vadd.f32 %v5391, %v5479
        %5481 = vmatmul.bf16.gmra.mxu0 %v5216
        %v5482 = vpop.f32.mrf.mxu0
        %v5483 = vadd.f32 %v5394, %v5482
        %v5484 = vpop.f32.mrf.mxu0
        %v5485 = vadd.f32 %v5396, %v5484
        %5486 = vmatmul.bf16.gmra.mxu0 %v5218
        %v5487 = vpop.f32.mrf.mxu0
        %v5488 = vadd.f32 %v5399, %v5487
        %v5489 = vpop.f32.mrf.mxu0
        %v5490 = vadd.f32 %v5401, %v5489
        %5491 = vmatmul.bf16.gmra.mxu0 %v5220
        %v5492 = vpop.f32.mrf.mxu0
        %v5493 = vadd.f32 %v5404, %v5492
        %v5494 = vpop.f32.mrf.mxu0
        %v5495 = vadd.f32 %v5406, %v5494
        %5496 = vmatmul.bf16.gmra.mxu0 %v5222
        %v5497 = vpop.f32.mrf.mxu0
        %v5498 = vadd.f32 %v5409, %v5497
        %v5499 = vpop.f32.mrf.mxu0
        %v5500 = vadd.f32 %v5411, %v5499
        %5501 = vmatmul.bf16.gmra.mxu0 %v5224
        %v5502 = vpop.f32.mrf.mxu0
        %v5503 = vadd.f32 %v5414, %v5502
        %v5504 = vpop.f32.mrf.mxu0
        %v5505 = vadd.f32 %v5416, %v5504
        %5506 = vmatmul.bf16.gmra.mxu0 %v5226
        %v5507 = vpop.f32.mrf.mxu0
        %v5508 = vadd.f32 %v5419, %v5507
        %v5509 = vpop.f32.mrf.mxu0
        %v5510 = vadd.f32 %v5421, %v5509
        %5511 = vmatmul.bf16.gmra.mxu0 %v5228
        %v5512 = vpop.f32.mrf.mxu0
        %v5513 = vadd.f32 %v5424, %v5512
        %v5514 = vpop.f32.mrf.mxu0
        %v5515 = vadd.f32 %v5426, %v5514
        %5516 = vmatmul.bf16.gmra.mxu0 %v5230
        %v5517 = vpop.f32.mrf.mxu0
        %v5518 = vadd.f32 %v5429, %v5517
        %v5519 = vpop.f32.mrf.mxu0
        %v5520 = vadd.f32 %v5431, %v5519
        %5521 = vmatmul.bf16.gmra.mxu0 %v5232
        %v5522 = vpop.f32.mrf.mxu0
        %v5523 = vadd.f32 %v5434, %v5522
        %v5524 = vpop.f32.mrf.mxu0
        %v5525 = vadd.f32 %v5436, %v5524
        %5526 = vmatmul.bf16.gmra.mxu0 %v5234
        %v5527 = vpop.f32.mrf.mxu0
        %v5528 = vadd.f32 %v5439, %v5527
        %v5529 = vpop.f32.mrf.mxu0
        %v5530 = vadd.f32 %v5441, %v5529
        %5531 = vmatmul.bf16.gmra.mxu0 %v5236
        %v5532 = vpop.f32.mrf.mxu0
        %v5533 = vadd.f32 %v5444, %v5532
        %v5534 = vpop.f32.mrf.mxu0
        %v5535 = vadd.f32 %v5446, %v5534
        %5536 = vmatmul.bf16.gmra.mxu0 %v5238
        %v5537 = vpop.f32.mrf.mxu0
        %v5538 = vadd.f32 %v5449, %v5537
        %v5539 = vpop.f32.mrf.mxu0
        %v5540 = vadd.f32 %v5451, %v5539
        %5541 = vmatmul.bf16.gmra.mxu0 %v5240
        %v5542 = vpop.f32.mrf.mxu0
        %v5543 = vadd.f32 %v5454, %v5542
        %v5544 = vpop.f32.mrf.mxu0
        %v5545 = vadd.f32 %v5456, %v5544
        %5546 = vdwg.mxu0
        %v5547 = vadd.f32 %v4415, %v5468
        %v5548 = vadd.f32 %v4416, %v5470
        %v5549 = vadd.f32 %v4417, %v5473
        %v5550 = vadd.f32 %v4418, %v5475
        %v5551 = vadd.f32 %v4419, %v5478
        %v5552 = vadd.f32 %v4420, %v5480
        %v5553 = vadd.f32 %v4421, %v5483
        %v5554 = vadd.f32 %v4422, %v5485
        %v5555 = vadd.f32 %v4423, %v5488
        %v5556 = vadd.f32 %v4424, %v5490
        %v5557 = vadd.f32 %v4425, %v5493
        %v5558 = vadd.f32 %v4426, %v5495
        %v5559 = vadd.f32 %v4427, %v5498
        %v5560 = vadd.f32 %v4428, %v5500
        %v5561 = vadd.f32 %v4429, %v5503
        %v5562 = vadd.f32 %v4430, %v5505
        %v5563 = vadd.f32 %v4431, %v5508
        %v5564 = vadd.f32 %v4432, %v5510
        %v5565 = vadd.f32 %v4433, %v5513
        %v5566 = vadd.f32 %v4434, %v5515
        %v5567 = vadd.f32 %v4435, %v5518
        %v5568 = vadd.f32 %v4436, %v5520
        %v5569 = vadd.f32 %v4437, %v5523
        %v5570 = vadd.f32 %v4438, %v5525
        %v5571 = vadd.f32 %v4439, %v5528
        %v5572 = vadd.f32 %v4440, %v5530
        %v5573 = vadd.f32 %v4441, %v5533
        %v5574 = vadd.f32 %v4442, %v5535
        %v5575 = vadd.f32 %v4443, %v5538
        %v5576 = vadd.f32 %v4444, %v5540
        %v5577 = vadd.f32 %v4445, %v5543
        %v5578 = vadd.f32 %v4446, %v5545
        %v5579 = vld [vmem:[%s10] sm:$0x1]
        %v5581 = vperm.slane %v5579, 0
        %v5583 = vadd.f32 %v5547, %v5581
        %v5584 = vadd.f32 %v5548, %v5581
        %v5585 = vadd.f32 %v5549, %v5581
        %v5586 = vadd.f32 %v5550, %v5581
        %v5587 = vadd.f32 %v5551, %v5581
        %v5588 = vadd.f32 %v5552, %v5581
        %v5589 = vadd.f32 %v5553, %v5581
        %v5590 = vadd.f32 %v5554, %v5581
        %v5591 = vadd.f32 %v5555, %v5581
        %v5592 = vadd.f32 %v5556, %v5581
        %v5593 = vadd.f32 %v5557, %v5581
        %v5594 = vadd.f32 %v5558, %v5581
        %v5595 = vadd.f32 %v5559, %v5581
        %v5596 = vadd.f32 %v5560, %v5581
        %v5597 = vadd.f32 %v5561, %v5581
        %v5598 = vadd.f32 %v5562, %v5581
        %v5599 = vadd.f32 %v5563, %v5581
        %v5600 = vadd.f32 %v5564, %v5581
        %v5601 = vadd.f32 %v5565, %v5581
        %v5602 = vadd.f32 %v5566, %v5581
        %v5603 = vadd.f32 %v5567, %v5581
        %v5604 = vadd.f32 %v5568, %v5581
        %v5605 = vadd.f32 %v5569, %v5581
        %v5606 = vadd.f32 %v5570, %v5581
        %v5607 = vadd.f32 %v5571, %v5581
        %v5608 = vadd.f32 %v5572, %v5581
        %v5609 = vadd.f32 %v5573, %v5581
        %v5610 = vadd.f32 %v5574, %v5581
        %v5611 = vadd.f32 %v5575, %v5581
        %v5612 = vadd.f32 %v5576, %v5581
        %v5613 = vadd.f32 %v5577, %v5581
        %v5614 = vadd.f32 %v5578, %v5581
        %5615 = vst [vmem:[%s412] sm:$0xff] %v5583
        %5616 = vst [vmem:[%s412 + $0x8] sm:$0xff] %v5584
        %5617 = vst [vmem:[%s412 + $0x10] sm:$0xff] %v5585
        %5618 = vst [vmem:[%s412 + $0x18] sm:$0xff] %v5586
        %5619 = vst [vmem:[%s412 + $0x20] sm:$0xff] %v5587
        %5620 = vst [vmem:[%s412 + $0x28] sm:$0xff] %v5588
        %5621 = vst [vmem:[%s412 + $0x30] sm:$0xff] %v5589
        %5622 = vst [vmem:[%s412 + $0x38] sm:$0xff] %v5590
        %5623 = vst [vmem:[%s412 + $0x40] sm:$0xff] %v5591
        %5624 = vst [vmem:[%s412 + $0x48] sm:$0xff] %v5592
        %5625 = vst [vmem:[%s412 + $0x50] sm:$0xff] %v5593
        %5626 = vst [vmem:[%s412 + $0x58] sm:$0xff] %v5594
        %5627 = vst [vmem:[%s412 + $0x60] sm:$0xff] %v5595
        %5628 = vst [vmem:[%s412 + $0x68] sm:$0xff] %v5596
        %5629 = vst [vmem:[%s412 + $0x70] sm:$0xff] %v5597
        %5630 = vst [vmem:[%s412 + $0x78] sm:$0xff] %v5598
        %5631 = vst [vmem:[%s412 + $0x80] sm:$0xff] %v5599
        %5632 = vst [vmem:[%s412 + $0x88] sm:$0xff] %v5600
        %5633 = vst [vmem:[%s412 + $0x90] sm:$0xff] %v5601
        %5634 = vst [vmem:[%s412 + $0x98] sm:$0xff] %v5602
        %5635 = vst [vmem:[%s412 + $0xa0] sm:$0xff] %v5603
        %5636 = vst [vmem:[%s412 + $0xa8] sm:$0xff] %v5604
        %5637 = vst [vmem:[%s412 + $0xb0] sm:$0xff] %v5605
        %5638 = vst [vmem:[%s412 + $0xb8] sm:$0xff] %v5606
        %5639 = vst [vmem:[%s412 + $0xc0] sm:$0xff] %v5607
        %5640 = vst [vmem:[%s412 + $0xc8] sm:$0xff] %v5608
        %5641 = vst [vmem:[%s412 + $0xd0] sm:$0xff] %v5609
        %5642 = vst [vmem:[%s412 + $0xd8] sm:$0xff] %v5610
        %5643 = vst [vmem:[%s412 + $0xe0] sm:$0xff] %v5611
        %5644 = vst [vmem:[%s412 + $0xe8] sm:$0xff] %v5612
        %5645 = vst [vmem:[%s412 + $0xf0] sm:$0xff] %v5613
        %5646 = vst [vmem:[%s412 + $0xf8] sm:$0xff] %v5614
        %s5647 = sand.u32 %s279, 1
        %s5648 = scalar_lea.sflag [#allocation3], %s5647
        %s5649 = sand.u32 %s279, 1
        %s5650 = smul.addr %s5649, 256
        %s5651 = scalar_lea.vmem [#allocation2], %s5650
        // Predicated region
        $region65: #{three_scale_mix.1} parent=63 // pred_check
          %p5652 = pneg %p289
        $region66: #{three_scale_mix.1} parent=63 // pred_check_branch
          %5654 = sbr.rel (%p5652) target = $region68
        $region67: #{three_scale_mix.1} parent=63 // pred_region
          %s5655 = smul.u32 32, %s25
          %5657 = vsyncadd %s5648, 0
          %s5658 = smul.addr %s5655, 8
          %s5659 = scalar_lea.hbm %s11, %s5658
          %s5660 = sshll.u32 %s5651, 4
          %s5661 = int_to_ptr.vmem [resolvable:$true] %s5660
          %s5662 = sshll.u32 %s5659, 4
          %s5663 = int_to_ptr.hbm [resolvable:$true] %s5662
          %5668 = dma.vmem_to_hbm [thread:$0]  %s5661, 4096, %s5663, %s5648, 128, 128, 8
        $region68: #{three_scale_mix.1} parent=63 // pred_fallthru
          _
      $region64: #{three_scale_mix.1} parent=5 // pred_fallthru
        _
      %p5669 = scmp.le.s32.totalorder 2, %s20
      // Predicated region
      $region69: #{three_scale_mix.1} parent=5 // pred_check
        %p5670 = pneg %p5669
      $region70: #{three_scale_mix.1} parent=5 // pred_check_branch
        %5672 = sbr.rel (%p5670) target = $region72
      $region71: #{three_scale_mix.1} parent=5 // pred_region
        %s5673 = ssub.s32 %s20, 2
        // Predicated region
        $region73: #{three_scale_mix.1} parent=71 // pred_check
          %p5674 = pneg %p295
        $region74: #{three_scale_mix.1} parent=71 // pred_check_branch
          %5676 = sbr.rel (%p5674) target = $region76
        $region75: #{three_scale_mix.1} parent=71 // pred_region
          %s5677 = sand.u32 %s280, 1
          %s5678 = scalar_lea.sflag [#allocation3], %s5677
          %s5679 = sand.u32 %s280, 1
          %s5680 = smul.addr %s5679, 256
          %s5681 = scalar_lea.vmem [#allocation2], %s5680
          %5683 = dma.done %s5678, 4096
        $region76: #{three_scale_mix.1} parent=71 // pred_fallthru
          _
      $region72: #{three_scale_mix.1} parent=5 // pred_fallthru
        _
    $region6: #{three_scale_mix.1} parent=1 // loop_footer
      %s24 = sadd.s32 1, %s20
    $region7: #{three_scale_mix.1} parent=1 // loop_footer_branch
      %19 = sbr.rel target = $region3
    $region8: #{three_scale_mix.1} parent=1 // loop_exit
      _
    %5684 = vsyncpa [#allocation3], 1
    %s5685 = scalar_lea.sflag [#allocation3], 1
    %5686 = vsyncpa %s5685, 1

</llo_original>
